<compile_context>
chip_gen: v7x
topology: tpu7x:2x2x1
jax: 0.10.0
libtpu: 0.0.40
codegen_flags: <defaults>
</compile_context>

<pallas_src>
import jax
import jax.numpy as jnp
from jax import lax
from jax.experimental import pallas as pl
from jax.experimental.pallas import tpu as pltpu

EPS = 1e-5
LANES = 128


def basic_block_v2_kernel(x_ref, s1_ref, b1_ref, w1_ref,
                          s2_ref, b2_ref, w2_ref, o_ref, pad_ref):
    """One batch element per grid step.

    x_ref:  (1, H, W, Cp) f32          input (channels zero-padded to Cp)
    s*/b*:  (1, 1, Cp)    f32          folded BN scale / bias
    w*:     (9*Cp, Cp)    bf16         conv weight, (kh, kw, cin) flattened
    o_ref:  (1, H, W, Cp) f32          output
    pad_ref:(H+2, W+2, Cp) bf16        zero-padded halo scratch (reused by both convs)
    """
    _, H, W, Cp = x_ref.shape

    def conv3x3(w_ref):
        # 9 static-slice taps from the halo scratch -> one im2col slab -> one
        # bf16 MXU matmul with f32 accumulation.
        taps = [pad_ref[kh:kh + H, kw:kw + W, :]
                for kh in range(3) for kw in range(3)]
        slab = jnp.concatenate(taps, axis=-1).reshape(H * W, 9 * Cp)
        out = jnp.dot(slab, w_ref[...], preferred_element_type=jnp.float32)
        return out.reshape(H, W, Cp)

    # Zero the scratch once per step; the 1-pixel halo ring stays zero for both
    # convs (it *is* the conv padding), the interior is overwritten each time.
    pad_ref[...] = jnp.zeros_like(pad_ref)

    # BN1 (folded) + ReLU, store bf16 into the halo scratch.
    a1 = jnp.maximum(x_ref[0] * s1_ref[...] + b1_ref[...], 0.0)
    pad_ref[1:H + 1, 1:W + 1, :] = a1.astype(jnp.bfloat16)

    # conv1: 3x3, stride 1, padding 1, no bias.
    h1 = conv3x3(w1_ref)

    # BN2 (folded) + ReLU.
    a2 = jnp.maximum(h1 * s2_ref[...] + b2_ref[...], 0.0)
    pad_ref[1:H + 1, 1:W + 1, :] = a2.astype(jnp.bfloat16)

    # conv2: 3x3, stride 1, padding 1, no bias.
    h2 = conv3x3(w2_ref)

    # Residual add (downsample is None -> residual is raw x).  Re-read x from
    # VMEM here instead of holding it live across both convs.
    o_ref[0] = (h2 + x_ref[0]).astype(o_ref.dtype)


def basic_block_v2(x_nhwc, params):
    """x_nhwc: (N, H, W, C) float32.  Returns (N, H, W, C) float32."""
    N, H, W, C = x_nhwc.shape
    Cp = ((C + LANES - 1) // LANES) * LANES      # lane-dense channel count

    def fold_bn(gamma, beta, mean, var):
        scale = gamma / jnp.sqrt(var + EPS)
        bias = beta - mean * scale
        scale = jnp.pad(scale, (0, Cp - C)).reshape(1, 1, Cp)
        bias = jnp.pad(bias, (0, Cp - C)).reshape(1, 1, Cp)
        return scale, bias

    def prep_w(w_oihw):
        # OIHW -> HWIO -> zero-pad channels -> flatten (kh, kw, cin) -> bf16.
        w = jnp.transpose(w_oihw, (2, 3, 1, 0))                  # (3,3,Cin,Cout)
        w = jnp.pad(w, ((0, 0), (0, 0), (0, Cp - C), (0, Cp - C)))
        return w.reshape(9 * Cp, Cp).astype(jnp.bfloat16)

    s1, b1 = fold_bn(params["gamma1"], params["beta1"],
                     params["mean1"], params["var1"])
    s2, b2 = fold_bn(params["gamma2"], params["beta2"],
                     params["mean2"], params["var2"])
    w1 = prep_w(params["w1"])
    w2 = prep_w(params["w2"])

    x_pad = jnp.pad(x_nhwc, ((0, 0), (0, 0), (0, 0), (0, Cp - C)))

    grid_spec = pltpu.PrefetchScalarGridSpec(
        num_scalar_prefetch=0,
        grid=(N,),
        in_specs=[
            pl.BlockSpec((1, H, W, Cp), lambda n: (n, 0, 0, 0)),   # x
            pl.BlockSpec((1, 1, Cp), lambda n: (0, 0, 0)),         # scale1
            pl.BlockSpec((1, 1, Cp), lambda n: (0, 0, 0)),         # bias1
            pl.BlockSpec((9 * Cp, Cp), lambda n: (0, 0)),          # w1 (bf16)
            pl.BlockSpec((1, 1, Cp), lambda n: (0, 0, 0)),         # scale2
            pl.BlockSpec((1, 1, Cp), lambda n: (0, 0, 0)),         # bias2
            pl.BlockSpec((9 * Cp, Cp), lambda n: (0, 0)),          # w2 (bf16)
        ],
        out_specs=pl.BlockSpec((1, H, W, Cp), lambda n: (n, 0, 0, 0)),
        scratch_shapes=[pltpu.VMEM((H + 2, W + 2, Cp), jnp.bfloat16)],
    )

    fn = pl.pallas_call(
        basic_block_v2_kernel,
        out_shape=jax.ShapeDtypeStruct((N, H, W, Cp), x_nhwc.dtype),
        grid_spec=grid_spec,
        compiler_params=pltpu.CompilerParams(
            dimension_semantics=("parallel",)),
    )
    out_pad = fn(x_pad, s1, b1, w1, s2, b2, w2)
    return out_pad[..., :C]


def basic_block_v2_reference(x_nchw, params):
    """Pure-JAX NCHW reference mirroring the PyTorch module (eval-mode BN)."""
    def bn(x, g, b, m, v):
        g, b, m, v = (t[None, :, None, None] for t in (g, b, m, v))
        return (x - m) / jnp.sqrt(v + EPS) * g + b

    out = jnp.maximum(bn(x_nchw, params["gamma1"], params["beta1"],
                         params["mean1"], params["var1"]), 0.0)
    out = lax.conv_general_dilated(out, params["w1"], (1, 1),
                                   ((1, 1), (1, 1)),
                                   dimension_numbers=("NCHW", "OIHW", "NCHW"))
    out = jnp.maximum(bn(out, params["gamma2"], params["beta2"],
                         params["mean2"], params["var2"]), 0.0)
    out = lax.conv_general_dilated(out, params["w2"], (1, 1),
                                   ((1, 1), (1, 1)),
                                   dimension_numbers=("NCHW", "OIHW", "NCHW"))
    return out + x_nchw


if __name__ == "__main__":
    N, C, H, W = 2, 8, 16, 16          # inplanes == planes == 8, stride == 1
    key = jax.random.PRNGKey(0)
    ks = jax.random.split(key, 11)

    params = {
        "gamma1": jax.random.uniform(ks[0], (C,), jnp.float32, 0.5, 1.5),
        "beta1":  0.1 * jax.random.normal(ks[1], (C,), jnp.float32),
        "mean1":  0.1 * jax.random.normal(ks[2], (C,), jnp.float32),
        "var1":   jax.random.uniform(ks[3], (C,), jnp.float32, 0.5, 1.5),
        "w1":     0.1 * jax.random.normal(ks[4], (C, C, 3, 3), jnp.float32),
        "gamma2": jax.random.uniform(ks[5], (C,), jnp.float32, 0.5, 1.5),
        "beta2":  0.1 * jax.random.normal(ks[6], (C,), jnp.float32),
        "mean2":  0.1 * jax.random.normal(ks[7], (C,), jnp.float32),
        "var2":   jax.random.uniform(ks[8], (C,), jnp.float32, 0.5, 1.5),
        "w2":     0.1 * jax.random.normal(ks[9], (C, C, 3, 3), jnp.float32),
    }

    x_nchw = jax.random.normal(ks[10], (N, C, H, W), jnp.float32)
    x_nhwc = jnp.transpose(x_nchw, (0, 2, 3, 1))

    out_nhwc = basic_block_v2(x_nhwc, params)
    out_nhwc = jax.block_until_ready(out_nhwc)
    out_nchw = jnp.transpose(out_nhwc, (0, 3, 1, 2))

    ref = basic_block_v2_reference(x_nchw, params)
    assert out_nchw.shape == ref.shape

    # bf16 matmul operands (f32 accumulation) -> use a relative-L2 check.
    num = jnp.sqrt(jnp.sum((out_nchw - ref) ** 2))
    den = jnp.sqrt(jnp.sum(ref ** 2))
    rel = float(num / den)
    assert rel < 2e-2, f"relative L2 error too large: {rel}"

    print("KERNEL_OK")
</pallas_src>

<mosaic_0001>
module attributes {stable_mosaic.version = 11 : i64} {
  func.func @basic_block_v2_kernel(%arg0: i32, %arg1: memref<1x16x16x128xf32, #tpu.memory_space<vmem>>, %arg2: memref<1x1x128xf32, #tpu.memory_space<vmem>>, %arg3: memref<1x1x128xf32, #tpu.memory_space<vmem>>, %arg4: memref<1152x128xbf16, #tpu.memory_space<vmem>>, %arg5: memref<1x1x128xf32, #tpu.memory_space<vmem>>, %arg6: memref<1x1x128xf32, #tpu.memory_space<vmem>>, %arg7: memref<1152x128xbf16, #tpu.memory_space<vmem>>, %arg8: memref<1x16x16x128xf32, #tpu.memory_space<vmem>>, %arg9: memref<18x18x128xbf16, #tpu.memory_space<vmem>>) attributes {dimension_semantics = [#tpu.dimension_semantics<parallel>], iteration_bounds = array<i64: 2>, scalar_prefetch = 0 : i64, scratch_operands = 1 : i64, tpu.core_type = #tpu.core_type<tc>, window_params = [{transform_indices = @transform_0, window_bounds = array<i64: 1, 16, 16, 128>}, {pipeline_mode = #tpu.pipeline_mode<synchronous>, transform_indices = @transform_1, window_bounds = array<i64: 1, 1, 128>}, {pipeline_mode = #tpu.pipeline_mode<synchronous>, transform_indices = @transform_2, window_bounds = array<i64: 1, 1, 128>}, {pipeline_mode = #tpu.pipeline_mode<synchronous>, transform_indices = @transform_3, window_bounds = array<i64: 1152, 128>}, {pipeline_mode = #tpu.pipeline_mode<synchronous>, transform_indices = @transform_4, window_bounds = array<i64: 1, 1, 128>}, {pipeline_mode = #tpu.pipeline_mode<synchronous>, transform_indices = @transform_5, window_bounds = array<i64: 1, 1, 128>}, {pipeline_mode = #tpu.pipeline_mode<synchronous>, transform_indices = @transform_6, window_bounds = array<i64: 1152, 128>}, {transform_indices = @transform_7, window_bounds = array<i64: 1, 16, 16, 128>}]} {
    %cst = arith.constant 0.000000e+00 : bf16
    %0 = vector.broadcast %cst : bf16 to vector<18x18x128xbf16>
    %c0 = arith.constant 0 : index
    %c0_0 = arith.constant 0 : index
    %c0_1 = arith.constant 0 : index
    %1 = vector.load %arg9[%c0, %c0_0, %c0_1] : memref<18x18x128xbf16, #tpu.memory_space<vmem>>, vector<18x18x128xbf16>
    tpu.vector_store %arg9[%c0, %c0_0, %c0_1], %0 {strides = array<i32>} : memref<18x18x128xbf16, #tpu.memory_space<vmem>>, vector<18x18x128xbf16>,
    %c0_2 = arith.constant 0 : index
    %c0_3 = arith.constant 0 : index
    %c0_4 = arith.constant 0 : index
    %c0_5 = arith.constant 0 : index
    %2 = vector.load %arg1[%c0_2, %c0_3, %c0_4, %c0_5] : memref<1x16x16x128xf32, #tpu.memory_space<vmem>>, vector<1x16x16x128xf32>
    %3 = vector.shape_cast %2 : vector<1x16x16x128xf32> to vector<16x16x128xf32>
    %c0_6 = arith.constant 0 : index
    %c0_7 = arith.constant 0 : index
    %c0_8 = arith.constant 0 : index
    %4 = vector.load %arg2[%c0_6, %c0_7, %c0_8] : memref<1x1x128xf32, #tpu.memory_space<vmem>>, vector<1x1x128xf32>
    %5 = vector.broadcast %4 : vector<1x1x128xf32> to vector<16x16x128xf32>
    %6 = arith.mulf %3, %5 : vector<16x16x128xf32>
    %c0_9 = arith.constant 0 : index
    %c0_10 = arith.constant 0 : index
    %c0_11 = arith.constant 0 : index
    %7 = vector.load %arg3[%c0_9, %c0_10, %c0_11] : memref<1x1x128xf32, #tpu.memory_space<vmem>>, vector<1x1x128xf32>
    %8 = vector.broadcast %7 : vector<1x1x128xf32> to vector<16x16x128xf32>
    %9 = arith.addf %6, %8 : vector<16x16x128xf32>
    %cst_12 = arith.constant 0.000000e+00 : f32
    %10 = vector.broadcast %cst_12 : f32 to vector<16x16x128xf32>
    %11 = arith.maximumf %9, %10 : vector<16x16x128xf32>
    %12 = arith.truncf %11 : vector<16x16x128xf32> to vector<16x16x128xbf16>
    %c1 = arith.constant 1 : index
    %c1_13 = arith.constant 1 : index
    %c0_14 = arith.constant 0 : index
    %13 = vector.load %arg9[%c1, %c1_13, %c0_14] : memref<18x18x128xbf16, #tpu.memory_space<vmem>>, vector<16x16x128xbf16>
    tpu.vector_store %arg9[%c1, %c1_13, %c0_14], %12 {strides = array<i32>} : memref<18x18x128xbf16, #tpu.memory_space<vmem>>, vector<16x16x128xbf16>,
    %c0_15 = arith.constant 0 : index
    %c0_16 = arith.constant 0 : index
    %c0_17 = arith.constant 0 : index
    %14 = vector.load %arg9[%c0_15, %c0_16, %c0_17] : memref<18x18x128xbf16, #tpu.memory_space<vmem>>, vector<16x16x128xbf16>
    %c0_18 = arith.constant 0 : index
    %c1_19 = arith.constant 1 : index
    %c0_20 = arith.constant 0 : index
    %15 = vector.load %arg9[%c0_18, %c1_19, %c0_20] : memref<18x18x128xbf16, #tpu.memory_space<vmem>>, vector<16x16x128xbf16>
    %c0_21 = arith.constant 0 : index
    %c2 = arith.constant 2 : index
    %c0_22 = arith.constant 0 : index
    %16 = vector.load %arg9[%c0_21, %c2, %c0_22] : memref<18x18x128xbf16, #tpu.memory_space<vmem>>, vector<16x16x128xbf16>
    %c1_23 = arith.constant 1 : index
    %c0_24 = arith.constant 0 : index
    %c0_25 = arith.constant 0 : index
    %17 = vector.load %arg9[%c1_23, %c0_24, %c0_25] : memref<18x18x128xbf16, #tpu.memory_space<vmem>>, vector<16x16x128xbf16>
    %c1_26 = arith.constant 1 : index
    %c1_27 = arith.constant 1 : index
    %c0_28 = arith.constant 0 : index
    %18 = vector.load %arg9[%c1_26, %c1_27, %c0_28] : memref<18x18x128xbf16, #tpu.memory_space<vmem>>, vector<16x16x128xbf16>
    %c1_29 = arith.constant 1 : index
    %c2_30 = arith.constant 2 : index
    %c0_31 = arith.constant 0 : index
    %19 = vector.load %arg9[%c1_29, %c2_30, %c0_31] : memref<18x18x128xbf16, #tpu.memory_space<vmem>>, vector<16x16x128xbf16>
    %c2_32 = arith.constant 2 : index
    %c0_33 = arith.constant 0 : index
    %c0_34 = arith.constant 0 : index
    %20 = vector.load %arg9[%c2_32, %c0_33, %c0_34] : memref<18x18x128xbf16, #tpu.memory_space<vmem>>, vector<16x16x128xbf16>
    %c2_35 = arith.constant 2 : index
    %c1_36 = arith.constant 1 : index
    %c0_37 = arith.constant 0 : index
    %21 = vector.load %arg9[%c2_35, %c1_36, %c0_37] : memref<18x18x128xbf16, #tpu.memory_space<vmem>>, vector<16x16x128xbf16>
    %c2_38 = arith.constant 2 : index
    %c2_39 = arith.constant 2 : index
    %c0_40 = arith.constant 0 : index
    %22 = vector.load %arg9[%c2_38, %c2_39, %c0_40] : memref<18x18x128xbf16, #tpu.memory_space<vmem>>, vector<16x16x128xbf16>
    %23 = tpu.concatenate %14, %15, %16, %17, %18, %19, %20, %21, %22 in 2 : vector<16x16x128xbf16>, vector<16x16x128xbf16>, vector<16x16x128xbf16>, vector<16x16x128xbf16>, vector<16x16x128xbf16>, vector<16x16x128xbf16>, vector<16x16x128xbf16>, vector<16x16x128xbf16>, vector<16x16x128xbf16> -> vector<16x16x1152xbf16>
    %24 = vector.shape_cast %23 : vector<16x16x1152xbf16> to vector<256x1152xbf16>
    %c0_41 = arith.constant 0 : index
    %c0_42 = arith.constant 0 : index
    %25 = vector.load %arg4[%c0_41, %c0_42] : memref<1152x128xbf16, #tpu.memory_space<vmem>>, vector<1152x128xbf16>
    %cst_43 = arith.constant dense<0.000000e+00> : vector<256x128xf32>
    %26 = tpu.matmul %24, %25, %cst_43 {dimension_numbers = #tpu.dot_dimension_numbers<[1], [0], [0], [1], [0, 0, 1, 1], [], []>} : vector<256x1152xbf16>, vector<1152x128xbf16>, vector<256x128xf32> -> vector<256x128xf32>
    %27 = vector.shape_cast %26 : vector<256x128xf32> to vector<16x16x128xf32>
    %c0_44 = arith.constant 0 : index
    %c0_45 = arith.constant 0 : index
    %c0_46 = arith.constant 0 : index
    %28 = vector.load %arg5[%c0_44, %c0_45, %c0_46] : memref<1x1x128xf32, #tpu.memory_space<vmem>>, vector<1x1x128xf32>
    %29 = vector.broadcast %28 : vector<1x1x128xf32> to vector<16x16x128xf32>
    %30 = arith.mulf %27, %29 : vector<16x16x128xf32>
    %c0_47 = arith.constant 0 : index
    %c0_48 = arith.constant 0 : index
    %c0_49 = arith.constant 0 : index
    %31 = vector.load %arg6[%c0_47, %c0_48, %c0_49] : memref<1x1x128xf32, #tpu.memory_space<vmem>>, vector<1x1x128xf32>
    %32 = vector.broadcast %31 : vector<1x1x128xf32> to vector<16x16x128xf32>
    %33 = arith.addf %30, %32 : vector<16x16x128xf32>
    %cst_50 = arith.constant 0.000000e+00 : f32
    %34 = vector.broadcast %cst_50 : f32 to vector<16x16x128xf32>
    %35 = arith.maximumf %33, %34 : vector<16x16x128xf32>
    %36 = arith.truncf %35 : vector<16x16x128xf32> to vector<16x16x128xbf16>
    %c1_51 = arith.constant 1 : index
    %c1_52 = arith.constant 1 : index
    %c0_53 = arith.constant 0 : index
    %37 = vector.load %arg9[%c1_51, %c1_52, %c0_53] : memref<18x18x128xbf16, #tpu.memory_space<vmem>>, vector<16x16x128xbf16>
    tpu.vector_store %arg9[%c1_51, %c1_52, %c0_53], %36 {strides = array<i32>} : memref<18x18x128xbf16, #tpu.memory_space<vmem>>, vector<16x16x128xbf16>,
    %c0_54 = arith.constant 0 : index
    %c0_55 = arith.constant 0 : index
    %c0_56 = arith.constant 0 : index
    %38 = vector.load %arg9[%c0_54, %c0_55, %c0_56] : memref<18x18x128xbf16, #tpu.memory_space<vmem>>, vector<16x16x128xbf16>
    %c0_57 = arith.constant 0 : index
    %c1_58 = arith.constant 1 : index
    %c0_59 = arith.constant 0 : index
    %39 = vector.load %arg9[%c0_57, %c1_58, %c0_59] : memref<18x18x128xbf16, #tpu.memory_space<vmem>>, vector<16x16x128xbf16>
    %c0_60 = arith.constant 0 : index
    %c2_61 = arith.constant 2 : index
    %c0_62 = arith.constant 0 : index
    %40 = vector.load %arg9[%c0_60, %c2_61, %c0_62] : memref<18x18x128xbf16, #tpu.memory_space<vmem>>, vector<16x16x128xbf16>
    %c1_63 = arith.constant 1 : index
    %c0_64 = arith.constant 0 : index
    %c0_65 = arith.constant 0 : index
    %41 = vector.load %arg9[%c1_63, %c0_64, %c0_65] : memref<18x18x128xbf16, #tpu.memory_space<vmem>>, vector<16x16x128xbf16>
    %c1_66 = arith.constant 1 : index
    %c1_67 = arith.constant 1 : index
    %c0_68 = arith.constant 0 : index
    %42 = vector.load %arg9[%c1_66, %c1_67, %c0_68] : memref<18x18x128xbf16, #tpu.memory_space<vmem>>, vector<16x16x128xbf16>
    %c1_69 = arith.constant 1 : index
    %c2_70 = arith.constant 2 : index
    %c0_71 = arith.constant 0 : index
    %43 = vector.load %arg9[%c1_69, %c2_70, %c0_71] : memref<18x18x128xbf16, #tpu.memory_space<vmem>>, vector<16x16x128xbf16>
    %c2_72 = arith.constant 2 : index
    %c0_73 = arith.constant 0 : index
    %c0_74 = arith.constant 0 : index
    %44 = vector.load %arg9[%c2_72, %c0_73, %c0_74] : memref<18x18x128xbf16, #tpu.memory_space<vmem>>, vector<16x16x128xbf16>
    %c2_75 = arith.constant 2 : index
    %c1_76 = arith.constant 1 : index
    %c0_77 = arith.constant 0 : index
    %45 = vector.load %arg9[%c2_75, %c1_76, %c0_77] : memref<18x18x128xbf16, #tpu.memory_space<vmem>>, vector<16x16x128xbf16>
    %c2_78 = arith.constant 2 : index
    %c2_79 = arith.constant 2 : index
    %c0_80 = arith.constant 0 : index
    %46 = vector.load %arg9[%c2_78, %c2_79, %c0_80] : memref<18x18x128xbf16, #tpu.memory_space<vmem>>, vector<16x16x128xbf16>
    %47 = tpu.concatenate %38, %39, %40, %41, %42, %43, %44, %45, %46 in 2 : vector<16x16x128xbf16>, vector<16x16x128xbf16>, vector<16x16x128xbf16>, vector<16x16x128xbf16>, vector<16x16x128xbf16>, vector<16x16x128xbf16>, vector<16x16x128xbf16>, vector<16x16x128xbf16>, vector<16x16x128xbf16> -> vector<16x16x1152xbf16>
    %48 = vector.shape_cast %47 : vector<16x16x1152xbf16> to vector<256x1152xbf16>
    %c0_81 = arith.constant 0 : index
    %c0_82 = arith.constant 0 : index
    %49 = vector.load %arg7[%c0_81, %c0_82] : memref<1152x128xbf16, #tpu.memory_space<vmem>>, vector<1152x128xbf16>
    %cst_83 = arith.constant dense<0.000000e+00> : vector<256x128xf32>
    %50 = tpu.matmul %48, %49, %cst_83 {dimension_numbers = #tpu.dot_dimension_numbers<[1], [0], [0], [1], [0, 0, 1, 1], [], []>} : vector<256x1152xbf16>, vector<1152x128xbf16>, vector<256x128xf32> -> vector<256x128xf32>
    %51 = vector.shape_cast %50 : vector<256x128xf32> to vector<16x16x128xf32>
    %c0_84 = arith.constant 0 : index
    %c0_85 = arith.constant 0 : index
    %c0_86 = arith.constant 0 : index
    %c0_87 = arith.constant 0 : index
    %52 = vector.load %arg1[%c0_84, %c0_85, %c0_86, %c0_87] : memref<1x16x16x128xf32, #tpu.memory_space<vmem>>, vector<1x16x16x128xf32>
    %53 = vector.shape_cast %52 : vector<1x16x16x128xf32> to vector<16x16x128xf32>
    %54 = arith.addf %51, %53 : vector<16x16x128xf32>
    %c0_88 = arith.constant 0 : index
    %c0_89 = arith.constant 0 : index
    %c0_90 = arith.constant 0 : index
    %c0_91 = arith.constant 0 : index
    %55 = vector.load %arg8[%c0_88, %c0_89, %c0_90, %c0_91] : memref<1x16x16x128xf32, #tpu.memory_space<vmem>>, vector<1x16x16x128xf32>
    %56 = vector.shape_cast %55 : vector<1x16x16x128xf32> to vector<16x16x128xf32>
    %57 = vector.shape_cast %54 : vector<16x16x128xf32> to vector<1x16x16x128xf32>
    tpu.vector_store %arg8[%c0_88, %c0_89, %c0_90, %c0_91], %57 {strides = array<i32>} : memref<1x16x16x128xf32, #tpu.memory_space<vmem>>, vector<1x16x16x128xf32>,
    return
  }
  func.func @transform_0(%arg0: i32) -> (i32, i32, i32, i32) {
    %c0_i32 = arith.constant 0 : i32
    %c0_i32_0 = arith.constant 0 : i32
    %c0_i32_1 = arith.constant 0 : i32
    %c0_i32_2 = arith.constant 0 : i32
    return %arg0, %c0_i32, %c0_i32_0, %c0_i32_1 : i32, i32, i32, i32
  }
  func.func @transform_1(%arg0: i32) -> (i32, i32, i32) {
    %c0_i32 = arith.constant 0 : i32
    %c0_i32_0 = arith.constant 0 : i32
    %c0_i32_1 = arith.constant 0 : i32
    %c0_i32_2 = arith.constant 0 : i32
    return %c0_i32, %c0_i32_0, %c0_i32_1 : i32, i32, i32
  }
  func.func @transform_2(%arg0: i32) -> (i32, i32, i32) {
    %c0_i32 = arith.constant 0 : i32
    %c0_i32_0 = arith.constant 0 : i32
    %c0_i32_1 = arith.constant 0 : i32
    %c0_i32_2 = arith.constant 0 : i32
    return %c0_i32, %c0_i32_0, %c0_i32_1 : i32, i32, i32
  }
  func.func @transform_3(%arg0: i32) -> (i32, i32) {
    %c0_i32 = arith.constant 0 : i32
    %c0_i32_0 = arith.constant 0 : i32
    %c0_i32_1 = arith.constant 0 : i32
    return %c0_i32, %c0_i32_0 : i32, i32
  }
  func.func @transform_4(%arg0: i32) -> (i32, i32, i32) {
    %c0_i32 = arith.constant 0 : i32
    %c0_i32_0 = arith.constant 0 : i32
    %c0_i32_1 = arith.constant 0 : i32
    %c0_i32_2 = arith.constant 0 : i32
    return %c0_i32, %c0_i32_0, %c0_i32_1 : i32, i32, i32
  }
  func.func @transform_5(%arg0: i32) -> (i32, i32, i32) {
    %c0_i32 = arith.constant 0 : i32
    %c0_i32_0 = arith.constant 0 : i32
    %c0_i32_1 = arith.constant 0 : i32
    %c0_i32_2 = arith.constant 0 : i32
    return %c0_i32, %c0_i32_0, %c0_i32_1 : i32, i32, i32
  }
  func.func @transform_6(%arg0: i32) -> (i32, i32) {
    %c0_i32 = arith.constant 0 : i32
    %c0_i32_0 = arith.constant 0 : i32
    %c0_i32_1 = arith.constant 0 : i32
    return %c0_i32, %c0_i32_0 : i32, i32
  }
  func.func @transform_7(%arg0: i32) -> (i32, i32, i32, i32) {
    %c0_i32 = arith.constant 0 : i32
    %c0_i32_0 = arith.constant 0 : i32
    %c0_i32_1 = arith.constant 0 : i32
    %c0_i32_2 = arith.constant 0 : i32
    return %arg0, %c0_i32, %c0_i32_0, %c0_i32_1 : i32, i32, i32, i32
  }
}

</mosaic_0001>

<llo_original>
// kernel: tpu_custom_call.1
$region0: #{tpu_custom_call.1}
  #allocation0 [shape = 'u32[]', space=smem, size = 0x4, offset = 0x4, fixed_abs, tag = 'smem constant byte address 0x4 - core index']
  #allocation1 [shape = 'u32[144,128]{1,0:T(1,128)}', space=vmem, size = 0x12000, scoped, tag = 'internal scratch']
  #allocation2 [shape = 'bf16[18,18,128]{2,1,0:T(8,128)(2,1)}', space=vmem, size = 0x1b000, scoped, tag = 'scratch operand']
  %s0 = inlined_call_operand.hbm [shape: f32[2,16,16,128], index: 0, kind: input, shape index: {}]
  %s1 = inlined_call_operand.vmem [shape: f32[1,1,128], index: 1, kind: input, shape index: {}]
  %s2 = inlined_call_operand.vmem [shape: f32[1,1,128], index: 2, kind: input, shape index: {}]
  %s3 = inlined_call_operand.hbm [shape: bf16[1152,128], index: 3, kind: input, shape index: {}]
  %s4 = inlined_call_operand.vmem [shape: f32[1,1,128], index: 4, kind: input, shape index: {}]
  %s5 = inlined_call_operand.vmem [shape: f32[1,1,128], index: 5, kind: input, shape index: {}]
  %s6 = inlined_call_operand.hbm [shape: bf16[1152,128], index: 6, kind: input, shape index: {}]
  %s7 = inlined_call_operand.hbm [shape: f32[2,16,16,128], index: 7, kind: output, shape index: {}]
  %s8 = sld [smem:[#allocation0]]
  $region73: #{tpu_custom_call.1} parent=0
    _
  %s10 = ssub.s32 1, %s8
  %s11 = scalar_select 0, %s10, %s8
  $region1: #{tpu_custom_call.1} parent=0
    #allocation3 [shape = 'u8[262144]{0}', space=vmem, size = 0x40000, scoped, tag = 'input window, operand 0']
    #allocation4 [shape = 's32[2]{0}', space=sflag, size = 0x8, scoped, tag = 'scoped memory for tpu_custom_call.1']
    #allocation5 [shape = 's32[2]{0}', space=sflag, size = 0x8, scoped, tag = 'scoped memory for tpu_custom_call.1']
    #allocation6 [shape = 'u8[294912]{0}', space=vmem, size = 0x48000, scoped, tag = 'input window, operand 3, single buffered']
    #allocation7 [shape = 's32[1]{0}', space=sflag, size = 0x4, scoped, tag = 'scoped memory for tpu_custom_call.1']
    #allocation8 [shape = 'u8[294912]{0}', space=vmem, size = 0x48000, scoped, tag = 'input window, operand 6, single buffered']
    #allocation9 [shape = 'u8[262144]{0}', space=vmem, size = 0x40000, scoped, tag = 'output window, operand 0']
    %12 = vsyncpa [#allocation4], 0
    %s13 = scalar_lea.sflag [#allocation4], 1
    %14 = vsyncpa %s13, 0
    %15 = vsyncpa [#allocation7], 0
    %16 = vsyncpa [#allocation5], 0
    %s17 = scalar_lea.sflag [#allocation5], 1
    %18 = vsyncpa %s17, 0
    loop: start=0, step=1, limit=4
    $region2: #{tpu_custom_call.1} parent=1 // loop_pre_header
      _
    $region3: #{tpu_custom_call.1} parent=1 // loop_header
      %s20 = sphi 0, %s24
      %p21 = scmp.ge.s32.totalorder %s20, 4
      %s30 = sphi 0, %s32
      %s33 = sphi 0, %s30
      %s34 = sphi 0, %s33
      %s50 = sphi 0, %s34
      %s54 = sphi 0, %s54
      %s56 = sphi 0, %s54
      %s57 = sphi 0, %s56
      %s71 = sphi 0, %s57
      %s75 = sphi 0, %s75
      %s77 = sphi 0, %s75
      %s78 = sphi 0, %s77
      %s92 = sphi 0, %s78
      %s96 = sphi 0, %s96
      %s98 = sphi 0, %s96
      %s99 = sphi 0, %s98
      %s113 = sphi 0, %s99
      %s117 = sphi 0, %s117
      %s119 = sphi 0, %s117
      %s120 = sphi 0, %s119
      %s134 = sphi 0, %s120
      %s138 = sphi 0, %s138
      %s140 = sphi 0, %s138
      %s141 = sphi 0, %s140
      %s155 = sphi 0, %s141
      %s159 = sphi 0, %s159
      %s161 = sphi 0, %s159
      %s162 = sphi 0, %s161
      %s176 = sphi 0, %s162
      %s182 = sphi 0, %s184
      %s185 = sphi 0, %s182
      %s186 = sphi 0, %s185
      %s202 = sphi 0, %s186
    $region4: #{tpu_custom_call.1} parent=1 // loop_header_branch
      %23 = sbr.rel (%p21) target = $region8
    $region5: #{tpu_custom_call.1} parent=1 // loop_body
      %s25 = ssub.s32 %s20, 1
      %s26 = ssub.s32 %s20, 2
      %s27 = sadd.s32 %s20, 1
      %s28 = ssub.s32 %s20, %s27
      %p29 = scmp.eq.s32.totalorder %s28, 0
      %s31 = sadd.s32 %s30, 1
      %s32 = scalar_select %p29, %s30, %s31
      %p35 = pneg %p29
      %p36 = scmp.eq.s32.totalorder %s20, 1
      %p37 = por %p35, %p36
      %p38 = scmp.ne.s32.totalorder %s30, %s33
      %p39 = scmp.eq.s32.totalorder %s20, 0
      %p40 = por %p38, %p39
      %p41 = scmp.ne.s32.totalorder %s30, %s33
      %p42 = scmp.eq.s32.totalorder %s25, 1
      %p43 = por %p41, %p42
      %p44 = scmp.ne.s32.totalorder %s33, %s34
      %p45 = scmp.eq.s32.totalorder %s25, 0
      %p46 = por %p44, %p45
      %p47 = scmp.ne.s32.totalorder %s33, %s34
      %p48 = scmp.eq.s32.totalorder %s26, 1
      %p49 = por %p47, %p48
      %p51 = scmp.ne.s32.totalorder %s34, %s50
      %p52 = scmp.eq.s32.totalorder %s26, 0
      %p53 = por %p51, %p52
      %s55 = sadd.s32 %s54, 1
      %p58 = scmp.eq.s32.totalorder %s20, 1
      %p59 = scmp.ne.s32.totalorder %s54, %s56
      %p60 = scmp.eq.s32.totalorder %s20, 0
      %p61 = por %p59, %p60
      %p62 = scmp.ne.s32.totalorder %s54, %s56
      %p63 = scmp.eq.s32.totalorder %s25, 1
      %p64 = por %p62, %p63
      %p65 = scmp.ne.s32.totalorder %s56, %s57
      %p66 = scmp.eq.s32.totalorder %s25, 0
      %p67 = por %p65, %p66
      %p68 = scmp.ne.s32.totalorder %s56, %s57
      %p69 = scmp.eq.s32.totalorder %s26, 1
      %p70 = por %p68, %p69
      %p72 = scmp.ne.s32.totalorder %s57, %s71
      %p73 = scmp.eq.s32.totalorder %s26, 0
      %p74 = por %p72, %p73
      %s76 = sadd.s32 %s75, 1
      %p79 = scmp.eq.s32.totalorder %s20, 1
      %p80 = scmp.ne.s32.totalorder %s75, %s77
      %p81 = scmp.eq.s32.totalorder %s20, 0
      %p82 = por %p80, %p81
      %p83 = scmp.ne.s32.totalorder %s75, %s77
      %p84 = scmp.eq.s32.totalorder %s25, 1
      %p85 = por %p83, %p84
      %p86 = scmp.ne.s32.totalorder %s77, %s78
      %p87 = scmp.eq.s32.totalorder %s25, 0
      %p88 = por %p86, %p87
      %p89 = scmp.ne.s32.totalorder %s77, %s78
      %p90 = scmp.eq.s32.totalorder %s26, 1
      %p91 = por %p89, %p90
      %p93 = scmp.ne.s32.totalorder %s78, %s92
      %p94 = scmp.eq.s32.totalorder %s26, 0
      %p95 = por %p93, %p94
      %s97 = sadd.s32 %s96, 1
      %p100 = scmp.eq.s32.totalorder %s20, 1
      %p101 = scmp.ne.s32.totalorder %s96, %s98
      %p102 = scmp.eq.s32.totalorder %s20, 0
      %p103 = por %p101, %p102
      %p104 = scmp.ne.s32.totalorder %s96, %s98
      %p105 = scmp.eq.s32.totalorder %s25, 1
      %p106 = por %p104, %p105
      %p107 = scmp.ne.s32.totalorder %s98, %s99
      %p108 = scmp.eq.s32.totalorder %s25, 0
      %p109 = por %p107, %p108
      %p110 = scmp.ne.s32.totalorder %s98, %s99
      %p111 = scmp.eq.s32.totalorder %s26, 1
      %p112 = por %p110, %p111
      %p114 = scmp.ne.s32.totalorder %s99, %s113
      %p115 = scmp.eq.s32.totalorder %s26, 0
      %p116 = por %p114, %p115
      %s118 = sadd.s32 %s117, 1
      %p121 = scmp.eq.s32.totalorder %s20, 1
      %p122 = scmp.ne.s32.totalorder %s117, %s119
      %p123 = scmp.eq.s32.totalorder %s20, 0
      %p124 = por %p122, %p123
      %p125 = scmp.ne.s32.totalorder %s117, %s119
      %p126 = scmp.eq.s32.totalorder %s25, 1
      %p127 = por %p125, %p126
      %p128 = scmp.ne.s32.totalorder %s119, %s120
      %p129 = scmp.eq.s32.totalorder %s25, 0
      %p130 = por %p128, %p129
      %p131 = scmp.ne.s32.totalorder %s119, %s120
      %p132 = scmp.eq.s32.totalorder %s26, 1
      %p133 = por %p131, %p132
      %p135 = scmp.ne.s32.totalorder %s120, %s134
      %p136 = scmp.eq.s32.totalorder %s26, 0
      %p137 = por %p135, %p136
      %s139 = sadd.s32 %s138, 1
      %p142 = scmp.eq.s32.totalorder %s20, 1
      %p143 = scmp.ne.s32.totalorder %s138, %s140
      %p144 = scmp.eq.s32.totalorder %s20, 0
      %p145 = por %p143, %p144
      %p146 = scmp.ne.s32.totalorder %s138, %s140
      %p147 = scmp.eq.s32.totalorder %s25, 1
      %p148 = por %p146, %p147
      %p149 = scmp.ne.s32.totalorder %s140, %s141
      %p150 = scmp.eq.s32.totalorder %s25, 0
      %p151 = por %p149, %p150
      %p152 = scmp.ne.s32.totalorder %s140, %s141
      %p153 = scmp.eq.s32.totalorder %s26, 1
      %p154 = por %p152, %p153
      %p156 = scmp.ne.s32.totalorder %s141, %s155
      %p157 = scmp.eq.s32.totalorder %s26, 0
      %p158 = por %p156, %p157
      %s160 = sadd.s32 %s159, 1
      %p163 = scmp.eq.s32.totalorder %s20, 1
      %p164 = scmp.ne.s32.totalorder %s159, %s161
      %p165 = scmp.eq.s32.totalorder %s20, 0
      %p166 = por %p164, %p165
      %p167 = scmp.ne.s32.totalorder %s159, %s161
      %p168 = scmp.eq.s32.totalorder %s25, 1
      %p169 = por %p167, %p168
      %p170 = scmp.ne.s32.totalorder %s161, %s162
      %p171 = scmp.eq.s32.totalorder %s25, 0
      %p172 = por %p170, %p171
      %p173 = scmp.ne.s32.totalorder %s161, %s162
      %p174 = scmp.eq.s32.totalorder %s26, 1
      %p175 = por %p173, %p174
      %p177 = scmp.ne.s32.totalorder %s162, %s176
      %p178 = scmp.eq.s32.totalorder %s26, 0
      %p179 = por %p177, %p178
      %s180 = ssub.s32 %s20, %s27
      %p181 = scmp.eq.s32.totalorder %s180, 0
      %s183 = sadd.s32 %s182, 1
      %s184 = scalar_select %p181, %s182, %s183
      %p187 = pneg %p181
      %p188 = scmp.eq.s32.totalorder %s20, 1
      %p189 = por %p187, %p188
      %p190 = scmp.ne.s32.totalorder %s182, %s185
      %p191 = scmp.eq.s32.totalorder %s20, 0
      %p192 = por %p190, %p191
      %p193 = scmp.ne.s32.totalorder %s182, %s185
      %p194 = scmp.eq.s32.totalorder %s25, 1
      %p195 = por %p193, %p194
      %p196 = scmp.ne.s32.totalorder %s185, %s186
      %p197 = scmp.eq.s32.totalorder %s25, 0
      %p198 = por %p196, %p197
      %p199 = scmp.ne.s32.totalorder %s185, %s186
      %p200 = scmp.eq.s32.totalorder %s26, 1
      %p201 = por %p199, %p200
      %p203 = scmp.ne.s32.totalorder %s186, %s202
      %p204 = scmp.eq.s32.totalorder %s26, 0
      %p205 = por %p203, %p204
      %p206 = scmp.le.s32.totalorder 1, %s20
      %p207 = scmp.lt.s32.totalorder %s20, 3
      %p208 = pnand %p206, %p207
      %p209 = pneg %p208
      // Predicated region
      $region9: #{tpu_custom_call.1} parent=5 // pred_check
        _
      $region10: #{tpu_custom_call.1} parent=5 // pred_check_branch
        %211 = sbr.rel (%p208) target = $region12
      $region11: #{tpu_custom_call.1} parent=5 // pred_region
        %s212 = ssub.s32 %s20, 1
        // Predicated region
        $region13: #{tpu_custom_call.1} parent=11 // pred_check
          %p213 = pneg %p67
        $region14: #{tpu_custom_call.1} parent=11 // pred_check_branch
          %215 = sbr.rel (%p213) target = $region16
        $region15: #{tpu_custom_call.1} parent=11 // pred_region
          _
        $region16: #{tpu_custom_call.1} parent=11 // pred_fallthru
          _
        // Predicated region
        $region17: #{tpu_custom_call.1} parent=11 // pred_check
          %p216 = pneg %p88
        $region18: #{tpu_custom_call.1} parent=11 // pred_check_branch
          %218 = sbr.rel (%p216) target = $region20
        $region19: #{tpu_custom_call.1} parent=11 // pred_region
          _
        $region20: #{tpu_custom_call.1} parent=11 // pred_fallthru
          _
        // Predicated region
        $region21: #{tpu_custom_call.1} parent=11 // pred_check
          %p219 = pneg %p109
        $region22: #{tpu_custom_call.1} parent=11 // pred_check_branch
          %221 = sbr.rel (%p219) target = $region24
        $region23: #{tpu_custom_call.1} parent=11 // pred_region
          %s223 = ssub.s32 9216, 9216
          %224 = vsyncadd [#allocation7], %s223
          %s225 = sshll.u32 [#allocation6], 4
          %s226 = int_to_ptr.vmem [resolvable:$true] %s225
          %231 = dma.hbm_to_vmem [thread:$0]  %s3, 9216, %s226, [#allocation7], 64, 64, 4
        $region24: #{tpu_custom_call.1} parent=11 // pred_fallthru
          _
        // Predicated region
        $region25: #{tpu_custom_call.1} parent=11 // pred_check
          %p232 = pneg %p130
        $region26: #{tpu_custom_call.1} parent=11 // pred_check_branch
          %234 = sbr.rel (%p232) target = $region28
        $region27: #{tpu_custom_call.1} parent=11 // pred_region
          _
        $region28: #{tpu_custom_call.1} parent=11 // pred_fallthru
          _
        // Predicated region
        $region29: #{tpu_custom_call.1} parent=11 // pred_check
          %p235 = pneg %p151
        $region30: #{tpu_custom_call.1} parent=11 // pred_check_branch
          %237 = sbr.rel (%p235) target = $region32
        $region31: #{tpu_custom_call.1} parent=11 // pred_region
          _
        $region32: #{tpu_custom_call.1} parent=11 // pred_fallthru
          _
        // Predicated region
        $region33: #{tpu_custom_call.1} parent=11 // pred_check
          %p238 = pneg %p172
        $region34: #{tpu_custom_call.1} parent=11 // pred_check_branch
          %240 = sbr.rel (%p238) target = $region36
        $region35: #{tpu_custom_call.1} parent=11 // pred_region
          %s242 = ssub.s32 9216, 9216
          %243 = vsyncadd [#allocation7], %s242
          %s244 = sshll.u32 [#allocation8], 4
          %s245 = int_to_ptr.vmem [resolvable:$true] %s244
          %250 = dma.hbm_to_vmem [thread:$0]  %s6, 9216, %s245, [#allocation7], 64, 64, 4
        $region36: #{tpu_custom_call.1} parent=11 // pred_fallthru
          _
      $region12: #{tpu_custom_call.1} parent=5 // pred_fallthru
        _
      %p251 = scmp.lt.s32.totalorder %s20, 2
      // Predicated region
      $region37: #{tpu_custom_call.1} parent=5 // pred_check
        %p252 = pneg %p251
      $region38: #{tpu_custom_call.1} parent=5 // pred_check_branch
        %254 = sbr.rel (%p252) target = $region40
      $region39: #{tpu_custom_call.1} parent=5 // pred_region
        // Predicated region
        $region41: #{tpu_custom_call.1} parent=39 // pred_check
          %p255 = pneg %p40
        $region42: #{tpu_custom_call.1} parent=39 // pred_check_branch
          %257 = sbr.rel (%p255) target = $region44
        $region43: #{tpu_custom_call.1} parent=39 // pred_region
          %s258 = sand.u32 %s30, 1
          %s259 = scalar_lea.sflag [#allocation4], %s258
          %s260 = sand.u32 %s30, 1
          %s261 = smul.addr %s260, 256
          %s262 = scalar_lea.vmem [#allocation3], %s261
          %s264 = ssub.s32 4096, 4096
          %265 = vsyncadd %s259, %s264
          %s266 = smul.addr %s20, 32
          %s267 = smul.addr %s266, 128
          %s268 = scalar_lea.hbm %s0, %s267
          %s269 = sshll.u32 %s262, 4
          %s270 = int_to_ptr.vmem [resolvable:$true] %s269
          %275 = dma.hbm_to_vmem [thread:$0]  %s268, 4096, %s270, %s259, 128, 128, 8
        $region44: #{tpu_custom_call.1} parent=39 // pred_fallthru
          _
      $region40: #{tpu_custom_call.1} parent=5 // pred_fallthru
        _
      %p276 = scmp.le.s32.totalorder 1, %s20
      %p277 = scmp.lt.s32.totalorder %s20, 3
      %p278 = pnand %p276, %p277
      %p279 = pneg %p278
      // Predicated region
      $region45: #{tpu_custom_call.1} parent=5 // pred_check
        _
      $region46: #{tpu_custom_call.1} parent=5 // pred_check_branch
        %281 = sbr.rel (%p278) target = $region48
      $region47: #{tpu_custom_call.1} parent=5 // pred_region
        %s282 = ssub.s32 %s20, 1
        %s283 = sand.u32 %s33, 1
        %s284 = scalar_lea.sflag [#allocation4], %s283
        %s285 = sand.u32 %s33, 1
        %s286 = smul.addr %s285, 256
        %s287 = scalar_lea.vmem [#allocation3], %s286
        // Predicated region
        $region49: #{tpu_custom_call.1} parent=47 // pred_check
          %p288 = pneg %p46
        $region50: #{tpu_custom_call.1} parent=47 // pred_check_branch
          %290 = sbr.rel (%p288) target = $region52
        $region51: #{tpu_custom_call.1} parent=47 // pred_region
          %291 = dma.done %s284, 4096
        $region52: #{tpu_custom_call.1} parent=47 // pred_fallthru
          _
        // Predicated region
        $region53: #{tpu_custom_call.1} parent=47 // pred_check
          %p292 = pneg %p109
        $region54: #{tpu_custom_call.1} parent=47 // pred_check_branch
          %294 = sbr.rel (%p292) target = $region56
        $region55: #{tpu_custom_call.1} parent=47 // pred_region
          %295 = dma.done [#allocation7], 9216
        $region56: #{tpu_custom_call.1} parent=47 // pred_fallthru
          _
        // Predicated region
        $region57: #{tpu_custom_call.1} parent=47 // pred_check
          %p296 = pneg %p172
        $region58: #{tpu_custom_call.1} parent=47 // pred_check_branch
          %298 = sbr.rel (%p296) target = $region60
        $region59: #{tpu_custom_call.1} parent=47 // pred_region
          %299 = dma.done [#allocation7], 9216
        $region60: #{tpu_custom_call.1} parent=47 // pred_fallthru
          _
        %s300 = sand.u32 %s33, 1
        %s301 = scalar_lea.sflag [#allocation4], %s300
        %s302 = sand.u32 %s33, 1
        %s303 = smul.addr %s302, 256
        %s304 = scalar_lea.vmem [#allocation3], %s303
        %p305 = pneg %p46
        %p306 = pneg %p43
        %p307 = pneg %p67
        %p308 = pneg %p64
        %p309 = pneg %p88
        %p310 = pneg %p85
        %p311 = pneg %p109
        %p312 = pneg %p106
        %p313 = pneg %p130
        %p314 = pneg %p127
        %p315 = pneg %p151
        %p316 = pneg %p148
        %p317 = pneg %p172
        %p318 = pneg %p169
        %p319 = pneg %p198
        %p320 = pneg %p195
        %s321 = sand.u32 %s185, 1
        %s322 = scalar_lea.sflag [#allocation5], %s321
        %s323 = sand.u32 %s185, 1
        %s324 = smul.addr %s323, 256
        %s325 = scalar_lea.vmem [#allocation9], %s324
        %327 = vst [vmem:[#allocation2] sm:$0xf] 0
        %328 = vst [vmem:[#allocation2 + $0x4] sm:$0xf] 0
        %329 = vst [vmem:[#allocation2 + $0x8] sm:$0x1] 0
        %330 = vst [vmem:[#allocation2 + $0xc] sm:$0xf] 0
        %331 = vst [vmem:[#allocation2 + $0x10] sm:$0xf] 0
        %332 = vst [vmem:[#allocation2 + $0x14] sm:$0x1] 0
        %333 = vst [vmem:[#allocation2 + $0x18] sm:$0xf] 0
        %334 = vst [vmem:[#allocation2 + $0x1c] sm:$0xf] 0
        %335 = vst [vmem:[#allocation2 + $0x20] sm:$0x1] 0
        %336 = vst [vmem:[#allocation2 + $0x24] sm:$0xf] 0
        %337 = vst [vmem:[#allocation2 + $0x28] sm:$0xf] 0
        %338 = vst [vmem:[#allocation2 + $0x2c] sm:$0x1] 0
        %339 = vst [vmem:[#allocation2 + $0x30] sm:$0xf] 0
        %340 = vst [vmem:[#allocation2 + $0x34] sm:$0xf] 0
        %341 = vst [vmem:[#allocation2 + $0x38] sm:$0x1] 0
        %342 = vst [vmem:[#allocation2 + $0x3c] sm:$0xf] 0
        %343 = vst [vmem:[#allocation2 + $0x40] sm:$0xf] 0
        %344 = vst [vmem:[#allocation2 + $0x44] sm:$0x1] 0
        %345 = vst [vmem:[#allocation2 + $0x48] sm:$0xf] 0
        %346 = vst [vmem:[#allocation2 + $0x4c] sm:$0xf] 0
        %347 = vst [vmem:[#allocation2 + $0x50] sm:$0x1] 0
        %348 = vst [vmem:[#allocation2 + $0x54] sm:$0xf] 0
        %349 = vst [vmem:[#allocation2 + $0x58] sm:$0xf] 0
        %350 = vst [vmem:[#allocation2 + $0x5c] sm:$0x1] 0
        %351 = vst [vmem:[#allocation2 + $0x60] sm:$0xf] 0
        %352 = vst [vmem:[#allocation2 + $0x64] sm:$0xf] 0
        %353 = vst [vmem:[#allocation2 + $0x68] sm:$0x1] 0
        %354 = vst [vmem:[#allocation2 + $0x6c] sm:$0xf] 0
        %355 = vst [vmem:[#allocation2 + $0x70] sm:$0xf] 0
        %356 = vst [vmem:[#allocation2 + $0x74] sm:$0x1] 0
        %357 = vst [vmem:[#allocation2 + $0x78] sm:$0xf] 0
        %358 = vst [vmem:[#allocation2 + $0x7c] sm:$0xf] 0
        %359 = vst [vmem:[#allocation2 + $0x80] sm:$0x1] 0
        %360 = vst [vmem:[#allocation2 + $0x84] sm:$0xf] 0
        %361 = vst [vmem:[#allocation2 + $0x88] sm:$0xf] 0
        %362 = vst [vmem:[#allocation2 + $0x8c] sm:$0x1] 0
        %363 = vst [vmem:[#allocation2 + $0x90] sm:$0xf] 0
        %364 = vst [vmem:[#allocation2 + $0x94] sm:$0xf] 0
        %365 = vst [vmem:[#allocation2 + $0x98] sm:$0x1] 0
        %366 = vst [vmem:[#allocation2 + $0x9c] sm:$0xf] 0
        %367 = vst [vmem:[#allocation2 + $0xa0] sm:$0xf] 0
        %368 = vst [vmem:[#allocation2 + $0xa4] sm:$0x1] 0
        %369 = vst [vmem:[#allocation2 + $0xa8] sm:$0xf] 0
        %370 = vst [vmem:[#allocation2 + $0xac] sm:$0xf] 0
        %371 = vst [vmem:[#allocation2 + $0xb0] sm:$0x1] 0
        %372 = vst [vmem:[#allocation2 + $0xb4] sm:$0xf] 0
        %373 = vst [vmem:[#allocation2 + $0xb8] sm:$0xf] 0
        %374 = vst [vmem:[#allocation2 + $0xbc] sm:$0x1] 0
        %375 = vst [vmem:[#allocation2 + $0xc0] sm:$0xf] 0
        %376 = vst [vmem:[#allocation2 + $0xc4] sm:$0xf] 0
        %377 = vst [vmem:[#allocation2 + $0xc8] sm:$0x1] 0
        %378 = vst [vmem:[#allocation2 + $0xcc] sm:$0xf] 0
        %379 = vst [vmem:[#allocation2 + $0xd0] sm:$0xf] 0
        %380 = vst [vmem:[#allocation2 + $0xd4] sm:$0x1] 0
        %v381 = vld [vmem:[%s287] sm:$0xff]
        %v382 = vld [vmem:[%s287 + $0x8] sm:$0xff]
        %v383 = vld [vmem:[%s287 + $0x10] sm:$0xff]
        %v384 = vld [vmem:[%s287 + $0x18] sm:$0xff]
        %v385 = vld [vmem:[%s287 + $0x20] sm:$0xff]
        %v386 = vld [vmem:[%s287 + $0x28] sm:$0xff]
        %v387 = vld [vmem:[%s287 + $0x30] sm:$0xff]
        %v388 = vld [vmem:[%s287 + $0x38] sm:$0xff]
        %v389 = vld [vmem:[%s287 + $0x40] sm:$0xff]
        %v390 = vld [vmem:[%s287 + $0x48] sm:$0xff]
        %v391 = vld [vmem:[%s287 + $0x50] sm:$0xff]
        %v392 = vld [vmem:[%s287 + $0x58] sm:$0xff]
        %v393 = vld [vmem:[%s287 + $0x60] sm:$0xff]
        %v394 = vld [vmem:[%s287 + $0x68] sm:$0xff]
        %v395 = vld [vmem:[%s287 + $0x70] sm:$0xff]
        %v396 = vld [vmem:[%s287 + $0x78] sm:$0xff]
        %v397 = vld [vmem:[%s287 + $0x80] sm:$0xff]
        %v398 = vld [vmem:[%s287 + $0x88] sm:$0xff]
        %v399 = vld [vmem:[%s287 + $0x90] sm:$0xff]
        %v400 = vld [vmem:[%s287 + $0x98] sm:$0xff]
        %v401 = vld [vmem:[%s287 + $0xa0] sm:$0xff]
        %v402 = vld [vmem:[%s287 + $0xa8] sm:$0xff]
        %v403 = vld [vmem:[%s287 + $0xb0] sm:$0xff]
        %v404 = vld [vmem:[%s287 + $0xb8] sm:$0xff]
        %v405 = vld [vmem:[%s287 + $0xc0] sm:$0xff]
        %v406 = vld [vmem:[%s287 + $0xc8] sm:$0xff]
        %v407 = vld [vmem:[%s287 + $0xd0] sm:$0xff]
        %v408 = vld [vmem:[%s287 + $0xd8] sm:$0xff]
        %v409 = vld [vmem:[%s287 + $0xe0] sm:$0xff]
        %v410 = vld [vmem:[%s287 + $0xe8] sm:$0xff]
        %v411 = vld [vmem:[%s287 + $0xf0] sm:$0xff]
        %v412 = vld [vmem:[%s287 + $0xf8] sm:$0xff]
        %v413 = vld [vmem:[%s1] sm:$0x1]
        %v415 = vlaneseq
        %v416 = vshrl.u32 %v415, 7
        %v417 = vsub.s32 0, %v416
        %v418 = vrot.slane %v413, %v417
        %v420 = vmul.f32 %v381, %v418
        %v421 = vmul.f32 %v382, %v418
        %v422 = vmul.f32 %v383, %v418
        %v423 = vmul.f32 %v384, %v418
        %v424 = vmul.f32 %v385, %v418
        %v425 = vmul.f32 %v386, %v418
        %v426 = vmul.f32 %v387, %v418
        %v427 = vmul.f32 %v388, %v418
        %v428 = vmul.f32 %v389, %v418
        %v429 = vmul.f32 %v390, %v418
        %v430 = vmul.f32 %v391, %v418
        %v431 = vmul.f32 %v392, %v418
        %v432 = vmul.f32 %v393, %v418
        %v433 = vmul.f32 %v394, %v418
        %v434 = vmul.f32 %v395, %v418
        %v435 = vmul.f32 %v396, %v418
        %v436 = vmul.f32 %v397, %v418
        %v437 = vmul.f32 %v398, %v418
        %v438 = vmul.f32 %v399, %v418
        %v439 = vmul.f32 %v400, %v418
        %v440 = vmul.f32 %v401, %v418
        %v441 = vmul.f32 %v402, %v418
        %v442 = vmul.f32 %v403, %v418
        %v443 = vmul.f32 %v404, %v418
        %v444 = vmul.f32 %v405, %v418
        %v445 = vmul.f32 %v406, %v418
        %v446 = vmul.f32 %v407, %v418
        %v447 = vmul.f32 %v408, %v418
        %v448 = vmul.f32 %v409, %v418
        %v449 = vmul.f32 %v410, %v418
        %v450 = vmul.f32 %v411, %v418
        %v451 = vmul.f32 %v412, %v418
        %v452 = vld [vmem:[%s2] sm:$0x1]
        %v454 = vlaneseq
        %v455 = vshrl.u32 %v454, 7
        %v456 = vsub.s32 0, %v455
        %v457 = vrot.slane %v452, %v456
        %v459 = vadd.f32 %v420, %v457
        %v460 = vadd.f32 %v421, %v457
        %v461 = vadd.f32 %v422, %v457
        %v462 = vadd.f32 %v423, %v457
        %v463 = vadd.f32 %v424, %v457
        %v464 = vadd.f32 %v425, %v457
        %v465 = vadd.f32 %v426, %v457
        %v466 = vadd.f32 %v427, %v457
        %v467 = vadd.f32 %v428, %v457
        %v468 = vadd.f32 %v429, %v457
        %v469 = vadd.f32 %v430, %v457
        %v470 = vadd.f32 %v431, %v457
        %v471 = vadd.f32 %v432, %v457
        %v472 = vadd.f32 %v433, %v457
        %v473 = vadd.f32 %v434, %v457
        %v474 = vadd.f32 %v435, %v457
        %v475 = vadd.f32 %v436, %v457
        %v476 = vadd.f32 %v437, %v457
        %v477 = vadd.f32 %v438, %v457
        %v478 = vadd.f32 %v439, %v457
        %v479 = vadd.f32 %v440, %v457
        %v480 = vadd.f32 %v441, %v457
        %v481 = vadd.f32 %v442, %v457
        %v482 = vadd.f32 %v443, %v457
        %v483 = vadd.f32 %v444, %v457
        %v484 = vadd.f32 %v445, %v457
        %v485 = vadd.f32 %v446, %v457
        %v486 = vadd.f32 %v447, %v457
        %v487 = vadd.f32 %v448, %v457
        %v488 = vadd.f32 %v449, %v457
        %v489 = vadd.f32 %v450, %v457
        %v490 = vadd.f32 %v451, %v457
        %v491 = vmax.f32 %v459, 0.0
        %v492 = vmax.f32 %v460, 0.0
        %v493 = vmax.f32 %v461, 0.0
        %v494 = vmax.f32 %v462, 0.0
        %v495 = vmax.f32 %v463, 0.0
        %v496 = vmax.f32 %v464, 0.0
        %v497 = vmax.f32 %v465, 0.0
        %v498 = vmax.f32 %v466, 0.0
        %v499 = vmax.f32 %v467, 0.0
        %v500 = vmax.f32 %v468, 0.0
        %v501 = vmax.f32 %v469, 0.0
        %v502 = vmax.f32 %v470, 0.0
        %v503 = vmax.f32 %v471, 0.0
        %v504 = vmax.f32 %v472, 0.0
        %v505 = vmax.f32 %v473, 0.0
        %v506 = vmax.f32 %v474, 0.0
        %v507 = vmax.f32 %v475, 0.0
        %v508 = vmax.f32 %v476, 0.0
        %v509 = vmax.f32 %v477, 0.0
        %v510 = vmax.f32 %v478, 0.0
        %v511 = vmax.f32 %v479, 0.0
        %v512 = vmax.f32 %v480, 0.0
        %v513 = vmax.f32 %v481, 0.0
        %v514 = vmax.f32 %v482, 0.0
        %v515 = vmax.f32 %v483, 0.0
        %v516 = vmax.f32 %v484, 0.0
        %v517 = vmax.f32 %v485, 0.0
        %v518 = vmax.f32 %v486, 0.0
        %v519 = vmax.f32 %v487, 0.0
        %v520 = vmax.f32 %v488, 0.0
        %v521 = vmax.f32 %v489, 0.0
        %v522 = vmax.f32 %v490, 0.0
        %v523 = vpack.c.bf16 %v492, %v491
        %v524 = vpack.c.bf16 %v494, %v493
        %v525 = vpack.c.bf16 %v496, %v495
        %v526 = vpack.c.bf16 %v498, %v497
        %v527 = vpack.c.bf16 %v500, %v499
        %v528 = vpack.c.bf16 %v502, %v501
        %v529 = vpack.c.bf16 %v504, %v503
        %v530 = vpack.c.bf16 %v506, %v505
        %v531 = vpack.c.bf16 %v508, %v507
        %v532 = vpack.c.bf16 %v510, %v509
        %v533 = vpack.c.bf16 %v512, %v511
        %v534 = vpack.c.bf16 %v514, %v513
        %v535 = vpack.c.bf16 %v516, %v515
        %v536 = vpack.c.bf16 %v518, %v517
        %v537 = vpack.c.bf16 %v520, %v519
        %v538 = vpack.c.bf16 %v522, %v521
        %v555 = vunpack.c.l.b16 %v523
        %v556 = vunpack.c.h.b16 %v523
        %v557 = vunpack.c.l.b16 %v524
        %v558 = vunpack.c.h.b16 %v524
        %v559 = vunpack.c.l.b16 %v525
        %v560 = vunpack.c.h.b16 %v525
        %v561 = vunpack.c.l.b16 %v526
        %v562 = vunpack.c.h.b16 %v526
        %v563 = vunpack.c.l.b16 %v527
        %v564 = vunpack.c.h.b16 %v527
        %v565 = vunpack.c.l.b16 %v528
        %v566 = vunpack.c.h.b16 %v528
        %v567 = vunpack.c.l.b16 %v529
        %v568 = vunpack.c.h.b16 %v529
        %v569 = vunpack.c.l.b16 %v530
        %v570 = vunpack.c.h.b16 %v530
        %v571 = vunpack.c.l.b16 %v531
        %v572 = vunpack.c.h.b16 %v531
        %v573 = vunpack.c.l.b16 %v532
        %v574 = vunpack.c.h.b16 %v532
        %v575 = vunpack.c.l.b16 %v533
        %v576 = vunpack.c.h.b16 %v533
        %v577 = vunpack.c.l.b16 %v534
        %v578 = vunpack.c.h.b16 %v534
        %v579 = vunpack.c.l.b16 %v535
        %v580 = vunpack.c.h.b16 %v535
        %v581 = vunpack.c.l.b16 %v536
        %v582 = vunpack.c.h.b16 %v536
        %v583 = vunpack.c.l.b16 %v537
        %v584 = vunpack.c.h.b16 %v537
        %v585 = vunpack.c.l.b16 %v538
        %v586 = vunpack.c.h.b16 %v538
        %v587 = vpack.c.b16 %v555, %v555
        %v588 = vpack.c.b16 %v556, %v556
        %v589 = vpack.c.b16 %v557, %v557
        %v590 = vpack.c.b16 %v558, %v558
        %v591 = vpack.c.b16 %v559, %v559
        %v592 = vpack.c.b16 %v560, %v560
        %v593 = vpack.c.b16 %v561, %v561
        %v594 = vpack.c.b16 %v562, %v562
        %v595 = vpack.c.b16 %v563, %v563
        %v596 = vpack.c.b16 %v564, %v564
        %v597 = vpack.c.b16 %v565, %v565
        %v598 = vpack.c.b16 %v566, %v566
        %v599 = vpack.c.b16 %v567, %v567
        %v600 = vpack.c.b16 %v568, %v568
        %v601 = vpack.c.b16 %v569, %v569
        %v602 = vpack.c.b16 %v570, %v570
        %v603 = vpack.c.b16 %v571, %v571
        %v604 = vpack.c.b16 %v572, %v572
        %v605 = vpack.c.b16 %v573, %v573
        %v606 = vpack.c.b16 %v574, %v574
        %v607 = vpack.c.b16 %v575, %v575
        %v608 = vpack.c.b16 %v576, %v576
        %v609 = vpack.c.b16 %v577, %v577
        %v610 = vpack.c.b16 %v578, %v578
        %v611 = vpack.c.b16 %v579, %v579
        %v612 = vpack.c.b16 %v580, %v580
        %v613 = vpack.c.b16 %v581, %v581
        %v614 = vpack.c.b16 %v582, %v582
        %v615 = vpack.c.b16 %v583, %v583
        %v616 = vpack.c.b16 %v584, %v584
        %v617 = vpack.c.b16 %v585, %v585
        %v618 = vpack.c.b16 %v586, %v586
        %vm619 = vsmask.f32 256
        %vm620 = vsmask.f32 4368
        %vm621 = vmor %vm619, %vm620
        %v623 = vshrl.u32 %v587, 16
        %v625 = vrot.slane %v623, 7
        %v626 = vshll.u32 %v587, 16
        %v628 = vor.u32 %v625, %v626
        %v629 = vrot.slane %v625, 4
        %v631 = vshrl.u32 %v588, 16
        %v633 = vrot.slane %v631, 7
        %v634 = vshll.u32 %v588, 16
        %v636 = vor.u32 %v633, %v634
        %v637 = vsel %vm621, %v629, %v636
        %v638 = vrot.slane %v633, 4
        %v640 = vshrl.u32 %v589, 16
        %v642 = vrot.slane %v640, 7
        %v643 = vshll.u32 %v589, 16
        %v645 = vor.u32 %v642, %v643
        %v646 = vrot.slane %v642, 4
        %v648 = vshrl.u32 %v590, 16
        %v650 = vrot.slane %v648, 7
        %v651 = vshll.u32 %v590, 16
        %v653 = vor.u32 %v650, %v651
        %v654 = vsel %vm621, %v646, %v653
        %v655 = vrot.slane %v650, 4
        %v657 = vshrl.u32 %v591, 16
        %v659 = vrot.slane %v657, 7
        %v660 = vshll.u32 %v591, 16
        %v662 = vor.u32 %v659, %v660
        %v663 = vrot.slane %v659, 4
        %v665 = vshrl.u32 %v592, 16
        %v667 = vrot.slane %v665, 7
        %v668 = vshll.u32 %v592, 16
        %v670 = vor.u32 %v667, %v668
        %v671 = vsel %vm621, %v663, %v670
        %v672 = vrot.slane %v667, 4
        %v674 = vshrl.u32 %v593, 16
        %v676 = vrot.slane %v674, 7
        %v677 = vshll.u32 %v593, 16
        %v679 = vor.u32 %v676, %v677
        %v680 = vrot.slane %v676, 4
        %v682 = vshrl.u32 %v594, 16
        %v684 = vrot.slane %v682, 7
        %v685 = vshll.u32 %v594, 16
        %v687 = vor.u32 %v684, %v685
        %v688 = vsel %vm621, %v680, %v687
        %v689 = vrot.slane %v684, 4
        %v691 = vshrl.u32 %v595, 16
        %v693 = vrot.slane %v691, 7
        %v694 = vshll.u32 %v595, 16
        %v696 = vor.u32 %v693, %v694
        %v697 = vrot.slane %v693, 4
        %v699 = vshrl.u32 %v596, 16
        %v701 = vrot.slane %v699, 7
        %v702 = vshll.u32 %v596, 16
        %v704 = vor.u32 %v701, %v702
        %v705 = vsel %vm621, %v697, %v704
        %v706 = vrot.slane %v701, 4
        %v708 = vshrl.u32 %v597, 16
        %v710 = vrot.slane %v708, 7
        %v711 = vshll.u32 %v597, 16
        %v713 = vor.u32 %v710, %v711
        %v714 = vrot.slane %v710, 4
        %v716 = vshrl.u32 %v598, 16
        %v718 = vrot.slane %v716, 7
        %v719 = vshll.u32 %v598, 16
        %v721 = vor.u32 %v718, %v719
        %v722 = vsel %vm621, %v714, %v721
        %v723 = vrot.slane %v718, 4
        %v725 = vshrl.u32 %v599, 16
        %v727 = vrot.slane %v725, 7
        %v728 = vshll.u32 %v599, 16
        %v730 = vor.u32 %v727, %v728
        %v731 = vrot.slane %v727, 4
        %v733 = vshrl.u32 %v600, 16
        %v735 = vrot.slane %v733, 7
        %v736 = vshll.u32 %v600, 16
        %v738 = vor.u32 %v735, %v736
        %v739 = vsel %vm621, %v731, %v738
        %v740 = vrot.slane %v735, 4
        %v742 = vshrl.u32 %v601, 16
        %v744 = vrot.slane %v742, 7
        %v745 = vshll.u32 %v601, 16
        %v747 = vor.u32 %v744, %v745
        %v748 = vrot.slane %v744, 4
        %v750 = vshrl.u32 %v602, 16
        %v752 = vrot.slane %v750, 7
        %v753 = vshll.u32 %v602, 16
        %v755 = vor.u32 %v752, %v753
        %v756 = vsel %vm621, %v748, %v755
        %v757 = vrot.slane %v752, 4
        %v759 = vshrl.u32 %v603, 16
        %v761 = vrot.slane %v759, 7
        %v762 = vshll.u32 %v603, 16
        %v764 = vor.u32 %v761, %v762
        %v765 = vrot.slane %v761, 4
        %v767 = vshrl.u32 %v604, 16
        %v769 = vrot.slane %v767, 7
        %v770 = vshll.u32 %v604, 16
        %v772 = vor.u32 %v769, %v770
        %v773 = vsel %vm621, %v765, %v772
        %v774 = vrot.slane %v769, 4
        %v776 = vshrl.u32 %v605, 16
        %v778 = vrot.slane %v776, 7
        %v779 = vshll.u32 %v605, 16
        %v781 = vor.u32 %v778, %v779
        %v782 = vrot.slane %v778, 4
        %v784 = vshrl.u32 %v606, 16
        %v786 = vrot.slane %v784, 7
        %v787 = vshll.u32 %v606, 16
        %v789 = vor.u32 %v786, %v787
        %v790 = vsel %vm621, %v782, %v789
        %v791 = vrot.slane %v786, 4
        %v793 = vshrl.u32 %v607, 16
        %v795 = vrot.slane %v793, 7
        %v796 = vshll.u32 %v607, 16
        %v798 = vor.u32 %v795, %v796
        %v799 = vrot.slane %v795, 4
        %v801 = vshrl.u32 %v608, 16
        %v803 = vrot.slane %v801, 7
        %v804 = vshll.u32 %v608, 16
        %v806 = vor.u32 %v803, %v804
        %v807 = vsel %vm621, %v799, %v806
        %v808 = vrot.slane %v803, 4
        %v810 = vshrl.u32 %v609, 16
        %v812 = vrot.slane %v810, 7
        %v813 = vshll.u32 %v609, 16
        %v815 = vor.u32 %v812, %v813
        %v816 = vrot.slane %v812, 4
        %v818 = vshrl.u32 %v610, 16
        %v820 = vrot.slane %v818, 7
        %v821 = vshll.u32 %v610, 16
        %v823 = vor.u32 %v820, %v821
        %v824 = vsel %vm621, %v816, %v823
        %v825 = vrot.slane %v820, 4
        %v827 = vshrl.u32 %v611, 16
        %v829 = vrot.slane %v827, 7
        %v830 = vshll.u32 %v611, 16
        %v832 = vor.u32 %v829, %v830
        %v833 = vrot.slane %v829, 4
        %v835 = vshrl.u32 %v612, 16
        %v837 = vrot.slane %v835, 7
        %v838 = vshll.u32 %v612, 16
        %v840 = vor.u32 %v837, %v838
        %v841 = vsel %vm621, %v833, %v840
        %v842 = vrot.slane %v837, 4
        %v844 = vshrl.u32 %v613, 16
        %v846 = vrot.slane %v844, 7
        %v847 = vshll.u32 %v613, 16
        %v849 = vor.u32 %v846, %v847
        %v850 = vrot.slane %v846, 4
        %v852 = vshrl.u32 %v614, 16
        %v854 = vrot.slane %v852, 7
        %v855 = vshll.u32 %v614, 16
        %v857 = vor.u32 %v854, %v855
        %v858 = vsel %vm621, %v850, %v857
        %v859 = vrot.slane %v854, 4
        %v861 = vshrl.u32 %v615, 16
        %v863 = vrot.slane %v861, 7
        %v864 = vshll.u32 %v615, 16
        %v866 = vor.u32 %v863, %v864
        %v867 = vrot.slane %v863, 4
        %v869 = vshrl.u32 %v616, 16
        %v871 = vrot.slane %v869, 7
        %v872 = vshll.u32 %v616, 16
        %v874 = vor.u32 %v871, %v872
        %v875 = vsel %vm621, %v867, %v874
        %v876 = vrot.slane %v871, 4
        %v878 = vshrl.u32 %v617, 16
        %v880 = vrot.slane %v878, 7
        %v881 = vshll.u32 %v617, 16
        %v883 = vor.u32 %v880, %v881
        %v884 = vrot.slane %v880, 4
        %v886 = vshrl.u32 %v618, 16
        %v888 = vrot.slane %v886, 7
        %v889 = vshll.u32 %v618, 16
        %v891 = vor.u32 %v888, %v889
        %v892 = vsel %vm621, %v884, %v891
        %v893 = vrot.slane %v888, 4
        %s942 = scalar_lea.vmem [#allocation2], 12
        %vm943 = vcmask 1043456
        %vm944 = vsmask.f32 7938
        %vm945 = vmand %vm943, %vm944
        %v946 = vld [vmem:[%s942] sm:$0xf]
        %v947 = vsel %vm945, %v628, %v946
        %948 = vst [vmem:[%s942] sm:$0xf] %v947
        %949 = vst [vmem:[%s942 + $0x4] sm:$0xf] %v637
        %vm950 = vcmask 1040384
        %vm951 = vmand %vm950, %vm619
        %v952 = vld [vmem:[%s942 + $0x8] sm:$0x1]
        %v953 = vsel %vm951, %v638, %v952
        %954 = vst [vmem:[%s942 + $0x8] sm:$0x1] %v953
        %v955 = vld [vmem:[%s942 + $0xc] sm:$0xf]
        %v956 = vsel %vm945, %v645, %v955
        %957 = vst [vmem:[%s942 + $0xc] sm:$0xf] %v956
        %958 = vst [vmem:[%s942 + $0x10] sm:$0xf] %v654
        %v959 = vld [vmem:[%s942 + $0x14] sm:$0x1]
        %v960 = vsel %vm951, %v655, %v959
        %961 = vst [vmem:[%s942 + $0x14] sm:$0x1] %v960
        %v962 = vld [vmem:[%s942 + $0x18] sm:$0xf]
        %v963 = vsel %vm945, %v662, %v962
        %964 = vst [vmem:[%s942 + $0x18] sm:$0xf] %v963
        %965 = vst [vmem:[%s942 + $0x1c] sm:$0xf] %v671
        %v966 = vld [vmem:[%s942 + $0x20] sm:$0x1]
        %v967 = vsel %vm951, %v672, %v966
        %968 = vst [vmem:[%s942 + $0x20] sm:$0x1] %v967
        %v969 = vld [vmem:[%s942 + $0x24] sm:$0xf]
        %v970 = vsel %vm945, %v679, %v969
        %971 = vst [vmem:[%s942 + $0x24] sm:$0xf] %v970
        %972 = vst [vmem:[%s942 + $0x28] sm:$0xf] %v688
        %v973 = vld [vmem:[%s942 + $0x2c] sm:$0x1]
        %v974 = vsel %vm951, %v689, %v973
        %975 = vst [vmem:[%s942 + $0x2c] sm:$0x1] %v974
        %v976 = vld [vmem:[%s942 + $0x30] sm:$0xf]
        %v977 = vsel %vm945, %v696, %v976
        %978 = vst [vmem:[%s942 + $0x30] sm:$0xf] %v977
        %979 = vst [vmem:[%s942 + $0x34] sm:$0xf] %v705
        %v980 = vld [vmem:[%s942 + $0x38] sm:$0x1]
        %v981 = vsel %vm951, %v706, %v980
        %982 = vst [vmem:[%s942 + $0x38] sm:$0x1] %v981
        %v983 = vld [vmem:[%s942 + $0x3c] sm:$0xf]
        %v984 = vsel %vm945, %v713, %v983
        %985 = vst [vmem:[%s942 + $0x3c] sm:$0xf] %v984
        %986 = vst [vmem:[%s942 + $0x40] sm:$0xf] %v722
        %v987 = vld [vmem:[%s942 + $0x44] sm:$0x1]
        %v988 = vsel %vm951, %v723, %v987
        %989 = vst [vmem:[%s942 + $0x44] sm:$0x1] %v988
        %v990 = vld [vmem:[%s942 + $0x48] sm:$0xf]
        %v991 = vsel %vm945, %v730, %v990
        %992 = vst [vmem:[%s942 + $0x48] sm:$0xf] %v991
        %993 = vst [vmem:[%s942 + $0x4c] sm:$0xf] %v739
        %v994 = vld [vmem:[%s942 + $0x50] sm:$0x1]
        %v995 = vsel %vm951, %v740, %v994
        %996 = vst [vmem:[%s942 + $0x50] sm:$0x1] %v995
        %v997 = vld [vmem:[%s942 + $0x54] sm:$0xf]
        %v998 = vsel %vm945, %v747, %v997
        %999 = vst [vmem:[%s942 + $0x54] sm:$0xf] %v998
        %1000 = vst [vmem:[%s942 + $0x58] sm:$0xf] %v756
        %v1001 = vld [vmem:[%s942 + $0x5c] sm:$0x1]
        %v1002 = vsel %vm951, %v757, %v1001
        %1003 = vst [vmem:[%s942 + $0x5c] sm:$0x1] %v1002
        %v1004 = vld [vmem:[%s942 + $0x60] sm:$0xf]
        %v1005 = vsel %vm945, %v764, %v1004
        %1006 = vst [vmem:[%s942 + $0x60] sm:$0xf] %v1005
        %1007 = vst [vmem:[%s942 + $0x64] sm:$0xf] %v773
        %v1008 = vld [vmem:[%s942 + $0x68] sm:$0x1]
        %v1009 = vsel %vm951, %v774, %v1008
        %1010 = vst [vmem:[%s942 + $0x68] sm:$0x1] %v1009
        %v1011 = vld [vmem:[%s942 + $0x6c] sm:$0xf]
        %v1012 = vsel %vm945, %v781, %v1011
        %1013 = vst [vmem:[%s942 + $0x6c] sm:$0xf] %v1012
        %1014 = vst [vmem:[%s942 + $0x70] sm:$0xf] %v790
        %v1015 = vld [vmem:[%s942 + $0x74] sm:$0x1]
        %v1016 = vsel %vm951, %v791, %v1015
        %1017 = vst [vmem:[%s942 + $0x74] sm:$0x1] %v1016
        %v1018 = vld [vmem:[%s942 + $0x78] sm:$0xf]
        %v1019 = vsel %vm945, %v798, %v1018
        %1020 = vst [vmem:[%s942 + $0x78] sm:$0xf] %v1019
        %1021 = vst [vmem:[%s942 + $0x7c] sm:$0xf] %v807
        %v1022 = vld [vmem:[%s942 + $0x80] sm:$0x1]
        %v1023 = vsel %vm951, %v808, %v1022
        %1024 = vst [vmem:[%s942 + $0x80] sm:$0x1] %v1023
        %v1025 = vld [vmem:[%s942 + $0x84] sm:$0xf]
        %v1026 = vsel %vm945, %v815, %v1025
        %1027 = vst [vmem:[%s942 + $0x84] sm:$0xf] %v1026
        %1028 = vst [vmem:[%s942 + $0x88] sm:$0xf] %v824
        %v1029 = vld [vmem:[%s942 + $0x8c] sm:$0x1]
        %v1030 = vsel %vm951, %v825, %v1029
        %1031 = vst [vmem:[%s942 + $0x8c] sm:$0x1] %v1030
        %v1032 = vld [vmem:[%s942 + $0x90] sm:$0xf]
        %v1033 = vsel %vm945, %v832, %v1032
        %1034 = vst [vmem:[%s942 + $0x90] sm:$0xf] %v1033
        %1035 = vst [vmem:[%s942 + $0x94] sm:$0xf] %v841
        %v1036 = vld [vmem:[%s942 + $0x98] sm:$0x1]
        %v1037 = vsel %vm951, %v842, %v1036
        %1038 = vst [vmem:[%s942 + $0x98] sm:$0x1] %v1037
        %v1039 = vld [vmem:[%s942 + $0x9c] sm:$0xf]
        %v1040 = vsel %vm945, %v849, %v1039
        %1041 = vst [vmem:[%s942 + $0x9c] sm:$0xf] %v1040
        %1042 = vst [vmem:[%s942 + $0xa0] sm:$0xf] %v858
        %v1043 = vld [vmem:[%s942 + $0xa4] sm:$0x1]
        %v1044 = vsel %vm951, %v859, %v1043
        %1045 = vst [vmem:[%s942 + $0xa4] sm:$0x1] %v1044
        %v1046 = vld [vmem:[%s942 + $0xa8] sm:$0xf]
        %v1047 = vsel %vm945, %v866, %v1046
        %1048 = vst [vmem:[%s942 + $0xa8] sm:$0xf] %v1047
        %1049 = vst [vmem:[%s942 + $0xac] sm:$0xf] %v875
        %v1050 = vld [vmem:[%s942 + $0xb0] sm:$0x1]
        %v1051 = vsel %vm951, %v876, %v1050
        %1052 = vst [vmem:[%s942 + $0xb0] sm:$0x1] %v1051
        %v1053 = vld [vmem:[%s942 + $0xb4] sm:$0xf]
        %v1054 = vsel %vm945, %v883, %v1053
        %1055 = vst [vmem:[%s942 + $0xb4] sm:$0xf] %v1054
        %1056 = vst [vmem:[%s942 + $0xb8] sm:$0xf] %v892
        %v1057 = vld [vmem:[%s942 + $0xbc] sm:$0x1]
        %v1058 = vsel %vm951, %v893, %v1057
        %1059 = vst [vmem:[%s942 + $0xbc] sm:$0x1] %v1058
        %v1060 = vld [vmem:[#allocation2] sm:$0xf]
        %v1061 = vld [vmem:[#allocation2 + $0x4] sm:$0xf]
        %v1062 = vld [vmem:[#allocation2 + $0xc] sm:$0xf]
        %v1063 = vld [vmem:[#allocation2 + $0x10] sm:$0xf]
        %v1064 = vld [vmem:[#allocation2 + $0x18] sm:$0xf]
        %v1065 = vld [vmem:[#allocation2 + $0x1c] sm:$0xf]
        %v1066 = vld [vmem:[#allocation2 + $0x24] sm:$0xf]
        %v1067 = vld [vmem:[#allocation2 + $0x28] sm:$0xf]
        %v1068 = vld [vmem:[#allocation2 + $0x30] sm:$0xf]
        %v1069 = vld [vmem:[#allocation2 + $0x34] sm:$0xf]
        %v1070 = vld [vmem:[#allocation2 + $0x3c] sm:$0xf]
        %v1071 = vld [vmem:[#allocation2 + $0x40] sm:$0xf]
        %v1072 = vld [vmem:[#allocation2 + $0x48] sm:$0xf]
        %v1073 = vld [vmem:[#allocation2 + $0x4c] sm:$0xf]
        %v1074 = vld [vmem:[#allocation2 + $0x54] sm:$0xf]
        %v1075 = vld [vmem:[#allocation2 + $0x58] sm:$0xf]
        %v1076 = vld [vmem:[#allocation2 + $0x60] sm:$0xf]
        %v1077 = vld [vmem:[#allocation2 + $0x64] sm:$0xf]
        %v1078 = vld [vmem:[#allocation2 + $0x6c] sm:$0xf]
        %v1079 = vld [vmem:[#allocation2 + $0x70] sm:$0xf]
        %v1080 = vld [vmem:[#allocation2 + $0x78] sm:$0xf]
        %v1081 = vld [vmem:[#allocation2 + $0x7c] sm:$0xf]
        %v1082 = vld [vmem:[#allocation2 + $0x84] sm:$0xf]
        %v1083 = vld [vmem:[#allocation2 + $0x88] sm:$0xf]
        %v1084 = vld [vmem:[#allocation2 + $0x90] sm:$0xf]
        %v1085 = vld [vmem:[#allocation2 + $0x94] sm:$0xf]
        %v1086 = vld [vmem:[#allocation2 + $0x9c] sm:$0xf]
        %v1087 = vld [vmem:[#allocation2 + $0xa0] sm:$0xf]
        %v1088 = vld [vmem:[#allocation2 + $0xa8] sm:$0xf]
        %v1089 = vld [vmem:[#allocation2 + $0xac] sm:$0xf]
        %v1090 = vld [vmem:[#allocation2 + $0xb4] sm:$0xf]
        %v1091 = vld [vmem:[#allocation2 + $0xb8] sm:$0xf]
        %v1092 = vld [vmem:[#allocation2 + $0x8] sm:$0x1]
        %v1093 = vld [vmem:[#allocation2 + $0x14] sm:$0x1]
        %v1094 = vld [vmem:[#allocation2 + $0x20] sm:$0x1]
        %v1095 = vld [vmem:[#allocation2 + $0x2c] sm:$0x1]
        %v1096 = vld [vmem:[#allocation2 + $0x38] sm:$0x1]
        %v1097 = vld [vmem:[#allocation2 + $0x44] sm:$0x1]
        %v1098 = vld [vmem:[#allocation2 + $0x50] sm:$0x1]
        %v1099 = vld [vmem:[#allocation2 + $0x5c] sm:$0x1]
        %v1100 = vld [vmem:[#allocation2 + $0x68] sm:$0x1]
        %v1101 = vld [vmem:[#allocation2 + $0x74] sm:$0x1]
        %v1102 = vld [vmem:[#allocation2 + $0x80] sm:$0x1]
        %v1103 = vld [vmem:[#allocation2 + $0x8c] sm:$0x1]
        %v1104 = vld [vmem:[#allocation2 + $0x98] sm:$0x1]
        %v1105 = vld [vmem:[#allocation2 + $0xa4] sm:$0x1]
        %v1106 = vld [vmem:[#allocation2 + $0xb0] sm:$0x1]
        %v1107 = vld [vmem:[#allocation2 + $0xbc] sm:$0x1]
        %v1108 = vld [vmem:[#allocation2] sm:$0xe]
        %v1109 = vld [vmem:[#allocation2 + $0xc] sm:$0xe]
        %v1110 = vld [vmem:[#allocation2 + $0x18] sm:$0xe]
        %v1111 = vld [vmem:[#allocation2 + $0x24] sm:$0xe]
        %v1112 = vld [vmem:[#allocation2 + $0x30] sm:$0xe]
        %v1113 = vld [vmem:[#allocation2 + $0x3c] sm:$0xe]
        %v1114 = vld [vmem:[#allocation2 + $0x48] sm:$0xe]
        %v1115 = vld [vmem:[#allocation2 + $0x54] sm:$0xe]
        %v1116 = vld [vmem:[#allocation2 + $0x60] sm:$0xe]
        %v1117 = vld [vmem:[#allocation2 + $0x6c] sm:$0xe]
        %v1118 = vld [vmem:[#allocation2 + $0x78] sm:$0xe]
        %v1119 = vld [vmem:[#allocation2 + $0x84] sm:$0xe]
        %v1120 = vld [vmem:[#allocation2 + $0x90] sm:$0xe]
        %v1121 = vld [vmem:[#allocation2 + $0x9c] sm:$0xe]
        %v1122 = vld [vmem:[#allocation2 + $0xa8] sm:$0xe]
        %v1123 = vld [vmem:[#allocation2 + $0xb4] sm:$0xe]
        %v1124 = vld [vmem:[%s942] sm:$0xf]
        %v1125 = vld [vmem:[%s942 + $0x4] sm:$0xf]
        %v1126 = vld [vmem:[%s942 + $0xc] sm:$0xf]
        %v1127 = vld [vmem:[%s942 + $0x10] sm:$0xf]
        %v1128 = vld [vmem:[%s942 + $0x18] sm:$0xf]
        %v1129 = vld [vmem:[%s942 + $0x1c] sm:$0xf]
        %v1130 = vld [vmem:[%s942 + $0x24] sm:$0xf]
        %v1131 = vld [vmem:[%s942 + $0x28] sm:$0xf]
        %v1132 = vld [vmem:[%s942 + $0x30] sm:$0xf]
        %v1133 = vld [vmem:[%s942 + $0x34] sm:$0xf]
        %v1134 = vld [vmem:[%s942 + $0x3c] sm:$0xf]
        %v1135 = vld [vmem:[%s942 + $0x40] sm:$0xf]
        %v1136 = vld [vmem:[%s942 + $0x48] sm:$0xf]
        %v1137 = vld [vmem:[%s942 + $0x4c] sm:$0xf]
        %v1138 = vld [vmem:[%s942 + $0x54] sm:$0xf]
        %v1139 = vld [vmem:[%s942 + $0x58] sm:$0xf]
        %v1140 = vld [vmem:[%s942 + $0x60] sm:$0xf]
        %v1141 = vld [vmem:[%s942 + $0x64] sm:$0xf]
        %v1142 = vld [vmem:[%s942 + $0x6c] sm:$0xf]
        %v1143 = vld [vmem:[%s942 + $0x70] sm:$0xf]
        %v1144 = vld [vmem:[%s942 + $0x78] sm:$0xf]
        %v1145 = vld [vmem:[%s942 + $0x7c] sm:$0xf]
        %v1146 = vld [vmem:[%s942 + $0x84] sm:$0xf]
        %v1147 = vld [vmem:[%s942 + $0x88] sm:$0xf]
        %v1148 = vld [vmem:[%s942 + $0x90] sm:$0xf]
        %v1149 = vld [vmem:[%s942 + $0x94] sm:$0xf]
        %v1150 = vld [vmem:[%s942 + $0x9c] sm:$0xf]
        %v1151 = vld [vmem:[%s942 + $0xa0] sm:$0xf]
        %v1152 = vld [vmem:[%s942 + $0xa8] sm:$0xf]
        %v1153 = vld [vmem:[%s942 + $0xac] sm:$0xf]
        %v1154 = vld [vmem:[%s942 + $0xb4] sm:$0xf]
        %v1155 = vld [vmem:[%s942 + $0xb8] sm:$0xf]
        %v1156 = vld [vmem:[%s942 + $0x8] sm:$0x1]
        %v1157 = vld [vmem:[%s942 + $0x14] sm:$0x1]
        %v1158 = vld [vmem:[%s942 + $0x20] sm:$0x1]
        %v1159 = vld [vmem:[%s942 + $0x2c] sm:$0x1]
        %v1160 = vld [vmem:[%s942 + $0x38] sm:$0x1]
        %v1161 = vld [vmem:[%s942 + $0x44] sm:$0x1]
        %v1162 = vld [vmem:[%s942 + $0x50] sm:$0x1]
        %v1163 = vld [vmem:[%s942 + $0x5c] sm:$0x1]
        %v1164 = vld [vmem:[%s942 + $0x68] sm:$0x1]
        %v1165 = vld [vmem:[%s942 + $0x74] sm:$0x1]
        %v1166 = vld [vmem:[%s942 + $0x80] sm:$0x1]
        %v1167 = vld [vmem:[%s942 + $0x8c] sm:$0x1]
        %v1168 = vld [vmem:[%s942 + $0x98] sm:$0x1]
        %v1169 = vld [vmem:[%s942 + $0xa4] sm:$0x1]
        %v1170 = vld [vmem:[%s942 + $0xb0] sm:$0x1]
        %v1171 = vld [vmem:[%s942 + $0xbc] sm:$0x1]
        %v1172 = vld [vmem:[%s942] sm:$0xe]
        %v1173 = vld [vmem:[%s942 + $0xc] sm:$0xe]
        %v1174 = vld [vmem:[%s942 + $0x18] sm:$0xe]
        %v1175 = vld [vmem:[%s942 + $0x24] sm:$0xe]
        %v1176 = vld [vmem:[%s942 + $0x30] sm:$0xe]
        %v1177 = vld [vmem:[%s942 + $0x3c] sm:$0xe]
        %v1178 = vld [vmem:[%s942 + $0x48] sm:$0xe]
        %v1179 = vld [vmem:[%s942 + $0x54] sm:$0xe]
        %v1180 = vld [vmem:[%s942 + $0x60] sm:$0xe]
        %v1181 = vld [vmem:[%s942 + $0x6c] sm:$0xe]
        %v1182 = vld [vmem:[%s942 + $0x78] sm:$0xe]
        %v1183 = vld [vmem:[%s942 + $0x84] sm:$0xe]
        %v1184 = vld [vmem:[%s942 + $0x90] sm:$0xe]
        %v1185 = vld [vmem:[%s942 + $0x9c] sm:$0xe]
        %v1186 = vld [vmem:[%s942 + $0xa8] sm:$0xe]
        %v1187 = vld [vmem:[%s942 + $0xb4] sm:$0xe]
        %s1188 = scalar_lea.vmem [#allocation2], 24
        %v1189 = vld [vmem:[%s1188] sm:$0xf]
        %v1190 = vld [vmem:[%s1188 + $0x4] sm:$0xf]
        %v1191 = vld [vmem:[%s1188 + $0xc] sm:$0xf]
        %v1192 = vld [vmem:[%s1188 + $0x10] sm:$0xf]
        %v1193 = vld [vmem:[%s1188 + $0x18] sm:$0xf]
        %v1194 = vld [vmem:[%s1188 + $0x1c] sm:$0xf]
        %v1195 = vld [vmem:[%s1188 + $0x24] sm:$0xf]
        %v1196 = vld [vmem:[%s1188 + $0x28] sm:$0xf]
        %v1197 = vld [vmem:[%s1188 + $0x30] sm:$0xf]
        %v1198 = vld [vmem:[%s1188 + $0x34] sm:$0xf]
        %v1199 = vld [vmem:[%s1188 + $0x3c] sm:$0xf]
        %v1200 = vld [vmem:[%s1188 + $0x40] sm:$0xf]
        %v1201 = vld [vmem:[%s1188 + $0x48] sm:$0xf]
        %v1202 = vld [vmem:[%s1188 + $0x4c] sm:$0xf]
        %v1203 = vld [vmem:[%s1188 + $0x54] sm:$0xf]
        %v1204 = vld [vmem:[%s1188 + $0x58] sm:$0xf]
        %v1205 = vld [vmem:[%s1188 + $0x60] sm:$0xf]
        %v1206 = vld [vmem:[%s1188 + $0x64] sm:$0xf]
        %v1207 = vld [vmem:[%s1188 + $0x6c] sm:$0xf]
        %v1208 = vld [vmem:[%s1188 + $0x70] sm:$0xf]
        %v1209 = vld [vmem:[%s1188 + $0x78] sm:$0xf]
        %v1210 = vld [vmem:[%s1188 + $0x7c] sm:$0xf]
        %v1211 = vld [vmem:[%s1188 + $0x84] sm:$0xf]
        %v1212 = vld [vmem:[%s1188 + $0x88] sm:$0xf]
        %v1213 = vld [vmem:[%s1188 + $0x90] sm:$0xf]
        %v1214 = vld [vmem:[%s1188 + $0x94] sm:$0xf]
        %v1215 = vld [vmem:[%s1188 + $0x9c] sm:$0xf]
        %v1216 = vld [vmem:[%s1188 + $0xa0] sm:$0xf]
        %v1217 = vld [vmem:[%s1188 + $0xa8] sm:$0xf]
        %v1218 = vld [vmem:[%s1188 + $0xac] sm:$0xf]
        %v1219 = vld [vmem:[%s1188 + $0xb4] sm:$0xf]
        %v1220 = vld [vmem:[%s1188 + $0xb8] sm:$0xf]
        %v1221 = vld [vmem:[%s1188 + $0x8] sm:$0x1]
        %v1222 = vld [vmem:[%s1188 + $0x14] sm:$0x1]
        %v1223 = vld [vmem:[%s1188 + $0x20] sm:$0x1]
        %v1224 = vld [vmem:[%s1188 + $0x2c] sm:$0x1]
        %v1225 = vld [vmem:[%s1188 + $0x38] sm:$0x1]
        %v1226 = vld [vmem:[%s1188 + $0x44] sm:$0x1]
        %v1227 = vld [vmem:[%s1188 + $0x50] sm:$0x1]
        %v1228 = vld [vmem:[%s1188 + $0x5c] sm:$0x1]
        %v1229 = vld [vmem:[%s1188 + $0x68] sm:$0x1]
        %v1230 = vld [vmem:[%s1188 + $0x74] sm:$0x1]
        %v1231 = vld [vmem:[%s1188 + $0x80] sm:$0x1]
        %v1232 = vld [vmem:[%s1188 + $0x8c] sm:$0x1]
        %v1233 = vld [vmem:[%s1188 + $0x98] sm:$0x1]
        %v1234 = vld [vmem:[%s1188 + $0xa4] sm:$0x1]
        %v1235 = vld [vmem:[%s1188 + $0xb0] sm:$0x1]
        %v1236 = vld [vmem:[%s1188 + $0xbc] sm:$0x1]
        %v1237 = vld [vmem:[%s1188] sm:$0xe]
        %v1238 = vld [vmem:[%s1188 + $0xc] sm:$0xe]
        %v1239 = vld [vmem:[%s1188 + $0x18] sm:$0xe]
        %v1240 = vld [vmem:[%s1188 + $0x24] sm:$0xe]
        %v1241 = vld [vmem:[%s1188 + $0x30] sm:$0xe]
        %v1242 = vld [vmem:[%s1188 + $0x3c] sm:$0xe]
        %v1243 = vld [vmem:[%s1188 + $0x48] sm:$0xe]
        %v1244 = vld [vmem:[%s1188 + $0x54] sm:$0xe]
        %v1245 = vld [vmem:[%s1188 + $0x60] sm:$0xe]
        %v1246 = vld [vmem:[%s1188 + $0x6c] sm:$0xe]
        %v1247 = vld [vmem:[%s1188 + $0x78] sm:$0xe]
        %v1248 = vld [vmem:[%s1188 + $0x84] sm:$0xe]
        %v1249 = vld [vmem:[%s1188 + $0x90] sm:$0xe]
        %v1250 = vld [vmem:[%s1188 + $0x9c] sm:$0xe]
        %v1251 = vld [vmem:[%s1188 + $0xa8] sm:$0xe]
        %v1252 = vld [vmem:[%s1188 + $0xb4] sm:$0xe]
        %v1285 = vunpack.c.l.b16 %v1060
        %v1286 = vunpack.c.l.b16 %v1061
        %v1287 = vunpack.c.l.b16 %v1062
        %v1288 = vunpack.c.l.b16 %v1063
        %v1289 = vunpack.c.l.b16 %v1064
        %v1290 = vunpack.c.l.b16 %v1065
        %v1291 = vunpack.c.l.b16 %v1066
        %v1292 = vunpack.c.l.b16 %v1067
        %v1293 = vunpack.c.l.b16 %v1068
        %v1294 = vunpack.c.l.b16 %v1069
        %v1295 = vunpack.c.l.b16 %v1070
        %v1296 = vunpack.c.l.b16 %v1071
        %v1297 = vunpack.c.l.b16 %v1072
        %v1298 = vunpack.c.l.b16 %v1073
        %v1299 = vunpack.c.l.b16 %v1074
        %v1300 = vunpack.c.l.b16 %v1075
        %v1301 = vunpack.c.l.b16 %v1076
        %v1302 = vunpack.c.l.b16 %v1077
        %v1303 = vunpack.c.l.b16 %v1078
        %v1304 = vunpack.c.l.b16 %v1079
        %v1305 = vunpack.c.l.b16 %v1080
        %v1306 = vunpack.c.l.b16 %v1081
        %v1307 = vunpack.c.l.b16 %v1082
        %v1308 = vunpack.c.l.b16 %v1083
        %v1309 = vunpack.c.l.b16 %v1084
        %v1310 = vunpack.c.l.b16 %v1085
        %v1311 = vunpack.c.l.b16 %v1086
        %v1312 = vunpack.c.l.b16 %v1087
        %v1313 = vunpack.c.l.b16 %v1088
        %v1314 = vunpack.c.l.b16 %v1089
        %v1315 = vunpack.c.l.b16 %v1090
        %v1316 = vunpack.c.l.b16 %v1091
        %v1317 = vpack.c.b16 %v1286, %v1285
        %v1318 = vpack.c.b16 %v1288, %v1287
        %v1319 = vpack.c.b16 %v1290, %v1289
        %v1320 = vpack.c.b16 %v1292, %v1291
        %v1321 = vpack.c.b16 %v1294, %v1293
        %v1322 = vpack.c.b16 %v1296, %v1295
        %v1323 = vpack.c.b16 %v1298, %v1297
        %v1324 = vpack.c.b16 %v1300, %v1299
        %v1325 = vpack.c.b16 %v1302, %v1301
        %v1326 = vpack.c.b16 %v1304, %v1303
        %v1327 = vpack.c.b16 %v1306, %v1305
        %v1328 = vpack.c.b16 %v1308, %v1307
        %v1329 = vpack.c.b16 %v1310, %v1309
        %v1330 = vpack.c.b16 %v1312, %v1311
        %v1331 = vpack.c.b16 %v1314, %v1313
        %v1332 = vpack.c.b16 %v1316, %v1315
        %v1365 = vunpack.c.l.b16 %v1092
        %v1366 = vunpack.c.l.b16 %v1093
        %v1367 = vunpack.c.l.b16 %v1094
        %v1368 = vunpack.c.l.b16 %v1095
        %v1369 = vunpack.c.l.b16 %v1096
        %v1370 = vunpack.c.l.b16 %v1097
        %v1371 = vunpack.c.l.b16 %v1098
        %v1372 = vunpack.c.l.b16 %v1099
        %v1373 = vunpack.c.l.b16 %v1100
        %v1374 = vunpack.c.l.b16 %v1101
        %v1375 = vunpack.c.l.b16 %v1102
        %v1376 = vunpack.c.l.b16 %v1103
        %v1377 = vunpack.c.l.b16 %v1104
        %v1378 = vunpack.c.l.b16 %v1105
        %v1379 = vunpack.c.l.b16 %v1106
        %v1380 = vunpack.c.l.b16 %v1107
        %v1381 = vpack.c.b16 %v1365, %v1365
        %v1382 = vpack.c.b16 %v1366, %v1366
        %v1383 = vpack.c.b16 %v1367, %v1367
        %v1384 = vpack.c.b16 %v1368, %v1368
        %v1385 = vpack.c.b16 %v1369, %v1369
        %v1386 = vpack.c.b16 %v1370, %v1370
        %v1387 = vpack.c.b16 %v1371, %v1371
        %v1388 = vpack.c.b16 %v1372, %v1372
        %v1389 = vpack.c.b16 %v1373, %v1373
        %v1390 = vpack.c.b16 %v1374, %v1374
        %v1391 = vpack.c.b16 %v1375, %v1375
        %v1392 = vpack.c.b16 %v1376, %v1376
        %v1393 = vpack.c.b16 %v1377, %v1377
        %v1394 = vpack.c.b16 %v1378, %v1378
        %v1395 = vpack.c.b16 %v1379, %v1379
        %v1396 = vpack.c.b16 %v1380, %v1380
        %vm1397 = vsmask.f32 7424
        %v1399 = vshrl.u32 %v1317, 16
        %v1401 = vshll.u32 %v1317, 16
        %v1403 = vrot.slane %v1401, 1
        %v1404 = vor.u32 %v1399, %v1403
        %v1406 = vshll.u32 %v1381, 16
        %v1408 = vrot.slane %v1406, 1
        %v1409 = vsel %vm1397, %v1404, %v1408
        %v1411 = vshrl.u32 %v1318, 16
        %v1413 = vshll.u32 %v1318, 16
        %v1415 = vrot.slane %v1413, 1
        %v1416 = vor.u32 %v1411, %v1415
        %v1418 = vshll.u32 %v1382, 16
        %v1420 = vrot.slane %v1418, 1
        %v1421 = vsel %vm1397, %v1416, %v1420
        %v1423 = vshrl.u32 %v1319, 16
        %v1425 = vshll.u32 %v1319, 16
        %v1427 = vrot.slane %v1425, 1
        %v1428 = vor.u32 %v1423, %v1427
        %v1430 = vshll.u32 %v1383, 16
        %v1432 = vrot.slane %v1430, 1
        %v1433 = vsel %vm1397, %v1428, %v1432
        %v1435 = vshrl.u32 %v1320, 16
        %v1437 = vshll.u32 %v1320, 16
        %v1439 = vrot.slane %v1437, 1
        %v1440 = vor.u32 %v1435, %v1439
        %v1442 = vshll.u32 %v1384, 16
        %v1444 = vrot.slane %v1442, 1
        %v1445 = vsel %vm1397, %v1440, %v1444
        %v1447 = vshrl.u32 %v1321, 16
        %v1449 = vshll.u32 %v1321, 16
        %v1451 = vrot.slane %v1449, 1
        %v1452 = vor.u32 %v1447, %v1451
        %v1454 = vshll.u32 %v1385, 16
        %v1456 = vrot.slane %v1454, 1
        %v1457 = vsel %vm1397, %v1452, %v1456
        %v1459 = vshrl.u32 %v1322, 16
        %v1461 = vshll.u32 %v1322, 16
        %v1463 = vrot.slane %v1461, 1
        %v1464 = vor.u32 %v1459, %v1463
        %v1466 = vshll.u32 %v1386, 16
        %v1468 = vrot.slane %v1466, 1
        %v1469 = vsel %vm1397, %v1464, %v1468
        %v1471 = vshrl.u32 %v1323, 16
        %v1473 = vshll.u32 %v1323, 16
        %v1475 = vrot.slane %v1473, 1
        %v1476 = vor.u32 %v1471, %v1475
        %v1478 = vshll.u32 %v1387, 16
        %v1480 = vrot.slane %v1478, 1
        %v1481 = vsel %vm1397, %v1476, %v1480
        %v1483 = vshrl.u32 %v1324, 16
        %v1485 = vshll.u32 %v1324, 16
        %v1487 = vrot.slane %v1485, 1
        %v1488 = vor.u32 %v1483, %v1487
        %v1490 = vshll.u32 %v1388, 16
        %v1492 = vrot.slane %v1490, 1
        %v1493 = vsel %vm1397, %v1488, %v1492
        %v1495 = vshrl.u32 %v1325, 16
        %v1497 = vshll.u32 %v1325, 16
        %v1499 = vrot.slane %v1497, 1
        %v1500 = vor.u32 %v1495, %v1499
        %v1502 = vshll.u32 %v1389, 16
        %v1504 = vrot.slane %v1502, 1
        %v1505 = vsel %vm1397, %v1500, %v1504
        %v1507 = vshrl.u32 %v1326, 16
        %v1509 = vshll.u32 %v1326, 16
        %v1511 = vrot.slane %v1509, 1
        %v1512 = vor.u32 %v1507, %v1511
        %v1514 = vshll.u32 %v1390, 16
        %v1516 = vrot.slane %v1514, 1
        %v1517 = vsel %vm1397, %v1512, %v1516
        %v1519 = vshrl.u32 %v1327, 16
        %v1521 = vshll.u32 %v1327, 16
        %v1523 = vrot.slane %v1521, 1
        %v1524 = vor.u32 %v1519, %v1523
        %v1526 = vshll.u32 %v1391, 16
        %v1528 = vrot.slane %v1526, 1
        %v1529 = vsel %vm1397, %v1524, %v1528
        %v1531 = vshrl.u32 %v1328, 16
        %v1533 = vshll.u32 %v1328, 16
        %v1535 = vrot.slane %v1533, 1
        %v1536 = vor.u32 %v1531, %v1535
        %v1538 = vshll.u32 %v1392, 16
        %v1540 = vrot.slane %v1538, 1
        %v1541 = vsel %vm1397, %v1536, %v1540
        %v1543 = vshrl.u32 %v1329, 16
        %v1545 = vshll.u32 %v1329, 16
        %v1547 = vrot.slane %v1545, 1
        %v1548 = vor.u32 %v1543, %v1547
        %v1550 = vshll.u32 %v1393, 16
        %v1552 = vrot.slane %v1550, 1
        %v1553 = vsel %vm1397, %v1548, %v1552
        %v1555 = vshrl.u32 %v1330, 16
        %v1557 = vshll.u32 %v1330, 16
        %v1559 = vrot.slane %v1557, 1
        %v1560 = vor.u32 %v1555, %v1559
        %v1562 = vshll.u32 %v1394, 16
        %v1564 = vrot.slane %v1562, 1
        %v1565 = vsel %vm1397, %v1560, %v1564
        %v1567 = vshrl.u32 %v1331, 16
        %v1569 = vshll.u32 %v1331, 16
        %v1571 = vrot.slane %v1569, 1
        %v1572 = vor.u32 %v1567, %v1571
        %v1574 = vshll.u32 %v1395, 16
        %v1576 = vrot.slane %v1574, 1
        %v1577 = vsel %vm1397, %v1572, %v1576
        %v1579 = vshrl.u32 %v1332, 16
        %v1581 = vshll.u32 %v1332, 16
        %v1583 = vrot.slane %v1581, 1
        %v1584 = vor.u32 %v1579, %v1583
        %v1586 = vshll.u32 %v1396, 16
        %v1588 = vrot.slane %v1586, 1
        %v1589 = vsel %vm1397, %v1584, %v1588
        %v1622 = vunpack.c.l.b16 %v1108
        %v1623 = vunpack.c.l.b16 %v1109
        %v1624 = vunpack.c.l.b16 %v1110
        %v1625 = vunpack.c.l.b16 %v1111
        %v1626 = vunpack.c.l.b16 %v1112
        %v1627 = vunpack.c.l.b16 %v1113
        %v1628 = vunpack.c.l.b16 %v1114
        %v1629 = vunpack.c.l.b16 %v1115
        %v1630 = vunpack.c.l.b16 %v1116
        %v1631 = vunpack.c.l.b16 %v1117
        %v1632 = vunpack.c.l.b16 %v1118
        %v1633 = vunpack.c.l.b16 %v1119
        %v1634 = vunpack.c.l.b16 %v1120
        %v1635 = vunpack.c.l.b16 %v1121
        %v1636 = vunpack.c.l.b16 %v1122
        %v1637 = vunpack.c.l.b16 %v1123
        %v1638 = vpack.c.b16 %v1286, %v1622
        %v1639 = vpack.c.b16 %v1288, %v1623
        %v1640 = vpack.c.b16 %v1290, %v1624
        %v1641 = vpack.c.b16 %v1292, %v1625
        %v1642 = vpack.c.b16 %v1294, %v1626
        %v1643 = vpack.c.b16 %v1296, %v1627
        %v1644 = vpack.c.b16 %v1298, %v1628
        %v1645 = vpack.c.b16 %v1300, %v1629
        %v1646 = vpack.c.b16 %v1302, %v1630
        %v1647 = vpack.c.b16 %v1304, %v1631
        %v1648 = vpack.c.b16 %v1306, %v1632
        %v1649 = vpack.c.b16 %v1308, %v1633
        %v1650 = vpack.c.b16 %v1310, %v1634
        %v1651 = vpack.c.b16 %v1312, %v1635
        %v1652 = vpack.c.b16 %v1314, %v1636
        %v1653 = vpack.c.b16 %v1316, %v1637
        %vm1654 = vcmask 1046528
        %v1655 = vrot.slane %v1638, 1
        %v1656 = vrot.slane %v1381, 1
        %v1657 = vsel %vm1654, %v1655, %v1656
        %v1658 = vrot.slane %v1639, 1
        %v1659 = vrot.slane %v1382, 1
        %v1660 = vsel %vm1654, %v1658, %v1659
        %v1661 = vrot.slane %v1640, 1
        %v1662 = vrot.slane %v1383, 1
        %v1663 = vsel %vm1654, %v1661, %v1662
        %v1664 = vrot.slane %v1641, 1
        %v1665 = vrot.slane %v1384, 1
        %v1666 = vsel %vm1654, %v1664, %v1665
        %v1667 = vrot.slane %v1642, 1
        %v1668 = vrot.slane %v1385, 1
        %v1669 = vsel %vm1654, %v1667, %v1668
        %v1670 = vrot.slane %v1643, 1
        %v1671 = vrot.slane %v1386, 1
        %v1672 = vsel %vm1654, %v1670, %v1671
        %v1673 = vrot.slane %v1644, 1
        %v1674 = vrot.slane %v1387, 1
        %v1675 = vsel %vm1654, %v1673, %v1674
        %v1676 = vrot.slane %v1645, 1
        %v1677 = vrot.slane %v1388, 1
        %v1678 = vsel %vm1654, %v1676, %v1677
        %v1679 = vrot.slane %v1646, 1
        %v1680 = vrot.slane %v1389, 1
        %v1681 = vsel %vm1654, %v1679, %v1680
        %v1682 = vrot.slane %v1647, 1
        %v1683 = vrot.slane %v1390, 1
        %v1684 = vsel %vm1654, %v1682, %v1683
        %v1685 = vrot.slane %v1648, 1
        %v1686 = vrot.slane %v1391, 1
        %v1687 = vsel %vm1654, %v1685, %v1686
        %v1688 = vrot.slane %v1649, 1
        %v1689 = vrot.slane %v1392, 1
        %v1690 = vsel %vm1654, %v1688, %v1689
        %v1691 = vrot.slane %v1650, 1
        %v1692 = vrot.slane %v1393, 1
        %v1693 = vsel %vm1654, %v1691, %v1692
        %v1694 = vrot.slane %v1651, 1
        %v1695 = vrot.slane %v1394, 1
        %v1696 = vsel %vm1654, %v1694, %v1695
        %v1697 = vrot.slane %v1652, 1
        %v1698 = vrot.slane %v1395, 1
        %v1699 = vsel %vm1654, %v1697, %v1698
        %v1700 = vrot.slane %v1653, 1
        %v1701 = vrot.slane %v1396, 1
        %v1702 = vsel %vm1654, %v1700, %v1701
        %v1751 = vunpack.c.l.b16 %v1124
        %v1752 = vunpack.c.l.b16 %v1125
        %v1753 = vunpack.c.l.b16 %v1126
        %v1754 = vunpack.c.l.b16 %v1127
        %v1755 = vunpack.c.l.b16 %v1128
        %v1756 = vunpack.c.l.b16 %v1129
        %v1757 = vunpack.c.l.b16 %v1130
        %v1758 = vunpack.c.l.b16 %v1131
        %v1759 = vunpack.c.l.b16 %v1132
        %v1760 = vunpack.c.l.b16 %v1133
        %v1761 = vunpack.c.l.b16 %v1134
        %v1762 = vunpack.c.l.b16 %v1135
        %v1763 = vunpack.c.l.b16 %v1136
        %v1764 = vunpack.c.l.b16 %v1137
        %v1765 = vunpack.c.l.b16 %v1138
        %v1766 = vunpack.c.l.b16 %v1139
        %v1767 = vunpack.c.l.b16 %v1140
        %v1768 = vunpack.c.l.b16 %v1141
        %v1769 = vunpack.c.l.b16 %v1142
        %v1770 = vunpack.c.l.b16 %v1143
        %v1771 = vunpack.c.l.b16 %v1144
        %v1772 = vunpack.c.l.b16 %v1145
        %v1773 = vunpack.c.l.b16 %v1146
        %v1774 = vunpack.c.l.b16 %v1147
        %v1775 = vunpack.c.l.b16 %v1148
        %v1776 = vunpack.c.l.b16 %v1149
        %v1777 = vunpack.c.l.b16 %v1150
        %v1778 = vunpack.c.l.b16 %v1151
        %v1779 = vunpack.c.l.b16 %v1152
        %v1780 = vunpack.c.l.b16 %v1153
        %v1781 = vunpack.c.l.b16 %v1154
        %v1782 = vunpack.c.l.b16 %v1155
        %v1783 = vpack.c.b16 %v1752, %v1751
        %v1784 = vpack.c.b16 %v1754, %v1753
        %v1785 = vpack.c.b16 %v1756, %v1755
        %v1786 = vpack.c.b16 %v1758, %v1757
        %v1787 = vpack.c.b16 %v1760, %v1759
        %v1788 = vpack.c.b16 %v1762, %v1761
        %v1789 = vpack.c.b16 %v1764, %v1763
        %v1790 = vpack.c.b16 %v1766, %v1765
        %v1791 = vpack.c.b16 %v1768, %v1767
        %v1792 = vpack.c.b16 %v1770, %v1769
        %v1793 = vpack.c.b16 %v1772, %v1771
        %v1794 = vpack.c.b16 %v1774, %v1773
        %v1795 = vpack.c.b16 %v1776, %v1775
        %v1796 = vpack.c.b16 %v1778, %v1777
        %v1797 = vpack.c.b16 %v1780, %v1779
        %v1798 = vpack.c.b16 %v1782, %v1781
        %v1831 = vunpack.c.l.b16 %v1156
        %v1832 = vunpack.c.l.b16 %v1157
        %v1833 = vunpack.c.l.b16 %v1158
        %v1834 = vunpack.c.l.b16 %v1159
        %v1835 = vunpack.c.l.b16 %v1160
        %v1836 = vunpack.c.l.b16 %v1161
        %v1837 = vunpack.c.l.b16 %v1162
        %v1838 = vunpack.c.l.b16 %v1163
        %v1839 = vunpack.c.l.b16 %v1164
        %v1840 = vunpack.c.l.b16 %v1165
        %v1841 = vunpack.c.l.b16 %v1166
        %v1842 = vunpack.c.l.b16 %v1167
        %v1843 = vunpack.c.l.b16 %v1168
        %v1844 = vunpack.c.l.b16 %v1169
        %v1845 = vunpack.c.l.b16 %v1170
        %v1846 = vunpack.c.l.b16 %v1171
        %v1847 = vpack.c.b16 %v1831, %v1831
        %v1848 = vpack.c.b16 %v1832, %v1832
        %v1849 = vpack.c.b16 %v1833, %v1833
        %v1850 = vpack.c.b16 %v1834, %v1834
        %v1851 = vpack.c.b16 %v1835, %v1835
        %v1852 = vpack.c.b16 %v1836, %v1836
        %v1853 = vpack.c.b16 %v1837, %v1837
        %v1854 = vpack.c.b16 %v1838, %v1838
        %v1855 = vpack.c.b16 %v1839, %v1839
        %v1856 = vpack.c.b16 %v1840, %v1840
        %v1857 = vpack.c.b16 %v1841, %v1841
        %v1858 = vpack.c.b16 %v1842, %v1842
        %v1859 = vpack.c.b16 %v1843, %v1843
        %v1860 = vpack.c.b16 %v1844, %v1844
        %v1861 = vpack.c.b16 %v1845, %v1845
        %v1862 = vpack.c.b16 %v1846, %v1846
        %v1864 = vshrl.u32 %v1783, 16
        %v1866 = vshll.u32 %v1783, 16
        %v1868 = vrot.slane %v1866, 1
        %v1869 = vor.u32 %v1864, %v1868
        %v1871 = vshll.u32 %v1847, 16
        %v1873 = vrot.slane %v1871, 1
        %v1874 = vsel %vm1397, %v1869, %v1873
        %v1876 = vshrl.u32 %v1784, 16
        %v1878 = vshll.u32 %v1784, 16
        %v1880 = vrot.slane %v1878, 1
        %v1881 = vor.u32 %v1876, %v1880
        %v1883 = vshll.u32 %v1848, 16
        %v1885 = vrot.slane %v1883, 1
        %v1886 = vsel %vm1397, %v1881, %v1885
        %v1888 = vshrl.u32 %v1785, 16
        %v1890 = vshll.u32 %v1785, 16
        %v1892 = vrot.slane %v1890, 1
        %v1893 = vor.u32 %v1888, %v1892
        %v1895 = vshll.u32 %v1849, 16
        %v1897 = vrot.slane %v1895, 1
        %v1898 = vsel %vm1397, %v1893, %v1897
        %v1900 = vshrl.u32 %v1786, 16
        %v1902 = vshll.u32 %v1786, 16
        %v1904 = vrot.slane %v1902, 1
        %v1905 = vor.u32 %v1900, %v1904
        %v1907 = vshll.u32 %v1850, 16
        %v1909 = vrot.slane %v1907, 1
        %v1910 = vsel %vm1397, %v1905, %v1909
        %v1912 = vshrl.u32 %v1787, 16
        %v1914 = vshll.u32 %v1787, 16
        %v1916 = vrot.slane %v1914, 1
        %v1917 = vor.u32 %v1912, %v1916
        %v1919 = vshll.u32 %v1851, 16
        %v1921 = vrot.slane %v1919, 1
        %v1922 = vsel %vm1397, %v1917, %v1921
        %v1924 = vshrl.u32 %v1788, 16
        %v1926 = vshll.u32 %v1788, 16
        %v1928 = vrot.slane %v1926, 1
        %v1929 = vor.u32 %v1924, %v1928
        %v1931 = vshll.u32 %v1852, 16
        %v1933 = vrot.slane %v1931, 1
        %v1934 = vsel %vm1397, %v1929, %v1933
        %v1936 = vshrl.u32 %v1789, 16
        %v1938 = vshll.u32 %v1789, 16
        %v1940 = vrot.slane %v1938, 1
        %v1941 = vor.u32 %v1936, %v1940
        %v1943 = vshll.u32 %v1853, 16
        %v1945 = vrot.slane %v1943, 1
        %v1946 = vsel %vm1397, %v1941, %v1945
        %v1948 = vshrl.u32 %v1790, 16
        %v1950 = vshll.u32 %v1790, 16
        %v1952 = vrot.slane %v1950, 1
        %v1953 = vor.u32 %v1948, %v1952
        %v1955 = vshll.u32 %v1854, 16
        %v1957 = vrot.slane %v1955, 1
        %v1958 = vsel %vm1397, %v1953, %v1957
        %v1960 = vshrl.u32 %v1791, 16
        %v1962 = vshll.u32 %v1791, 16
        %v1964 = vrot.slane %v1962, 1
        %v1965 = vor.u32 %v1960, %v1964
        %v1967 = vshll.u32 %v1855, 16
        %v1969 = vrot.slane %v1967, 1
        %v1970 = vsel %vm1397, %v1965, %v1969
        %v1972 = vshrl.u32 %v1792, 16
        %v1974 = vshll.u32 %v1792, 16
        %v1976 = vrot.slane %v1974, 1
        %v1977 = vor.u32 %v1972, %v1976
        %v1979 = vshll.u32 %v1856, 16
        %v1981 = vrot.slane %v1979, 1
        %v1982 = vsel %vm1397, %v1977, %v1981
        %v1984 = vshrl.u32 %v1793, 16
        %v1986 = vshll.u32 %v1793, 16
        %v1988 = vrot.slane %v1986, 1
        %v1989 = vor.u32 %v1984, %v1988
        %v1991 = vshll.u32 %v1857, 16
        %v1993 = vrot.slane %v1991, 1
        %v1994 = vsel %vm1397, %v1989, %v1993
        %v1996 = vshrl.u32 %v1794, 16
        %v1998 = vshll.u32 %v1794, 16
        %v2000 = vrot.slane %v1998, 1
        %v2001 = vor.u32 %v1996, %v2000
        %v2003 = vshll.u32 %v1858, 16
        %v2005 = vrot.slane %v2003, 1
        %v2006 = vsel %vm1397, %v2001, %v2005
        %v2008 = vshrl.u32 %v1795, 16
        %v2010 = vshll.u32 %v1795, 16
        %v2012 = vrot.slane %v2010, 1
        %v2013 = vor.u32 %v2008, %v2012
        %v2015 = vshll.u32 %v1859, 16
        %v2017 = vrot.slane %v2015, 1
        %v2018 = vsel %vm1397, %v2013, %v2017
        %v2020 = vshrl.u32 %v1796, 16
        %v2022 = vshll.u32 %v1796, 16
        %v2024 = vrot.slane %v2022, 1
        %v2025 = vor.u32 %v2020, %v2024
        %v2027 = vshll.u32 %v1860, 16
        %v2029 = vrot.slane %v2027, 1
        %v2030 = vsel %vm1397, %v2025, %v2029
        %v2032 = vshrl.u32 %v1797, 16
        %v2034 = vshll.u32 %v1797, 16
        %v2036 = vrot.slane %v2034, 1
        %v2037 = vor.u32 %v2032, %v2036
        %v2039 = vshll.u32 %v1861, 16
        %v2041 = vrot.slane %v2039, 1
        %v2042 = vsel %vm1397, %v2037, %v2041
        %v2044 = vshrl.u32 %v1798, 16
        %v2046 = vshll.u32 %v1798, 16
        %v2048 = vrot.slane %v2046, 1
        %v2049 = vor.u32 %v2044, %v2048
        %v2051 = vshll.u32 %v1862, 16
        %v2053 = vrot.slane %v2051, 1
        %v2054 = vsel %vm1397, %v2049, %v2053
        %v2087 = vunpack.c.l.b16 %v1172
        %v2088 = vunpack.c.l.b16 %v1173
        %v2089 = vunpack.c.l.b16 %v1174
        %v2090 = vunpack.c.l.b16 %v1175
        %v2091 = vunpack.c.l.b16 %v1176
        %v2092 = vunpack.c.l.b16 %v1177
        %v2093 = vunpack.c.l.b16 %v1178
        %v2094 = vunpack.c.l.b16 %v1179
        %v2095 = vunpack.c.l.b16 %v1180
        %v2096 = vunpack.c.l.b16 %v1181
        %v2097 = vunpack.c.l.b16 %v1182
        %v2098 = vunpack.c.l.b16 %v1183
        %v2099 = vunpack.c.l.b16 %v1184
        %v2100 = vunpack.c.l.b16 %v1185
        %v2101 = vunpack.c.l.b16 %v1186
        %v2102 = vunpack.c.l.b16 %v1187
        %v2103 = vpack.c.b16 %v1752, %v2087
        %v2104 = vpack.c.b16 %v1754, %v2088
        %v2105 = vpack.c.b16 %v1756, %v2089
        %v2106 = vpack.c.b16 %v1758, %v2090
        %v2107 = vpack.c.b16 %v1760, %v2091
        %v2108 = vpack.c.b16 %v1762, %v2092
        %v2109 = vpack.c.b16 %v1764, %v2093
        %v2110 = vpack.c.b16 %v1766, %v2094
        %v2111 = vpack.c.b16 %v1768, %v2095
        %v2112 = vpack.c.b16 %v1770, %v2096
        %v2113 = vpack.c.b16 %v1772, %v2097
        %v2114 = vpack.c.b16 %v1774, %v2098
        %v2115 = vpack.c.b16 %v1776, %v2099
        %v2116 = vpack.c.b16 %v1778, %v2100
        %v2117 = vpack.c.b16 %v1780, %v2101
        %v2118 = vpack.c.b16 %v1782, %v2102
        %v2119 = vrot.slane %v2103, 1
        %v2120 = vrot.slane %v1847, 1
        %v2121 = vsel %vm1654, %v2119, %v2120
        %v2122 = vrot.slane %v2104, 1
        %v2123 = vrot.slane %v1848, 1
        %v2124 = vsel %vm1654, %v2122, %v2123
        %v2125 = vrot.slane %v2105, 1
        %v2126 = vrot.slane %v1849, 1
        %v2127 = vsel %vm1654, %v2125, %v2126
        %v2128 = vrot.slane %v2106, 1
        %v2129 = vrot.slane %v1850, 1
        %v2130 = vsel %vm1654, %v2128, %v2129
        %v2131 = vrot.slane %v2107, 1
        %v2132 = vrot.slane %v1851, 1
        %v2133 = vsel %vm1654, %v2131, %v2132
        %v2134 = vrot.slane %v2108, 1
        %v2135 = vrot.slane %v1852, 1
        %v2136 = vsel %vm1654, %v2134, %v2135
        %v2137 = vrot.slane %v2109, 1
        %v2138 = vrot.slane %v1853, 1
        %v2139 = vsel %vm1654, %v2137, %v2138
        %v2140 = vrot.slane %v2110, 1
        %v2141 = vrot.slane %v1854, 1
        %v2142 = vsel %vm1654, %v2140, %v2141
        %v2143 = vrot.slane %v2111, 1
        %v2144 = vrot.slane %v1855, 1
        %v2145 = vsel %vm1654, %v2143, %v2144
        %v2146 = vrot.slane %v2112, 1
        %v2147 = vrot.slane %v1856, 1
        %v2148 = vsel %vm1654, %v2146, %v2147
        %v2149 = vrot.slane %v2113, 1
        %v2150 = vrot.slane %v1857, 1
        %v2151 = vsel %vm1654, %v2149, %v2150
        %v2152 = vrot.slane %v2114, 1
        %v2153 = vrot.slane %v1858, 1
        %v2154 = vsel %vm1654, %v2152, %v2153
        %v2155 = vrot.slane %v2115, 1
        %v2156 = vrot.slane %v1859, 1
        %v2157 = vsel %vm1654, %v2155, %v2156
        %v2158 = vrot.slane %v2116, 1
        %v2159 = vrot.slane %v1860, 1
        %v2160 = vsel %vm1654, %v2158, %v2159
        %v2161 = vrot.slane %v2117, 1
        %v2162 = vrot.slane %v1861, 1
        %v2163 = vsel %vm1654, %v2161, %v2162
        %v2164 = vrot.slane %v2118, 1
        %v2165 = vrot.slane %v1862, 1
        %v2166 = vsel %vm1654, %v2164, %v2165
        %v2215 = vunpack.c.l.b16 %v1189
        %v2216 = vunpack.c.l.b16 %v1190
        %v2217 = vunpack.c.l.b16 %v1191
        %v2218 = vunpack.c.l.b16 %v1192
        %v2219 = vunpack.c.l.b16 %v1193
        %v2220 = vunpack.c.l.b16 %v1194
        %v2221 = vunpack.c.l.b16 %v1195
        %v2222 = vunpack.c.l.b16 %v1196
        %v2223 = vunpack.c.l.b16 %v1197
        %v2224 = vunpack.c.l.b16 %v1198
        %v2225 = vunpack.c.l.b16 %v1199
        %v2226 = vunpack.c.l.b16 %v1200
        %v2227 = vunpack.c.l.b16 %v1201
        %v2228 = vunpack.c.l.b16 %v1202
        %v2229 = vunpack.c.l.b16 %v1203
        %v2230 = vunpack.c.l.b16 %v1204
        %v2231 = vunpack.c.l.b16 %v1205
        %v2232 = vunpack.c.l.b16 %v1206
        %v2233 = vunpack.c.l.b16 %v1207
        %v2234 = vunpack.c.l.b16 %v1208
        %v2235 = vunpack.c.l.b16 %v1209
        %v2236 = vunpack.c.l.b16 %v1210
        %v2237 = vunpack.c.l.b16 %v1211
        %v2238 = vunpack.c.l.b16 %v1212
        %v2239 = vunpack.c.l.b16 %v1213
        %v2240 = vunpack.c.l.b16 %v1214
        %v2241 = vunpack.c.l.b16 %v1215
        %v2242 = vunpack.c.l.b16 %v1216
        %v2243 = vunpack.c.l.b16 %v1217
        %v2244 = vunpack.c.l.b16 %v1218
        %v2245 = vunpack.c.l.b16 %v1219
        %v2246 = vunpack.c.l.b16 %v1220
        %v2247 = vpack.c.b16 %v2216, %v2215
        %v2248 = vpack.c.b16 %v2218, %v2217
        %v2249 = vpack.c.b16 %v2220, %v2219
        %v2250 = vpack.c.b16 %v2222, %v2221
        %v2251 = vpack.c.b16 %v2224, %v2223
        %v2252 = vpack.c.b16 %v2226, %v2225
        %v2253 = vpack.c.b16 %v2228, %v2227
        %v2254 = vpack.c.b16 %v2230, %v2229
        %v2255 = vpack.c.b16 %v2232, %v2231
        %v2256 = vpack.c.b16 %v2234, %v2233
        %v2257 = vpack.c.b16 %v2236, %v2235
        %v2258 = vpack.c.b16 %v2238, %v2237
        %v2259 = vpack.c.b16 %v2240, %v2239
        %v2260 = vpack.c.b16 %v2242, %v2241
        %v2261 = vpack.c.b16 %v2244, %v2243
        %v2262 = vpack.c.b16 %v2246, %v2245
        %v2295 = vunpack.c.l.b16 %v1221
        %v2296 = vunpack.c.l.b16 %v1222
        %v2297 = vunpack.c.l.b16 %v1223
        %v2298 = vunpack.c.l.b16 %v1224
        %v2299 = vunpack.c.l.b16 %v1225
        %v2300 = vunpack.c.l.b16 %v1226
        %v2301 = vunpack.c.l.b16 %v1227
        %v2302 = vunpack.c.l.b16 %v1228
        %v2303 = vunpack.c.l.b16 %v1229
        %v2304 = vunpack.c.l.b16 %v1230
        %v2305 = vunpack.c.l.b16 %v1231
        %v2306 = vunpack.c.l.b16 %v1232
        %v2307 = vunpack.c.l.b16 %v1233
        %v2308 = vunpack.c.l.b16 %v1234
        %v2309 = vunpack.c.l.b16 %v1235
        %v2310 = vunpack.c.l.b16 %v1236
        %v2311 = vpack.c.b16 %v2295, %v2295
        %v2312 = vpack.c.b16 %v2296, %v2296
        %v2313 = vpack.c.b16 %v2297, %v2297
        %v2314 = vpack.c.b16 %v2298, %v2298
        %v2315 = vpack.c.b16 %v2299, %v2299
        %v2316 = vpack.c.b16 %v2300, %v2300
        %v2317 = vpack.c.b16 %v2301, %v2301
        %v2318 = vpack.c.b16 %v2302, %v2302
        %v2319 = vpack.c.b16 %v2303, %v2303
        %v2320 = vpack.c.b16 %v2304, %v2304
        %v2321 = vpack.c.b16 %v2305, %v2305
        %v2322 = vpack.c.b16 %v2306, %v2306
        %v2323 = vpack.c.b16 %v2307, %v2307
        %v2324 = vpack.c.b16 %v2308, %v2308
        %v2325 = vpack.c.b16 %v2309, %v2309
        %v2326 = vpack.c.b16 %v2310, %v2310
        %v2328 = vshrl.u32 %v2247, 16
        %v2330 = vshll.u32 %v2247, 16
        %v2332 = vrot.slane %v2330, 1
        %v2333 = vor.u32 %v2328, %v2332
        %v2335 = vshll.u32 %v2311, 16
        %v2337 = vrot.slane %v2335, 1
        %v2338 = vsel %vm1397, %v2333, %v2337
        %v2340 = vshrl.u32 %v2248, 16
        %v2342 = vshll.u32 %v2248, 16
        %v2344 = vrot.slane %v2342, 1
        %v2345 = vor.u32 %v2340, %v2344
        %v2347 = vshll.u32 %v2312, 16
        %v2349 = vrot.slane %v2347, 1
        %v2350 = vsel %vm1397, %v2345, %v2349
        %v2352 = vshrl.u32 %v2249, 16
        %v2354 = vshll.u32 %v2249, 16
        %v2356 = vrot.slane %v2354, 1
        %v2357 = vor.u32 %v2352, %v2356
        %v2359 = vshll.u32 %v2313, 16
        %v2361 = vrot.slane %v2359, 1
        %v2362 = vsel %vm1397, %v2357, %v2361
        %v2364 = vshrl.u32 %v2250, 16
        %v2366 = vshll.u32 %v2250, 16
        %v2368 = vrot.slane %v2366, 1
        %v2369 = vor.u32 %v2364, %v2368
        %v2371 = vshll.u32 %v2314, 16
        %v2373 = vrot.slane %v2371, 1
        %v2374 = vsel %vm1397, %v2369, %v2373
        %v2376 = vshrl.u32 %v2251, 16
        %v2378 = vshll.u32 %v2251, 16
        %v2380 = vrot.slane %v2378, 1
        %v2381 = vor.u32 %v2376, %v2380
        %v2383 = vshll.u32 %v2315, 16
        %v2385 = vrot.slane %v2383, 1
        %v2386 = vsel %vm1397, %v2381, %v2385
        %v2388 = vshrl.u32 %v2252, 16
        %v2390 = vshll.u32 %v2252, 16
        %v2392 = vrot.slane %v2390, 1
        %v2393 = vor.u32 %v2388, %v2392
        %v2395 = vshll.u32 %v2316, 16
        %v2397 = vrot.slane %v2395, 1
        %v2398 = vsel %vm1397, %v2393, %v2397
        %v2400 = vshrl.u32 %v2253, 16
        %v2402 = vshll.u32 %v2253, 16
        %v2404 = vrot.slane %v2402, 1
        %v2405 = vor.u32 %v2400, %v2404
        %v2407 = vshll.u32 %v2317, 16
        %v2409 = vrot.slane %v2407, 1
        %v2410 = vsel %vm1397, %v2405, %v2409
        %v2412 = vshrl.u32 %v2254, 16
        %v2414 = vshll.u32 %v2254, 16
        %v2416 = vrot.slane %v2414, 1
        %v2417 = vor.u32 %v2412, %v2416
        %v2419 = vshll.u32 %v2318, 16
        %v2421 = vrot.slane %v2419, 1
        %v2422 = vsel %vm1397, %v2417, %v2421
        %v2424 = vshrl.u32 %v2255, 16
        %v2426 = vshll.u32 %v2255, 16
        %v2428 = vrot.slane %v2426, 1
        %v2429 = vor.u32 %v2424, %v2428
        %v2431 = vshll.u32 %v2319, 16
        %v2433 = vrot.slane %v2431, 1
        %v2434 = vsel %vm1397, %v2429, %v2433
        %v2436 = vshrl.u32 %v2256, 16
        %v2438 = vshll.u32 %v2256, 16
        %v2440 = vrot.slane %v2438, 1
        %v2441 = vor.u32 %v2436, %v2440
        %v2443 = vshll.u32 %v2320, 16
        %v2445 = vrot.slane %v2443, 1
        %v2446 = vsel %vm1397, %v2441, %v2445
        %v2448 = vshrl.u32 %v2257, 16
        %v2450 = vshll.u32 %v2257, 16
        %v2452 = vrot.slane %v2450, 1
        %v2453 = vor.u32 %v2448, %v2452
        %v2455 = vshll.u32 %v2321, 16
        %v2457 = vrot.slane %v2455, 1
        %v2458 = vsel %vm1397, %v2453, %v2457
        %v2460 = vshrl.u32 %v2258, 16
        %v2462 = vshll.u32 %v2258, 16
        %v2464 = vrot.slane %v2462, 1
        %v2465 = vor.u32 %v2460, %v2464
        %v2467 = vshll.u32 %v2322, 16
        %v2469 = vrot.slane %v2467, 1
        %v2470 = vsel %vm1397, %v2465, %v2469
        %v2472 = vshrl.u32 %v2259, 16
        %v2474 = vshll.u32 %v2259, 16
        %v2476 = vrot.slane %v2474, 1
        %v2477 = vor.u32 %v2472, %v2476
        %v2479 = vshll.u32 %v2323, 16
        %v2481 = vrot.slane %v2479, 1
        %v2482 = vsel %vm1397, %v2477, %v2481
        %v2484 = vshrl.u32 %v2260, 16
        %v2486 = vshll.u32 %v2260, 16
        %v2488 = vrot.slane %v2486, 1
        %v2489 = vor.u32 %v2484, %v2488
        %v2491 = vshll.u32 %v2324, 16
        %v2493 = vrot.slane %v2491, 1
        %v2494 = vsel %vm1397, %v2489, %v2493
        %v2496 = vshrl.u32 %v2261, 16
        %v2498 = vshll.u32 %v2261, 16
        %v2500 = vrot.slane %v2498, 1
        %v2501 = vor.u32 %v2496, %v2500
        %v2503 = vshll.u32 %v2325, 16
        %v2505 = vrot.slane %v2503, 1
        %v2506 = vsel %vm1397, %v2501, %v2505
        %v2508 = vshrl.u32 %v2262, 16
        %v2510 = vshll.u32 %v2262, 16
        %v2512 = vrot.slane %v2510, 1
        %v2513 = vor.u32 %v2508, %v2512
        %v2515 = vshll.u32 %v2326, 16
        %v2517 = vrot.slane %v2515, 1
        %v2518 = vsel %vm1397, %v2513, %v2517
        %v2551 = vunpack.c.l.b16 %v1237
        %v2552 = vunpack.c.l.b16 %v1238
        %v2553 = vunpack.c.l.b16 %v1239
        %v2554 = vunpack.c.l.b16 %v1240
        %v2555 = vunpack.c.l.b16 %v1241
        %v2556 = vunpack.c.l.b16 %v1242
        %v2557 = vunpack.c.l.b16 %v1243
        %v2558 = vunpack.c.l.b16 %v1244
        %v2559 = vunpack.c.l.b16 %v1245
        %v2560 = vunpack.c.l.b16 %v1246
        %v2561 = vunpack.c.l.b16 %v1247
        %v2562 = vunpack.c.l.b16 %v1248
        %v2563 = vunpack.c.l.b16 %v1249
        %v2564 = vunpack.c.l.b16 %v1250
        %v2565 = vunpack.c.l.b16 %v1251
        %v2566 = vunpack.c.l.b16 %v1252
        %v2567 = vpack.c.b16 %v2216, %v2551
        %v2568 = vpack.c.b16 %v2218, %v2552
        %v2569 = vpack.c.b16 %v2220, %v2553
        %v2570 = vpack.c.b16 %v2222, %v2554
        %v2571 = vpack.c.b16 %v2224, %v2555
        %v2572 = vpack.c.b16 %v2226, %v2556
        %v2573 = vpack.c.b16 %v2228, %v2557
        %v2574 = vpack.c.b16 %v2230, %v2558
        %v2575 = vpack.c.b16 %v2232, %v2559
        %v2576 = vpack.c.b16 %v2234, %v2560
        %v2577 = vpack.c.b16 %v2236, %v2561
        %v2578 = vpack.c.b16 %v2238, %v2562
        %v2579 = vpack.c.b16 %v2240, %v2563
        %v2580 = vpack.c.b16 %v2242, %v2564
        %v2581 = vpack.c.b16 %v2244, %v2565
        %v2582 = vpack.c.b16 %v2246, %v2566
        %v2583 = vrot.slane %v2567, 1
        %v2584 = vrot.slane %v2311, 1
        %v2585 = vsel %vm1654, %v2583, %v2584
        %v2586 = vrot.slane %v2568, 1
        %v2587 = vrot.slane %v2312, 1
        %v2588 = vsel %vm1654, %v2586, %v2587
        %v2589 = vrot.slane %v2569, 1
        %v2590 = vrot.slane %v2313, 1
        %v2591 = vsel %vm1654, %v2589, %v2590
        %v2592 = vrot.slane %v2570, 1
        %v2593 = vrot.slane %v2314, 1
        %v2594 = vsel %vm1654, %v2592, %v2593
        %v2595 = vrot.slane %v2571, 1
        %v2596 = vrot.slane %v2315, 1
        %v2597 = vsel %vm1654, %v2595, %v2596
        %v2598 = vrot.slane %v2572, 1
        %v2599 = vrot.slane %v2316, 1
        %v2600 = vsel %vm1654, %v2598, %v2599
        %v2601 = vrot.slane %v2573, 1
        %v2602 = vrot.slane %v2317, 1
        %v2603 = vsel %vm1654, %v2601, %v2602
        %v2604 = vrot.slane %v2574, 1
        %v2605 = vrot.slane %v2318, 1
        %v2606 = vsel %vm1654, %v2604, %v2605
        %v2607 = vrot.slane %v2575, 1
        %v2608 = vrot.slane %v2319, 1
        %v2609 = vsel %vm1654, %v2607, %v2608
        %v2610 = vrot.slane %v2576, 1
        %v2611 = vrot.slane %v2320, 1
        %v2612 = vsel %vm1654, %v2610, %v2611
        %v2613 = vrot.slane %v2577, 1
        %v2614 = vrot.slane %v2321, 1
        %v2615 = vsel %vm1654, %v2613, %v2614
        %v2616 = vrot.slane %v2578, 1
        %v2617 = vrot.slane %v2322, 1
        %v2618 = vsel %vm1654, %v2616, %v2617
        %v2619 = vrot.slane %v2579, 1
        %v2620 = vrot.slane %v2323, 1
        %v2621 = vsel %vm1654, %v2619, %v2620
        %v2622 = vrot.slane %v2580, 1
        %v2623 = vrot.slane %v2324, 1
        %v2624 = vsel %vm1654, %v2622, %v2623
        %v2625 = vrot.slane %v2581, 1
        %v2626 = vrot.slane %v2325, 1
        %v2627 = vsel %vm1654, %v2625, %v2626
        %v2628 = vrot.slane %v2582, 1
        %v2629 = vrot.slane %v2326, 1
        %v2630 = vsel %vm1654, %v2628, %v2629
        %v2647 = vld [vmem:[#allocation6] sm:$0xf]
        %v2648 = vld [vmem:[#allocation6 + $0x4] sm:$0xf]
        %v2649 = vld [vmem:[#allocation6 + $0x8] sm:$0xf]
        %v2650 = vld [vmem:[#allocation6 + $0xc] sm:$0xf]
        %v2651 = vld [vmem:[#allocation6 + $0x10] sm:$0xf]
        %v2652 = vld [vmem:[#allocation6 + $0x14] sm:$0xf]
        %v2653 = vld [vmem:[#allocation6 + $0x18] sm:$0xf]
        %v2654 = vld [vmem:[#allocation6 + $0x1c] sm:$0xf]
        %v2655 = vld [vmem:[#allocation6 + $0x20] sm:$0xf]
        %v2656 = vld [vmem:[#allocation6 + $0x24] sm:$0xf]
        %v2657 = vld [vmem:[#allocation6 + $0x28] sm:$0xf]
        %v2658 = vld [vmem:[#allocation6 + $0x2c] sm:$0xf]
        %v2659 = vld [vmem:[#allocation6 + $0x30] sm:$0xf]
        %v2660 = vld [vmem:[#allocation6 + $0x34] sm:$0xf]
        %v2661 = vld [vmem:[#allocation6 + $0x38] sm:$0xf]
        %v2662 = vld [vmem:[#allocation6 + $0x3c] sm:$0xf]
        %v2663 = vld [vmem:[#allocation6 + $0x40] sm:$0xf]
        %v2664 = vld [vmem:[#allocation6 + $0x44] sm:$0xf]
        %v2665 = vld [vmem:[#allocation6 + $0x48] sm:$0xf]
        %v2666 = vld [vmem:[#allocation6 + $0x4c] sm:$0xf]
        %v2667 = vld [vmem:[#allocation6 + $0x50] sm:$0xf]
        %v2668 = vld [vmem:[#allocation6 + $0x54] sm:$0xf]
        %v2669 = vld [vmem:[#allocation6 + $0x58] sm:$0xf]
        %v2670 = vld [vmem:[#allocation6 + $0x5c] sm:$0xf]
        %v2671 = vld [vmem:[#allocation6 + $0x60] sm:$0xf]
        %v2672 = vld [vmem:[#allocation6 + $0x64] sm:$0xf]
        %v2673 = vld [vmem:[#allocation6 + $0x68] sm:$0xf]
        %v2674 = vld [vmem:[#allocation6 + $0x6c] sm:$0xf]
        %v2675 = vld [vmem:[#allocation6 + $0x70] sm:$0xf]
        %v2676 = vld [vmem:[#allocation6 + $0x74] sm:$0xf]
        %v2677 = vld [vmem:[#allocation6 + $0x78] sm:$0xf]
        %v2678 = vld [vmem:[#allocation6 + $0x7c] sm:$0xf]
        %v2679 = vld [vmem:[#allocation6 + $0x80] sm:$0xf]
        %v2680 = vld [vmem:[#allocation6 + $0x84] sm:$0xf]
        %v2681 = vld [vmem:[#allocation6 + $0x88] sm:$0xf]
        %v2682 = vld [vmem:[#allocation6 + $0x8c] sm:$0xf]
        %v2683 = vld [vmem:[#allocation6 + $0x90] sm:$0xf]
        %v2684 = vld [vmem:[#allocation6 + $0x94] sm:$0xf]
        %v2685 = vld [vmem:[#allocation6 + $0x98] sm:$0xf]
        %v2686 = vld [vmem:[#allocation6 + $0x9c] sm:$0xf]
        %v2687 = vld [vmem:[#allocation6 + $0xa0] sm:$0xf]
        %v2688 = vld [vmem:[#allocation6 + $0xa4] sm:$0xf]
        %v2689 = vld [vmem:[#allocation6 + $0xa8] sm:$0xf]
        %v2690 = vld [vmem:[#allocation6 + $0xac] sm:$0xf]
        %v2691 = vld [vmem:[#allocation6 + $0xb0] sm:$0xf]
        %v2692 = vld [vmem:[#allocation6 + $0xb4] sm:$0xf]
        %v2693 = vld [vmem:[#allocation6 + $0xb8] sm:$0xf]
        %v2694 = vld [vmem:[#allocation6 + $0xbc] sm:$0xf]
        %v2695 = vld [vmem:[#allocation6 + $0xc0] sm:$0xf]
        %v2696 = vld [vmem:[#allocation6 + $0xc4] sm:$0xf]
        %v2697 = vld [vmem:[#allocation6 + $0xc8] sm:$0xf]
        %v2698 = vld [vmem:[#allocation6 + $0xcc] sm:$0xf]
        %v2699 = vld [vmem:[#allocation6 + $0xd0] sm:$0xf]
        %v2700 = vld [vmem:[#allocation6 + $0xd4] sm:$0xf]
        %v2701 = vld [vmem:[#allocation6 + $0xd8] sm:$0xf]
        %v2702 = vld [vmem:[#allocation6 + $0xdc] sm:$0xf]
        %v2703 = vld [vmem:[#allocation6 + $0xe0] sm:$0xf]
        %v2704 = vld [vmem:[#allocation6 + $0xe4] sm:$0xf]
        %v2705 = vld [vmem:[#allocation6 + $0xe8] sm:$0xf]
        %v2706 = vld [vmem:[#allocation6 + $0xec] sm:$0xf]
        %v2707 = vld [vmem:[#allocation6 + $0xf0] sm:$0xf]
        %v2708 = vld [vmem:[#allocation6 + $0xf4] sm:$0xf]
        %v2709 = vld [vmem:[#allocation6 + $0xf8] sm:$0xf]
        %v2710 = vld [vmem:[#allocation6 + $0xfc] sm:$0xf]
        %v2711 = vld [vmem:[#allocation6 + $0x100] sm:$0xf]
        %v2712 = vld [vmem:[#allocation6 + $0x104] sm:$0xf]
        %v2713 = vld [vmem:[#allocation6 + $0x108] sm:$0xf]
        %v2714 = vld [vmem:[#allocation6 + $0x10c] sm:$0xf]
        %v2715 = vld [vmem:[#allocation6 + $0x110] sm:$0xf]
        %v2716 = vld [vmem:[#allocation6 + $0x114] sm:$0xf]
        %v2717 = vld [vmem:[#allocation6 + $0x118] sm:$0xf]
        %v2718 = vld [vmem:[#allocation6 + $0x11c] sm:$0xf]
        %v2719 = vld [vmem:[#allocation6 + $0x120] sm:$0xf]
        %v2720 = vld [vmem:[#allocation6 + $0x124] sm:$0xf]
        %v2721 = vld [vmem:[#allocation6 + $0x128] sm:$0xf]
        %v2722 = vld [vmem:[#allocation6 + $0x12c] sm:$0xf]
        %v2723 = vld [vmem:[#allocation6 + $0x130] sm:$0xf]
        %v2724 = vld [vmem:[#allocation6 + $0x134] sm:$0xf]
        %v2725 = vld [vmem:[#allocation6 + $0x138] sm:$0xf]
        %v2726 = vld [vmem:[#allocation6 + $0x13c] sm:$0xf]
        %v2727 = vld [vmem:[#allocation6 + $0x140] sm:$0xf]
        %v2728 = vld [vmem:[#allocation6 + $0x144] sm:$0xf]
        %v2729 = vld [vmem:[#allocation6 + $0x148] sm:$0xf]
        %v2730 = vld [vmem:[#allocation6 + $0x14c] sm:$0xf]
        %v2731 = vld [vmem:[#allocation6 + $0x150] sm:$0xf]
        %v2732 = vld [vmem:[#allocation6 + $0x154] sm:$0xf]
        %v2733 = vld [vmem:[#allocation6 + $0x158] sm:$0xf]
        %v2734 = vld [vmem:[#allocation6 + $0x15c] sm:$0xf]
        %v2735 = vld [vmem:[#allocation6 + $0x160] sm:$0xf]
        %v2736 = vld [vmem:[#allocation6 + $0x164] sm:$0xf]
        %v2737 = vld [vmem:[#allocation6 + $0x168] sm:$0xf]
        %v2738 = vld [vmem:[#allocation6 + $0x16c] sm:$0xf]
        %v2739 = vld [vmem:[#allocation6 + $0x170] sm:$0xf]
        %v2740 = vld [vmem:[#allocation6 + $0x174] sm:$0xf]
        %v2741 = vld [vmem:[#allocation6 + $0x178] sm:$0xf]
        %v2742 = vld [vmem:[#allocation6 + $0x17c] sm:$0xf]
        %v2743 = vld [vmem:[#allocation6 + $0x180] sm:$0xf]
        %v2744 = vld [vmem:[#allocation6 + $0x184] sm:$0xf]
        %v2745 = vld [vmem:[#allocation6 + $0x188] sm:$0xf]
        %v2746 = vld [vmem:[#allocation6 + $0x18c] sm:$0xf]
        %v2747 = vld [vmem:[#allocation6 + $0x190] sm:$0xf]
        %v2748 = vld [vmem:[#allocation6 + $0x194] sm:$0xf]
        %v2749 = vld [vmem:[#allocation6 + $0x198] sm:$0xf]
        %v2750 = vld [vmem:[#allocation6 + $0x19c] sm:$0xf]
        %v2751 = vld [vmem:[#allocation6 + $0x1a0] sm:$0xf]
        %v2752 = vld [vmem:[#allocation6 + $0x1a4] sm:$0xf]
        %v2753 = vld [vmem:[#allocation6 + $0x1a8] sm:$0xf]
        %v2754 = vld [vmem:[#allocation6 + $0x1ac] sm:$0xf]
        %v2755 = vld [vmem:[#allocation6 + $0x1b0] sm:$0xf]
        %v2756 = vld [vmem:[#allocation6 + $0x1b4] sm:$0xf]
        %v2757 = vld [vmem:[#allocation6 + $0x1b8] sm:$0xf]
        %v2758 = vld [vmem:[#allocation6 + $0x1bc] sm:$0xf]
        %v2759 = vld [vmem:[#allocation6 + $0x1c0] sm:$0xf]
        %v2760 = vld [vmem:[#allocation6 + $0x1c4] sm:$0xf]
        %v2761 = vld [vmem:[#allocation6 + $0x1c8] sm:$0xf]
        %v2762 = vld [vmem:[#allocation6 + $0x1cc] sm:$0xf]
        %v2763 = vld [vmem:[#allocation6 + $0x1d0] sm:$0xf]
        %v2764 = vld [vmem:[#allocation6 + $0x1d4] sm:$0xf]
        %v2765 = vld [vmem:[#allocation6 + $0x1d8] sm:$0xf]
        %v2766 = vld [vmem:[#allocation6 + $0x1dc] sm:$0xf]
        %v2767 = vld [vmem:[#allocation6 + $0x1e0] sm:$0xf]
        %v2768 = vld [vmem:[#allocation6 + $0x1e4] sm:$0xf]
        %v2769 = vld [vmem:[#allocation6 + $0x1e8] sm:$0xf]
        %v2770 = vld [vmem:[#allocation6 + $0x1ec] sm:$0xf]
        %v2771 = vld [vmem:[#allocation6 + $0x1f0] sm:$0xf]
        %v2772 = vld [vmem:[#allocation6 + $0x1f4] sm:$0xf]
        %v2773 = vld [vmem:[#allocation6 + $0x1f8] sm:$0xf]
        %v2774 = vld [vmem:[#allocation6 + $0x1fc] sm:$0xf]
        %v2775 = vld [vmem:[#allocation6 + $0x200] sm:$0xf]
        %v2776 = vld [vmem:[#allocation6 + $0x204] sm:$0xf]
        %v2777 = vld [vmem:[#allocation6 + $0x208] sm:$0xf]
        %v2778 = vld [vmem:[#allocation6 + $0x20c] sm:$0xf]
        %v2779 = vld [vmem:[#allocation6 + $0x210] sm:$0xf]
        %v2780 = vld [vmem:[#allocation6 + $0x214] sm:$0xf]
        %v2781 = vld [vmem:[#allocation6 + $0x218] sm:$0xf]
        %v2782 = vld [vmem:[#allocation6 + $0x21c] sm:$0xf]
        %v2783 = vld [vmem:[#allocation6 + $0x220] sm:$0xf]
        %v2784 = vld [vmem:[#allocation6 + $0x224] sm:$0xf]
        %v2785 = vld [vmem:[#allocation6 + $0x228] sm:$0xf]
        %v2786 = vld [vmem:[#allocation6 + $0x22c] sm:$0xf]
        %v2787 = vld [vmem:[#allocation6 + $0x230] sm:$0xf]
        %v2788 = vld [vmem:[#allocation6 + $0x234] sm:$0xf]
        %v2789 = vld [vmem:[#allocation6 + $0x238] sm:$0xf]
        %v2790 = vld [vmem:[#allocation6 + $0x23c] sm:$0xf]
        %v2935 = vunpack.c.l.b16 %v2647
        %v2936 = vunpack.c.l.b16 %v2648
        %v2937 = vunpack.c.l.b16 %v2649
        %v2938 = vunpack.c.l.b16 %v2650
        %v2939 = vunpack.c.l.b16 %v2651
        %v2940 = vunpack.c.l.b16 %v2652
        %v2941 = vunpack.c.l.b16 %v2653
        %v2942 = vunpack.c.l.b16 %v2654
        %v2943 = vunpack.c.l.b16 %v2655
        %v2944 = vunpack.c.l.b16 %v2656
        %v2945 = vunpack.c.l.b16 %v2657
        %v2946 = vunpack.c.l.b16 %v2658
        %v2947 = vunpack.c.l.b16 %v2659
        %v2948 = vunpack.c.l.b16 %v2660
        %v2949 = vunpack.c.l.b16 %v2661
        %v2950 = vunpack.c.l.b16 %v2662
        %v2951 = vunpack.c.l.b16 %v2663
        %v2952 = vunpack.c.l.b16 %v2664
        %v2953 = vunpack.c.l.b16 %v2665
        %v2954 = vunpack.c.l.b16 %v2666
        %v2955 = vunpack.c.l.b16 %v2667
        %v2956 = vunpack.c.l.b16 %v2668
        %v2957 = vunpack.c.l.b16 %v2669
        %v2958 = vunpack.c.l.b16 %v2670
        %v2959 = vunpack.c.l.b16 %v2671
        %v2960 = vunpack.c.l.b16 %v2672
        %v2961 = vunpack.c.l.b16 %v2673
        %v2962 = vunpack.c.l.b16 %v2674
        %v2963 = vunpack.c.l.b16 %v2675
        %v2964 = vunpack.c.l.b16 %v2676
        %v2965 = vunpack.c.l.b16 %v2677
        %v2966 = vunpack.c.l.b16 %v2678
        %v2967 = vunpack.c.l.b16 %v2679
        %v2968 = vunpack.c.l.b16 %v2680
        %v2969 = vunpack.c.l.b16 %v2681
        %v2970 = vunpack.c.l.b16 %v2682
        %v2971 = vunpack.c.l.b16 %v2683
        %v2972 = vunpack.c.l.b16 %v2684
        %v2973 = vunpack.c.l.b16 %v2685
        %v2974 = vunpack.c.l.b16 %v2686
        %v2975 = vunpack.c.l.b16 %v2687
        %v2976 = vunpack.c.l.b16 %v2688
        %v2977 = vunpack.c.l.b16 %v2689
        %v2978 = vunpack.c.l.b16 %v2690
        %v2979 = vunpack.c.l.b16 %v2691
        %v2980 = vunpack.c.l.b16 %v2692
        %v2981 = vunpack.c.l.b16 %v2693
        %v2982 = vunpack.c.l.b16 %v2694
        %v2983 = vunpack.c.l.b16 %v2695
        %v2984 = vunpack.c.l.b16 %v2696
        %v2985 = vunpack.c.l.b16 %v2697
        %v2986 = vunpack.c.l.b16 %v2698
        %v2987 = vunpack.c.l.b16 %v2699
        %v2988 = vunpack.c.l.b16 %v2700
        %v2989 = vunpack.c.l.b16 %v2701
        %v2990 = vunpack.c.l.b16 %v2702
        %v2991 = vunpack.c.l.b16 %v2703
        %v2992 = vunpack.c.l.b16 %v2704
        %v2993 = vunpack.c.l.b16 %v2705
        %v2994 = vunpack.c.l.b16 %v2706
        %v2995 = vunpack.c.l.b16 %v2707
        %v2996 = vunpack.c.l.b16 %v2708
        %v2997 = vunpack.c.l.b16 %v2709
        %v2998 = vunpack.c.l.b16 %v2710
        %v2999 = vunpack.c.l.b16 %v2711
        %v3000 = vunpack.c.l.b16 %v2712
        %v3001 = vunpack.c.l.b16 %v2713
        %v3002 = vunpack.c.l.b16 %v2714
        %v3003 = vunpack.c.l.b16 %v2715
        %v3004 = vunpack.c.l.b16 %v2716
        %v3005 = vunpack.c.l.b16 %v2717
        %v3006 = vunpack.c.l.b16 %v2718
        %v3007 = vunpack.c.l.b16 %v2719
        %v3008 = vunpack.c.l.b16 %v2720
        %v3009 = vunpack.c.l.b16 %v2721
        %v3010 = vunpack.c.l.b16 %v2722
        %v3011 = vunpack.c.l.b16 %v2723
        %v3012 = vunpack.c.l.b16 %v2724
        %v3013 = vunpack.c.l.b16 %v2725
        %v3014 = vunpack.c.l.b16 %v2726
        %v3015 = vunpack.c.l.b16 %v2727
        %v3016 = vunpack.c.l.b16 %v2728
        %v3017 = vunpack.c.l.b16 %v2729
        %v3018 = vunpack.c.l.b16 %v2730
        %v3019 = vunpack.c.l.b16 %v2731
        %v3020 = vunpack.c.l.b16 %v2732
        %v3021 = vunpack.c.l.b16 %v2733
        %v3022 = vunpack.c.l.b16 %v2734
        %v3023 = vunpack.c.l.b16 %v2735
        %v3024 = vunpack.c.l.b16 %v2736
        %v3025 = vunpack.c.l.b16 %v2737
        %v3026 = vunpack.c.l.b16 %v2738
        %v3027 = vunpack.c.l.b16 %v2739
        %v3028 = vunpack.c.l.b16 %v2740
        %v3029 = vunpack.c.l.b16 %v2741
        %v3030 = vunpack.c.l.b16 %v2742
        %v3031 = vunpack.c.l.b16 %v2743
        %v3032 = vunpack.c.l.b16 %v2744
        %v3033 = vunpack.c.l.b16 %v2745
        %v3034 = vunpack.c.l.b16 %v2746
        %v3035 = vunpack.c.l.b16 %v2747
        %v3036 = vunpack.c.l.b16 %v2748
        %v3037 = vunpack.c.l.b16 %v2749
        %v3038 = vunpack.c.l.b16 %v2750
        %v3039 = vunpack.c.l.b16 %v2751
        %v3040 = vunpack.c.l.b16 %v2752
        %v3041 = vunpack.c.l.b16 %v2753
        %v3042 = vunpack.c.l.b16 %v2754
        %v3043 = vunpack.c.l.b16 %v2755
        %v3044 = vunpack.c.l.b16 %v2756
        %v3045 = vunpack.c.l.b16 %v2757
        %v3046 = vunpack.c.l.b16 %v2758
        %v3047 = vunpack.c.l.b16 %v2759
        %v3048 = vunpack.c.l.b16 %v2760
        %v3049 = vunpack.c.l.b16 %v2761
        %v3050 = vunpack.c.l.b16 %v2762
        %v3051 = vunpack.c.l.b16 %v2763
        %v3052 = vunpack.c.l.b16 %v2764
        %v3053 = vunpack.c.l.b16 %v2765
        %v3054 = vunpack.c.l.b16 %v2766
        %v3055 = vunpack.c.l.b16 %v2767
        %v3056 = vunpack.c.l.b16 %v2768
        %v3057 = vunpack.c.l.b16 %v2769
        %v3058 = vunpack.c.l.b16 %v2770
        %v3059 = vunpack.c.l.b16 %v2771
        %v3060 = vunpack.c.l.b16 %v2772
        %v3061 = vunpack.c.l.b16 %v2773
        %v3062 = vunpack.c.l.b16 %v2774
        %v3063 = vunpack.c.l.b16 %v2775
        %v3064 = vunpack.c.l.b16 %v2776
        %v3065 = vunpack.c.l.b16 %v2777
        %v3066 = vunpack.c.l.b16 %v2778
        %v3067 = vunpack.c.l.b16 %v2779
        %v3068 = vunpack.c.l.b16 %v2780
        %v3069 = vunpack.c.l.b16 %v2781
        %v3070 = vunpack.c.l.b16 %v2782
        %v3071 = vunpack.c.l.b16 %v2783
        %v3072 = vunpack.c.l.b16 %v2784
        %v3073 = vunpack.c.l.b16 %v2785
        %v3074 = vunpack.c.l.b16 %v2786
        %v3075 = vunpack.c.l.b16 %v2787
        %v3076 = vunpack.c.l.b16 %v2788
        %v3077 = vunpack.c.l.b16 %v2789
        %v3078 = vunpack.c.l.b16 %v2790
        %v3079 = vpack.c.b16 %v2936, %v2935
        %v3080 = vpack.c.b16 %v2938, %v2937
        %v3081 = vpack.c.b16 %v2940, %v2939
        %v3082 = vpack.c.b16 %v2942, %v2941
        %v3083 = vpack.c.b16 %v2944, %v2943
        %v3084 = vpack.c.b16 %v2946, %v2945
        %v3085 = vpack.c.b16 %v2948, %v2947
        %v3086 = vpack.c.b16 %v2950, %v2949
        %v3087 = vpack.c.b16 %v2952, %v2951
        %v3088 = vpack.c.b16 %v2954, %v2953
        %v3089 = vpack.c.b16 %v2956, %v2955
        %v3090 = vpack.c.b16 %v2958, %v2957
        %v3091 = vpack.c.b16 %v2960, %v2959
        %v3092 = vpack.c.b16 %v2962, %v2961
        %v3093 = vpack.c.b16 %v2964, %v2963
        %v3094 = vpack.c.b16 %v2966, %v2965
        %v3095 = vpack.c.b16 %v2968, %v2967
        %v3096 = vpack.c.b16 %v2970, %v2969
        %v3097 = vpack.c.b16 %v2972, %v2971
        %v3098 = vpack.c.b16 %v2974, %v2973
        %v3099 = vpack.c.b16 %v2976, %v2975
        %v3100 = vpack.c.b16 %v2978, %v2977
        %v3101 = vpack.c.b16 %v2980, %v2979
        %v3102 = vpack.c.b16 %v2982, %v2981
        %v3103 = vpack.c.b16 %v2984, %v2983
        %v3104 = vpack.c.b16 %v2986, %v2985
        %v3105 = vpack.c.b16 %v2988, %v2987
        %v3106 = vpack.c.b16 %v2990, %v2989
        %v3107 = vpack.c.b16 %v2992, %v2991
        %v3108 = vpack.c.b16 %v2994, %v2993
        %v3109 = vpack.c.b16 %v2996, %v2995
        %v3110 = vpack.c.b16 %v2998, %v2997
        %v3111 = vpack.c.b16 %v3000, %v2999
        %v3112 = vpack.c.b16 %v3002, %v3001
        %v3113 = vpack.c.b16 %v3004, %v3003
        %v3114 = vpack.c.b16 %v3006, %v3005
        %v3115 = vpack.c.b16 %v3008, %v3007
        %v3116 = vpack.c.b16 %v3010, %v3009
        %v3117 = vpack.c.b16 %v3012, %v3011
        %v3118 = vpack.c.b16 %v3014, %v3013
        %v3119 = vpack.c.b16 %v3016, %v3015
        %v3120 = vpack.c.b16 %v3018, %v3017
        %v3121 = vpack.c.b16 %v3020, %v3019
        %v3122 = vpack.c.b16 %v3022, %v3021
        %v3123 = vpack.c.b16 %v3024, %v3023
        %v3124 = vpack.c.b16 %v3026, %v3025
        %v3125 = vpack.c.b16 %v3028, %v3027
        %v3126 = vpack.c.b16 %v3030, %v3029
        %v3127 = vpack.c.b16 %v3032, %v3031
        %v3128 = vpack.c.b16 %v3034, %v3033
        %v3129 = vpack.c.b16 %v3036, %v3035
        %v3130 = vpack.c.b16 %v3038, %v3037
        %v3131 = vpack.c.b16 %v3040, %v3039
        %v3132 = vpack.c.b16 %v3042, %v3041
        %v3133 = vpack.c.b16 %v3044, %v3043
        %v3134 = vpack.c.b16 %v3046, %v3045
        %v3135 = vpack.c.b16 %v3048, %v3047
        %v3136 = vpack.c.b16 %v3050, %v3049
        %v3137 = vpack.c.b16 %v3052, %v3051
        %v3138 = vpack.c.b16 %v3054, %v3053
        %v3139 = vpack.c.b16 %v3056, %v3055
        %v3140 = vpack.c.b16 %v3058, %v3057
        %v3141 = vpack.c.b16 %v3060, %v3059
        %v3142 = vpack.c.b16 %v3062, %v3061
        %v3143 = vpack.c.b16 %v3064, %v3063
        %v3144 = vpack.c.b16 %v3066, %v3065
        %v3145 = vpack.c.b16 %v3068, %v3067
        %v3146 = vpack.c.b16 %v3070, %v3069
        %v3147 = vpack.c.b16 %v3072, %v3071
        %v3148 = vpack.c.b16 %v3074, %v3073
        %v3149 = vpack.c.b16 %v3076, %v3075
        %v3150 = vpack.c.b16 %v3078, %v3077
        %3223 = vmatprep.subr.bf16.mxu0 0
        %3224 = vmatpush1.bf16.msra.mxu0 %v3079
        %3225 = vmatprep.subr.bf16.mxu0 0
        %3226 = vmatpush1.bf16.msra.mxu0 %v3080
        %3227 = vmatprep.subr.bf16.mxu0 0
        %3228 = vmatpush1.bf16.msra.mxu0 %v3081
        %3229 = vmatprep.subr.bf16.mxu0 0
        %3230 = vmatpush1.bf16.msra.mxu0 %v3082
        %3231 = vmatprep.subr.bf16.mxu0 0
        %3232 = vmatpush1.bf16.msra.mxu0 %v3083
        %3233 = vmatprep.subr.bf16.mxu0 0
        %3234 = vmatpush1.bf16.msra.mxu0 %v3084
        %3235 = vmatprep.subr.bf16.mxu0 0
        %3236 = vmatpush1.bf16.msra.mxu0 %v3085
        %3237 = vmatprep.subr.bf16.mxu0 0
        %3238 = vmatpush1.bf16.msra.mxu0 %v3086
        %3239 = vmatprep.subr.bf16.mxu0 0
        %3240 = vmatpush1.bf16.msra.mxu0 %v3087
        %3241 = vmatprep.subr.bf16.mxu0 0
        %3242 = vmatpush1.bf16.msra.mxu0 %v3088
        %3243 = vmatprep.subr.bf16.mxu0 0
        %3244 = vmatpush1.bf16.msra.mxu0 %v3089
        %3245 = vmatprep.subr.bf16.mxu0 0
        %3246 = vmatpush1.bf16.msra.mxu0 %v3090
        %3247 = vmatprep.subr.bf16.mxu0 0
        %3248 = vmatpush1.bf16.msra.mxu0 %v3091
        %3249 = vmatprep.subr.bf16.mxu0 0
        %3250 = vmatpush1.bf16.msra.mxu0 %v3092
        %3251 = vmatprep.subr.bf16.mxu0 0
        %3252 = vmatpush1.bf16.msra.mxu0 %v3093
        %3253 = vmatprep.subr.bf16.mxu0 0
        %3254 = vmatpush1.bf16.msra.mxu0 %v3094
        %3255 = vmatprep.mubr.bf16.mxu0 %v1409
        %3256 = vmatmul.mubr.bf16.gmra.mrb[0].mxu0 %v1317
        %v3257 = vpop.f32.mrb[0].mxu0
        %v3258 = vadd.f32 0.0, %v3257
        %v3259 = vpop.f32.mrb[0].mxu0
        %v3260 = vpop.f32.mrb[0].mxu0
        %v3261 = vadd.f32 0.0, %v3260
        %v3262 = vpop.f32.mrb[0].mxu0
        %3263 = vmatprep.mubr.bf16.mxu0 %v1421
        %3264 = vmatmul.mubr.bf16.gmra.mrb[0].mxu0 %v1318
        %v3265 = vpop.f32.mrb[0].mxu0
        %v3266 = vadd.f32 0.0, %v3265
        %v3267 = vpop.f32.mrb[0].mxu0
        %v3268 = vpop.f32.mrb[0].mxu0
        %v3269 = vadd.f32 0.0, %v3268
        %v3270 = vpop.f32.mrb[0].mxu0
        %3271 = vmatprep.mubr.bf16.mxu0 %v1433
        %3272 = vmatmul.mubr.bf16.gmra.mrb[0].mxu0 %v1319
        %v3273 = vpop.f32.mrb[0].mxu0
        %v3274 = vadd.f32 0.0, %v3273
        %v3275 = vpop.f32.mrb[0].mxu0
        %v3276 = vpop.f32.mrb[0].mxu0
        %v3277 = vadd.f32 0.0, %v3276
        %v3278 = vpop.f32.mrb[0].mxu0
        %3279 = vmatprep.mubr.bf16.mxu0 %v1445
        %3280 = vmatmul.mubr.bf16.gmra.mrb[0].mxu0 %v1320
        %v3281 = vpop.f32.mrb[0].mxu0
        %v3282 = vadd.f32 0.0, %v3281
        %v3283 = vpop.f32.mrb[0].mxu0
        %v3284 = vpop.f32.mrb[0].mxu0
        %v3285 = vadd.f32 0.0, %v3284
        %v3286 = vpop.f32.mrb[0].mxu0
        %3287 = vmatprep.mubr.bf16.mxu0 %v1457
        %3288 = vmatmul.mubr.bf16.gmra.mrb[0].mxu0 %v1321
        %v3289 = vpop.f32.mrb[0].mxu0
        %v3290 = vadd.f32 0.0, %v3289
        %v3291 = vpop.f32.mrb[0].mxu0
        %v3292 = vpop.f32.mrb[0].mxu0
        %v3293 = vadd.f32 0.0, %v3292
        %v3294 = vpop.f32.mrb[0].mxu0
        %3295 = vmatprep.mubr.bf16.mxu0 %v1469
        %3296 = vmatmul.mubr.bf16.gmra.mrb[0].mxu0 %v1322
        %v3297 = vpop.f32.mrb[0].mxu0
        %v3298 = vadd.f32 0.0, %v3297
        %v3299 = vpop.f32.mrb[0].mxu0
        %v3300 = vpop.f32.mrb[0].mxu0
        %v3301 = vadd.f32 0.0, %v3300
        %v3302 = vpop.f32.mrb[0].mxu0
        %3303 = vmatprep.mubr.bf16.mxu0 %v1481
        %3304 = vmatmul.mubr.bf16.gmra.mrb[0].mxu0 %v1323
        %v3305 = vpop.f32.mrb[0].mxu0
        %v3306 = vadd.f32 0.0, %v3305
        %v3307 = vpop.f32.mrb[0].mxu0
        %v3308 = vpop.f32.mrb[0].mxu0
        %v3309 = vadd.f32 0.0, %v3308
        %v3310 = vpop.f32.mrb[0].mxu0
        %3311 = vmatprep.mubr.bf16.mxu0 %v1493
        %3312 = vmatmul.mubr.bf16.gmra.mrb[0].mxu0 %v1324
        %v3313 = vpop.f32.mrb[0].mxu0
        %v3314 = vadd.f32 0.0, %v3313
        %v3315 = vpop.f32.mrb[0].mxu0
        %v3316 = vpop.f32.mrb[0].mxu0
        %v3317 = vadd.f32 0.0, %v3316
        %v3318 = vpop.f32.mrb[0].mxu0
        %3319 = vmatprep.mubr.bf16.mxu0 %v1505
        %3320 = vmatmul.mubr.bf16.gmra.mrb[0].mxu0 %v1325
        %v3321 = vpop.f32.mrb[0].mxu0
        %v3322 = vadd.f32 0.0, %v3321
        %v3323 = vpop.f32.mrb[0].mxu0
        %v3324 = vpop.f32.mrb[0].mxu0
        %v3325 = vadd.f32 0.0, %v3324
        %v3326 = vpop.f32.mrb[0].mxu0
        %3327 = vmatprep.mubr.bf16.mxu0 %v1517
        %3328 = vmatmul.mubr.bf16.gmra.mrb[0].mxu0 %v1326
        %v3329 = vpop.f32.mrb[0].mxu0
        %v3330 = vadd.f32 0.0, %v3329
        %v3331 = vpop.f32.mrb[0].mxu0
        %v3332 = vpop.f32.mrb[0].mxu0
        %v3333 = vadd.f32 0.0, %v3332
        %v3334 = vpop.f32.mrb[0].mxu0
        %3335 = vmatprep.mubr.bf16.mxu0 %v1529
        %3336 = vmatmul.mubr.bf16.gmra.mrb[0].mxu0 %v1327
        %v3337 = vpop.f32.mrb[0].mxu0
        %v3338 = vadd.f32 0.0, %v3337
        %v3339 = vpop.f32.mrb[0].mxu0
        %v3340 = vpop.f32.mrb[0].mxu0
        %v3341 = vadd.f32 0.0, %v3340
        %v3342 = vpop.f32.mrb[0].mxu0
        %3343 = vmatprep.mubr.bf16.mxu0 %v1541
        %3344 = vmatmul.mubr.bf16.gmra.mrb[0].mxu0 %v1328
        %v3345 = vpop.f32.mrb[0].mxu0
        %v3346 = vadd.f32 0.0, %v3345
        %v3347 = vpop.f32.mrb[0].mxu0
        %v3348 = vpop.f32.mrb[0].mxu0
        %v3349 = vadd.f32 0.0, %v3348
        %v3350 = vpop.f32.mrb[0].mxu0
        %3351 = vmatprep.mubr.bf16.mxu0 %v1553
        %3352 = vmatmul.mubr.bf16.gmra.mrb[0].mxu0 %v1329
        %v3353 = vpop.f32.mrb[0].mxu0
        %v3354 = vadd.f32 0.0, %v3353
        %v3355 = vpop.f32.mrb[0].mxu0
        %v3356 = vpop.f32.mrb[0].mxu0
        %v3357 = vadd.f32 0.0, %v3356
        %v3358 = vpop.f32.mrb[0].mxu0
        %3359 = vmatprep.mubr.bf16.mxu0 %v1565
        %3360 = vmatmul.mubr.bf16.gmra.mrb[0].mxu0 %v1330
        %v3361 = vpop.f32.mrb[0].mxu0
        %v3362 = vadd.f32 0.0, %v3361
        %v3363 = vpop.f32.mrb[0].mxu0
        %v3364 = vpop.f32.mrb[0].mxu0
        %v3365 = vadd.f32 0.0, %v3364
        %v3366 = vpop.f32.mrb[0].mxu0
        %3367 = vmatprep.mubr.bf16.mxu0 %v1577
        %3368 = vmatmul.mubr.bf16.gmra.mrb[0].mxu0 %v1331
        %v3369 = vpop.f32.mrb[0].mxu0
        %v3370 = vadd.f32 0.0, %v3369
        %v3371 = vpop.f32.mrb[0].mxu0
        %v3372 = vpop.f32.mrb[0].mxu0
        %v3373 = vadd.f32 0.0, %v3372
        %v3374 = vpop.f32.mrb[0].mxu0
        %3375 = vmatprep.mubr.bf16.mxu0 %v1589
        %3376 = vmatmul.mubr.bf16.gmra.mrb[0].mxu0 %v1332
        %v3377 = vpop.f32.mrb[0].mxu0
        %v3378 = vadd.f32 0.0, %v3377
        %v3379 = vpop.f32.mrb[0].mxu0
        %v3380 = vpop.f32.mrb[0].mxu0
        %v3381 = vadd.f32 0.0, %v3380
        %v3382 = vpop.f32.mrb[0].mxu0
        %3383 = vdwg.mxu0
        %3384 = vmatprep.subr.bf16.mxu0 0
        %3385 = vmatpush1.bf16.msra.mxu0 %v3095
        %3386 = vmatprep.subr.bf16.mxu0 0
        %3387 = vmatpush1.bf16.msra.mxu0 %v3096
        %3388 = vmatprep.subr.bf16.mxu0 0
        %3389 = vmatpush1.bf16.msra.mxu0 %v3097
        %3390 = vmatprep.subr.bf16.mxu0 0
        %3391 = vmatpush1.bf16.msra.mxu0 %v3098
        %3392 = vmatprep.subr.bf16.mxu0 0
        %3393 = vmatpush1.bf16.msra.mxu0 %v3099
        %3394 = vmatprep.subr.bf16.mxu0 0
        %3395 = vmatpush1.bf16.msra.mxu0 %v3100
        %3396 = vmatprep.subr.bf16.mxu0 0
        %3397 = vmatpush1.bf16.msra.mxu0 %v3101
        %3398 = vmatprep.subr.bf16.mxu0 0
        %3399 = vmatpush1.bf16.msra.mxu0 %v3102
        %3400 = vmatprep.subr.bf16.mxu0 0
        %3401 = vmatpush1.bf16.msra.mxu0 %v3103
        %3402 = vmatprep.subr.bf16.mxu0 0
        %3403 = vmatpush1.bf16.msra.mxu0 %v3104
        %3404 = vmatprep.subr.bf16.mxu0 0
        %3405 = vmatpush1.bf16.msra.mxu0 %v3105
        %3406 = vmatprep.subr.bf16.mxu0 0
        %3407 = vmatpush1.bf16.msra.mxu0 %v3106
        %3408 = vmatprep.subr.bf16.mxu0 0
        %3409 = vmatpush1.bf16.msra.mxu0 %v3107
        %3410 = vmatprep.subr.bf16.mxu0 0
        %3411 = vmatpush1.bf16.msra.mxu0 %v3108
        %3412 = vmatprep.subr.bf16.mxu0 0
        %3413 = vmatpush1.bf16.msra.mxu0 %v3109
        %3414 = vmatprep.subr.bf16.mxu0 0
        %3415 = vmatpush1.bf16.msra.mxu0 %v3110
        %3416 = vmatprep.mubr.bf16.mxu0 %v1783
        %3417 = vmatmul.mubr.bf16.gmra.mrb[0].mxu0 %v1657
        %v3418 = vpop.f32.mrb[0].mxu0
        %v3419 = vadd.f32 %v3258, %v3418
        %v3420 = vpop.f32.mrb[0].mxu0
        %v3421 = vpop.f32.mrb[0].mxu0
        %v3422 = vadd.f32 %v3261, %v3421
        %v3423 = vpop.f32.mrb[0].mxu0
        %3424 = vmatprep.mubr.bf16.mxu0 %v1784
        %3425 = vmatmul.mubr.bf16.gmra.mrb[0].mxu0 %v1660
        %v3426 = vpop.f32.mrb[0].mxu0
        %v3427 = vadd.f32 %v3266, %v3426
        %v3428 = vpop.f32.mrb[0].mxu0
        %v3429 = vpop.f32.mrb[0].mxu0
        %v3430 = vadd.f32 %v3269, %v3429
        %v3431 = vpop.f32.mrb[0].mxu0
        %3432 = vmatprep.mubr.bf16.mxu0 %v1785
        %3433 = vmatmul.mubr.bf16.gmra.mrb[0].mxu0 %v1663
        %v3434 = vpop.f32.mrb[0].mxu0
        %v3435 = vadd.f32 %v3274, %v3434
        %v3436 = vpop.f32.mrb[0].mxu0
        %v3437 = vpop.f32.mrb[0].mxu0
        %v3438 = vadd.f32 %v3277, %v3437
        %v3439 = vpop.f32.mrb[0].mxu0
        %3440 = vmatprep.mubr.bf16.mxu0 %v1786
        %3441 = vmatmul.mubr.bf16.gmra.mrb[0].mxu0 %v1666
        %v3442 = vpop.f32.mrb[0].mxu0
        %v3443 = vadd.f32 %v3282, %v3442
        %v3444 = vpop.f32.mrb[0].mxu0
        %v3445 = vpop.f32.mrb[0].mxu0
        %v3446 = vadd.f32 %v3285, %v3445
        %v3447 = vpop.f32.mrb[0].mxu0
        %3448 = vmatprep.mubr.bf16.mxu0 %v1787
        %3449 = vmatmul.mubr.bf16.gmra.mrb[0].mxu0 %v1669
        %v3450 = vpop.f32.mrb[0].mxu0
        %v3451 = vadd.f32 %v3290, %v3450
        %v3452 = vpop.f32.mrb[0].mxu0
        %v3453 = vpop.f32.mrb[0].mxu0
        %v3454 = vadd.f32 %v3293, %v3453
        %v3455 = vpop.f32.mrb[0].mxu0
        %3456 = vmatprep.mubr.bf16.mxu0 %v1788
        %3457 = vmatmul.mubr.bf16.gmra.mrb[0].mxu0 %v1672
        %v3458 = vpop.f32.mrb[0].mxu0
        %v3459 = vadd.f32 %v3298, %v3458
        %v3460 = vpop.f32.mrb[0].mxu0
        %v3461 = vpop.f32.mrb[0].mxu0
        %v3462 = vadd.f32 %v3301, %v3461
        %v3463 = vpop.f32.mrb[0].mxu0
        %3464 = vmatprep.mubr.bf16.mxu0 %v1789
        %3465 = vmatmul.mubr.bf16.gmra.mrb[0].mxu0 %v1675
        %v3466 = vpop.f32.mrb[0].mxu0
        %v3467 = vadd.f32 %v3306, %v3466
        %v3468 = vpop.f32.mrb[0].mxu0
        %v3469 = vpop.f32.mrb[0].mxu0
        %v3470 = vadd.f32 %v3309, %v3469
        %v3471 = vpop.f32.mrb[0].mxu0
        %3472 = vmatprep.mubr.bf16.mxu0 %v1790
        %3473 = vmatmul.mubr.bf16.gmra.mrb[0].mxu0 %v1678
        %v3474 = vpop.f32.mrb[0].mxu0
        %v3475 = vadd.f32 %v3314, %v3474
        %v3476 = vpop.f32.mrb[0].mxu0
        %v3477 = vpop.f32.mrb[0].mxu0
        %v3478 = vadd.f32 %v3317, %v3477
        %v3479 = vpop.f32.mrb[0].mxu0
        %3480 = vmatprep.mubr.bf16.mxu0 %v1791
        %3481 = vmatmul.mubr.bf16.gmra.mrb[0].mxu0 %v1681
        %v3482 = vpop.f32.mrb[0].mxu0
        %v3483 = vadd.f32 %v3322, %v3482
        %v3484 = vpop.f32.mrb[0].mxu0
        %v3485 = vpop.f32.mrb[0].mxu0
        %v3486 = vadd.f32 %v3325, %v3485
        %v3487 = vpop.f32.mrb[0].mxu0
        %3488 = vmatprep.mubr.bf16.mxu0 %v1792
        %3489 = vmatmul.mubr.bf16.gmra.mrb[0].mxu0 %v1684
        %v3490 = vpop.f32.mrb[0].mxu0
        %v3491 = vadd.f32 %v3330, %v3490
        %v3492 = vpop.f32.mrb[0].mxu0
        %v3493 = vpop.f32.mrb[0].mxu0
        %v3494 = vadd.f32 %v3333, %v3493
        %v3495 = vpop.f32.mrb[0].mxu0
        %3496 = vmatprep.mubr.bf16.mxu0 %v1793
        %3497 = vmatmul.mubr.bf16.gmra.mrb[0].mxu0 %v1687
        %v3498 = vpop.f32.mrb[0].mxu0
        %v3499 = vadd.f32 %v3338, %v3498
        %v3500 = vpop.f32.mrb[0].mxu0
        %v3501 = vpop.f32.mrb[0].mxu0
        %v3502 = vadd.f32 %v3341, %v3501
        %v3503 = vpop.f32.mrb[0].mxu0
        %3504 = vmatprep.mubr.bf16.mxu0 %v1794
        %3505 = vmatmul.mubr.bf16.gmra.mrb[0].mxu0 %v1690
        %v3506 = vpop.f32.mrb[0].mxu0
        %v3507 = vadd.f32 %v3346, %v3506
        %v3508 = vpop.f32.mrb[0].mxu0
        %v3509 = vpop.f32.mrb[0].mxu0
        %v3510 = vadd.f32 %v3349, %v3509
        %v3511 = vpop.f32.mrb[0].mxu0
        %3512 = vmatprep.mubr.bf16.mxu0 %v1795
        %3513 = vmatmul.mubr.bf16.gmra.mrb[0].mxu0 %v1693
        %v3514 = vpop.f32.mrb[0].mxu0
        %v3515 = vadd.f32 %v3354, %v3514
        %v3516 = vpop.f32.mrb[0].mxu0
        %v3517 = vpop.f32.mrb[0].mxu0
        %v3518 = vadd.f32 %v3357, %v3517
        %v3519 = vpop.f32.mrb[0].mxu0
        %3520 = vmatprep.mubr.bf16.mxu0 %v1796
        %3521 = vmatmul.mubr.bf16.gmra.mrb[0].mxu0 %v1696
        %v3522 = vpop.f32.mrb[0].mxu0
        %v3523 = vadd.f32 %v3362, %v3522
        %v3524 = vpop.f32.mrb[0].mxu0
        %v3525 = vpop.f32.mrb[0].mxu0
        %v3526 = vadd.f32 %v3365, %v3525
        %v3527 = vpop.f32.mrb[0].mxu0
        %3528 = vmatprep.mubr.bf16.mxu0 %v1797
        %3529 = vmatmul.mubr.bf16.gmra.mrb[0].mxu0 %v1699
        %v3530 = vpop.f32.mrb[0].mxu0
        %v3531 = vadd.f32 %v3370, %v3530
        %v3532 = vpop.f32.mrb[0].mxu0
        %v3533 = vpop.f32.mrb[0].mxu0
        %v3534 = vadd.f32 %v3373, %v3533
        %v3535 = vpop.f32.mrb[0].mxu0
        %3536 = vmatprep.mubr.bf16.mxu0 %v1798
        %3537 = vmatmul.mubr.bf16.gmra.mrb[0].mxu0 %v1702
        %v3538 = vpop.f32.mrb[0].mxu0
        %v3539 = vadd.f32 %v3378, %v3538
        %v3540 = vpop.f32.mrb[0].mxu0
        %v3541 = vpop.f32.mrb[0].mxu0
        %v3542 = vadd.f32 %v3381, %v3541
        %v3543 = vpop.f32.mrb[0].mxu0
        %3544 = vdwg.mxu0
        %3545 = vmatprep.subr.bf16.mxu0 0
        %3546 = vmatpush1.bf16.msra.mxu0 %v3111
        %3547 = vmatprep.subr.bf16.mxu0 0
        %3548 = vmatpush1.bf16.msra.mxu0 %v3112
        %3549 = vmatprep.subr.bf16.mxu0 0
        %3550 = vmatpush1.bf16.msra.mxu0 %v3113
        %3551 = vmatprep.subr.bf16.mxu0 0
        %3552 = vmatpush1.bf16.msra.mxu0 %v3114
        %3553 = vmatprep.subr.bf16.mxu0 0
        %3554 = vmatpush1.bf16.msra.mxu0 %v3115
        %3555 = vmatprep.subr.bf16.mxu0 0
        %3556 = vmatpush1.bf16.msra.mxu0 %v3116
        %3557 = vmatprep.subr.bf16.mxu0 0
        %3558 = vmatpush1.bf16.msra.mxu0 %v3117
        %3559 = vmatprep.subr.bf16.mxu0 0
        %3560 = vmatpush1.bf16.msra.mxu0 %v3118
        %3561 = vmatprep.subr.bf16.mxu0 0
        %3562 = vmatpush1.bf16.msra.mxu0 %v3119
        %3563 = vmatprep.subr.bf16.mxu0 0
        %3564 = vmatpush1.bf16.msra.mxu0 %v3120
        %3565 = vmatprep.subr.bf16.mxu0 0
        %3566 = vmatpush1.bf16.msra.mxu0 %v3121
        %3567 = vmatprep.subr.bf16.mxu0 0
        %3568 = vmatpush1.bf16.msra.mxu0 %v3122
        %3569 = vmatprep.subr.bf16.mxu0 0
        %3570 = vmatpush1.bf16.msra.mxu0 %v3123
        %3571 = vmatprep.subr.bf16.mxu0 0
        %3572 = vmatpush1.bf16.msra.mxu0 %v3124
        %3573 = vmatprep.subr.bf16.mxu0 0
        %3574 = vmatpush1.bf16.msra.mxu0 %v3125
        %3575 = vmatprep.subr.bf16.mxu0 0
        %3576 = vmatpush1.bf16.msra.mxu0 %v3126
        %3577 = vmatprep.mubr.bf16.mxu0 %v2121
        %3578 = vmatmul.mubr.bf16.gmra.mrb[0].mxu0 %v1874
        %v3579 = vpop.f32.mrb[0].mxu0
        %v3580 = vadd.f32 %v3419, %v3579
        %v3581 = vpop.f32.mrb[0].mxu0
        %v3582 = vpop.f32.mrb[0].mxu0
        %v3583 = vadd.f32 %v3422, %v3582
        %v3584 = vpop.f32.mrb[0].mxu0
        %3585 = vmatprep.mubr.bf16.mxu0 %v2124
        %3586 = vmatmul.mubr.bf16.gmra.mrb[0].mxu0 %v1886
        %v3587 = vpop.f32.mrb[0].mxu0
        %v3588 = vadd.f32 %v3427, %v3587
        %v3589 = vpop.f32.mrb[0].mxu0
        %v3590 = vpop.f32.mrb[0].mxu0
        %v3591 = vadd.f32 %v3430, %v3590
        %v3592 = vpop.f32.mrb[0].mxu0
        %3593 = vmatprep.mubr.bf16.mxu0 %v2127
        %3594 = vmatmul.mubr.bf16.gmra.mrb[0].mxu0 %v1898
        %v3595 = vpop.f32.mrb[0].mxu0
        %v3596 = vadd.f32 %v3435, %v3595
        %v3597 = vpop.f32.mrb[0].mxu0
        %v3598 = vpop.f32.mrb[0].mxu0
        %v3599 = vadd.f32 %v3438, %v3598
        %v3600 = vpop.f32.mrb[0].mxu0
        %3601 = vmatprep.mubr.bf16.mxu0 %v2130
        %3602 = vmatmul.mubr.bf16.gmra.mrb[0].mxu0 %v1910
        %v3603 = vpop.f32.mrb[0].mxu0
        %v3604 = vadd.f32 %v3443, %v3603
        %v3605 = vpop.f32.mrb[0].mxu0
        %v3606 = vpop.f32.mrb[0].mxu0
        %v3607 = vadd.f32 %v3446, %v3606
        %v3608 = vpop.f32.mrb[0].mxu0
        %3609 = vmatprep.mubr.bf16.mxu0 %v2133
        %3610 = vmatmul.mubr.bf16.gmra.mrb[0].mxu0 %v1922
        %v3611 = vpop.f32.mrb[0].mxu0
        %v3612 = vadd.f32 %v3451, %v3611
        %v3613 = vpop.f32.mrb[0].mxu0
        %v3614 = vpop.f32.mrb[0].mxu0
        %v3615 = vadd.f32 %v3454, %v3614
        %v3616 = vpop.f32.mrb[0].mxu0
        %3617 = vmatprep.mubr.bf16.mxu0 %v2136
        %3618 = vmatmul.mubr.bf16.gmra.mrb[0].mxu0 %v1934
        %v3619 = vpop.f32.mrb[0].mxu0
        %v3620 = vadd.f32 %v3459, %v3619
        %v3621 = vpop.f32.mrb[0].mxu0
        %v3622 = vpop.f32.mrb[0].mxu0
        %v3623 = vadd.f32 %v3462, %v3622
        %v3624 = vpop.f32.mrb[0].mxu0
        %3625 = vmatprep.mubr.bf16.mxu0 %v2139
        %3626 = vmatmul.mubr.bf16.gmra.mrb[0].mxu0 %v1946
        %v3627 = vpop.f32.mrb[0].mxu0
        %v3628 = vadd.f32 %v3467, %v3627
        %v3629 = vpop.f32.mrb[0].mxu0
        %v3630 = vpop.f32.mrb[0].mxu0
        %v3631 = vadd.f32 %v3470, %v3630
        %v3632 = vpop.f32.mrb[0].mxu0
        %3633 = vmatprep.mubr.bf16.mxu0 %v2142
        %3634 = vmatmul.mubr.bf16.gmra.mrb[0].mxu0 %v1958
        %v3635 = vpop.f32.mrb[0].mxu0
        %v3636 = vadd.f32 %v3475, %v3635
        %v3637 = vpop.f32.mrb[0].mxu0
        %v3638 = vpop.f32.mrb[0].mxu0
        %v3639 = vadd.f32 %v3478, %v3638
        %v3640 = vpop.f32.mrb[0].mxu0
        %3641 = vmatprep.mubr.bf16.mxu0 %v2145
        %3642 = vmatmul.mubr.bf16.gmra.mrb[0].mxu0 %v1970
        %v3643 = vpop.f32.mrb[0].mxu0
        %v3644 = vadd.f32 %v3483, %v3643
        %v3645 = vpop.f32.mrb[0].mxu0
        %v3646 = vpop.f32.mrb[0].mxu0
        %v3647 = vadd.f32 %v3486, %v3646
        %v3648 = vpop.f32.mrb[0].mxu0
        %3649 = vmatprep.mubr.bf16.mxu0 %v2148
        %3650 = vmatmul.mubr.bf16.gmra.mrb[0].mxu0 %v1982
        %v3651 = vpop.f32.mrb[0].mxu0
        %v3652 = vadd.f32 %v3491, %v3651
        %v3653 = vpop.f32.mrb[0].mxu0
        %v3654 = vpop.f32.mrb[0].mxu0
        %v3655 = vadd.f32 %v3494, %v3654
        %v3656 = vpop.f32.mrb[0].mxu0
        %3657 = vmatprep.mubr.bf16.mxu0 %v2151
        %3658 = vmatmul.mubr.bf16.gmra.mrb[0].mxu0 %v1994
        %v3659 = vpop.f32.mrb[0].mxu0
        %v3660 = vadd.f32 %v3499, %v3659
        %v3661 = vpop.f32.mrb[0].mxu0
        %v3662 = vpop.f32.mrb[0].mxu0
        %v3663 = vadd.f32 %v3502, %v3662
        %v3664 = vpop.f32.mrb[0].mxu0
        %3665 = vmatprep.mubr.bf16.mxu0 %v2154
        %3666 = vmatmul.mubr.bf16.gmra.mrb[0].mxu0 %v2006
        %v3667 = vpop.f32.mrb[0].mxu0
        %v3668 = vadd.f32 %v3507, %v3667
        %v3669 = vpop.f32.mrb[0].mxu0
        %v3670 = vpop.f32.mrb[0].mxu0
        %v3671 = vadd.f32 %v3510, %v3670
        %v3672 = vpop.f32.mrb[0].mxu0
        %3673 = vmatprep.mubr.bf16.mxu0 %v2157
        %3674 = vmatmul.mubr.bf16.gmra.mrb[0].mxu0 %v2018
        %v3675 = vpop.f32.mrb[0].mxu0
        %v3676 = vadd.f32 %v3515, %v3675
        %v3677 = vpop.f32.mrb[0].mxu0
        %v3678 = vpop.f32.mrb[0].mxu0
        %v3679 = vadd.f32 %v3518, %v3678
        %v3680 = vpop.f32.mrb[0].mxu0
        %3681 = vmatprep.mubr.bf16.mxu0 %v2160
        %3682 = vmatmul.mubr.bf16.gmra.mrb[0].mxu0 %v2030
        %v3683 = vpop.f32.mrb[0].mxu0
        %v3684 = vadd.f32 %v3523, %v3683
        %v3685 = vpop.f32.mrb[0].mxu0
        %v3686 = vpop.f32.mrb[0].mxu0
        %v3687 = vadd.f32 %v3526, %v3686
        %v3688 = vpop.f32.mrb[0].mxu0
        %3689 = vmatprep.mubr.bf16.mxu0 %v2163
        %3690 = vmatmul.mubr.bf16.gmra.mrb[0].mxu0 %v2042
        %v3691 = vpop.f32.mrb[0].mxu0
        %v3692 = vadd.f32 %v3531, %v3691
        %v3693 = vpop.f32.mrb[0].mxu0
        %v3694 = vpop.f32.mrb[0].mxu0
        %v3695 = vadd.f32 %v3534, %v3694
        %v3696 = vpop.f32.mrb[0].mxu0
        %3697 = vmatprep.mubr.bf16.mxu0 %v2166
        %3698 = vmatmul.mubr.bf16.gmra.mrb[0].mxu0 %v2054
        %v3699 = vpop.f32.mrb[0].mxu0
        %v3700 = vadd.f32 %v3539, %v3699
        %v3701 = vpop.f32.mrb[0].mxu0
        %v3702 = vpop.f32.mrb[0].mxu0
        %v3703 = vadd.f32 %v3542, %v3702
        %v3704 = vpop.f32.mrb[0].mxu0
        %3705 = vdwg.mxu0
        %3706 = vmatprep.subr.bf16.mxu0 0
        %3707 = vmatpush1.bf16.msra.mxu0 %v3127
        %3708 = vmatprep.subr.bf16.mxu0 0
        %3709 = vmatpush1.bf16.msra.mxu0 %v3128
        %3710 = vmatprep.subr.bf16.mxu0 0
        %3711 = vmatpush1.bf16.msra.mxu0 %v3129
        %3712 = vmatprep.subr.bf16.mxu0 0
        %3713 = vmatpush1.bf16.msra.mxu0 %v3130
        %3714 = vmatprep.subr.bf16.mxu0 0
        %3715 = vmatpush1.bf16.msra.mxu0 %v3131
        %3716 = vmatprep.subr.bf16.mxu0 0
        %3717 = vmatpush1.bf16.msra.mxu0 %v3132
        %3718 = vmatprep.subr.bf16.mxu0 0
        %3719 = vmatpush1.bf16.msra.mxu0 %v3133
        %3720 = vmatprep.subr.bf16.mxu0 0
        %3721 = vmatpush1.bf16.msra.mxu0 %v3134
        %3722 = vmatprep.subr.bf16.mxu0 0
        %3723 = vmatpush1.bf16.msra.mxu0 %v3135
        %3724 = vmatprep.subr.bf16.mxu0 0
        %3725 = vmatpush1.bf16.msra.mxu0 %v3136
        %3726 = vmatprep.subr.bf16.mxu0 0
        %3727 = vmatpush1.bf16.msra.mxu0 %v3137
        %3728 = vmatprep.subr.bf16.mxu0 0
        %3729 = vmatpush1.bf16.msra.mxu0 %v3138
        %3730 = vmatprep.subr.bf16.mxu0 0
        %3731 = vmatpush1.bf16.msra.mxu0 %v3139
        %3732 = vmatprep.subr.bf16.mxu0 0
        %3733 = vmatpush1.bf16.msra.mxu0 %v3140
        %3734 = vmatprep.subr.bf16.mxu0 0
        %3735 = vmatpush1.bf16.msra.mxu0 %v3141
        %3736 = vmatprep.subr.bf16.mxu0 0
        %3737 = vmatpush1.bf16.msra.mxu0 %v3142
        %3738 = vmatprep.mubr.bf16.mxu0 %v2338
        %3739 = vmatmul.mubr.bf16.gmra.mrb[0].mxu0 %v2247
        %v3740 = vpop.f32.mrb[0].mxu0
        %v3741 = vadd.f32 %v3580, %v3740
        %v3742 = vpop.f32.mrb[0].mxu0
        %v3743 = vpop.f32.mrb[0].mxu0
        %v3744 = vadd.f32 %v3583, %v3743
        %v3745 = vpop.f32.mrb[0].mxu0
        %3746 = vmatprep.mubr.bf16.mxu0 %v2350
        %3747 = vmatmul.mubr.bf16.gmra.mrb[0].mxu0 %v2248
        %v3748 = vpop.f32.mrb[0].mxu0
        %v3749 = vadd.f32 %v3588, %v3748
        %v3750 = vpop.f32.mrb[0].mxu0
        %v3751 = vpop.f32.mrb[0].mxu0
        %v3752 = vadd.f32 %v3591, %v3751
        %v3753 = vpop.f32.mrb[0].mxu0
        %3754 = vmatprep.mubr.bf16.mxu0 %v2362
        %3755 = vmatmul.mubr.bf16.gmra.mrb[0].mxu0 %v2249
        %v3756 = vpop.f32.mrb[0].mxu0
        %v3757 = vadd.f32 %v3596, %v3756
        %v3758 = vpop.f32.mrb[0].mxu0
        %v3759 = vpop.f32.mrb[0].mxu0
        %v3760 = vadd.f32 %v3599, %v3759
        %v3761 = vpop.f32.mrb[0].mxu0
        %3762 = vmatprep.mubr.bf16.mxu0 %v2374
        %3763 = vmatmul.mubr.bf16.gmra.mrb[0].mxu0 %v2250
        %v3764 = vpop.f32.mrb[0].mxu0
        %v3765 = vadd.f32 %v3604, %v3764
        %v3766 = vpop.f32.mrb[0].mxu0
        %v3767 = vpop.f32.mrb[0].mxu0
        %v3768 = vadd.f32 %v3607, %v3767
        %v3769 = vpop.f32.mrb[0].mxu0
        %3770 = vmatprep.mubr.bf16.mxu0 %v2386
        %3771 = vmatmul.mubr.bf16.gmra.mrb[0].mxu0 %v2251
        %v3772 = vpop.f32.mrb[0].mxu0
        %v3773 = vadd.f32 %v3612, %v3772
        %v3774 = vpop.f32.mrb[0].mxu0
        %v3775 = vpop.f32.mrb[0].mxu0
        %v3776 = vadd.f32 %v3615, %v3775
        %v3777 = vpop.f32.mrb[0].mxu0
        %3778 = vmatprep.mubr.bf16.mxu0 %v2398
        %3779 = vmatmul.mubr.bf16.gmra.mrb[0].mxu0 %v2252
        %v3780 = vpop.f32.mrb[0].mxu0
        %v3781 = vadd.f32 %v3620, %v3780
        %v3782 = vpop.f32.mrb[0].mxu0
        %v3783 = vpop.f32.mrb[0].mxu0
        %v3784 = vadd.f32 %v3623, %v3783
        %v3785 = vpop.f32.mrb[0].mxu0
        %3786 = vmatprep.mubr.bf16.mxu0 %v2410
        %3787 = vmatmul.mubr.bf16.gmra.mrb[0].mxu0 %v2253
        %v3788 = vpop.f32.mrb[0].mxu0
        %v3789 = vadd.f32 %v3628, %v3788
        %v3790 = vpop.f32.mrb[0].mxu0
        %v3791 = vpop.f32.mrb[0].mxu0
        %v3792 = vadd.f32 %v3631, %v3791
        %v3793 = vpop.f32.mrb[0].mxu0
        %3794 = vmatprep.mubr.bf16.mxu0 %v2422
        %3795 = vmatmul.mubr.bf16.gmra.mrb[0].mxu0 %v2254
        %v3796 = vpop.f32.mrb[0].mxu0
        %v3797 = vadd.f32 %v3636, %v3796
        %v3798 = vpop.f32.mrb[0].mxu0
        %v3799 = vpop.f32.mrb[0].mxu0
        %v3800 = vadd.f32 %v3639, %v3799
        %v3801 = vpop.f32.mrb[0].mxu0
        %3802 = vmatprep.mubr.bf16.mxu0 %v2434
        %3803 = vmatmul.mubr.bf16.gmra.mrb[0].mxu0 %v2255
        %v3804 = vpop.f32.mrb[0].mxu0
        %v3805 = vadd.f32 %v3644, %v3804
        %v3806 = vpop.f32.mrb[0].mxu0
        %v3807 = vpop.f32.mrb[0].mxu0
        %v3808 = vadd.f32 %v3647, %v3807
        %v3809 = vpop.f32.mrb[0].mxu0
        %3810 = vmatprep.mubr.bf16.mxu0 %v2446
        %3811 = vmatmul.mubr.bf16.gmra.mrb[0].mxu0 %v2256
        %v3812 = vpop.f32.mrb[0].mxu0
        %v3813 = vadd.f32 %v3652, %v3812
        %v3814 = vpop.f32.mrb[0].mxu0
        %v3815 = vpop.f32.mrb[0].mxu0
        %v3816 = vadd.f32 %v3655, %v3815
        %v3817 = vpop.f32.mrb[0].mxu0
        %3818 = vmatprep.mubr.bf16.mxu0 %v2458
        %3819 = vmatmul.mubr.bf16.gmra.mrb[0].mxu0 %v2257
        %v3820 = vpop.f32.mrb[0].mxu0
        %v3821 = vadd.f32 %v3660, %v3820
        %v3822 = vpop.f32.mrb[0].mxu0
        %v3823 = vpop.f32.mrb[0].mxu0
        %v3824 = vadd.f32 %v3663, %v3823
        %v3825 = vpop.f32.mrb[0].mxu0
        %3826 = vmatprep.mubr.bf16.mxu0 %v2470
        %3827 = vmatmul.mubr.bf16.gmra.mrb[0].mxu0 %v2258
        %v3828 = vpop.f32.mrb[0].mxu0
        %v3829 = vadd.f32 %v3668, %v3828
        %v3830 = vpop.f32.mrb[0].mxu0
        %v3831 = vpop.f32.mrb[0].mxu0
        %v3832 = vadd.f32 %v3671, %v3831
        %v3833 = vpop.f32.mrb[0].mxu0
        %3834 = vmatprep.mubr.bf16.mxu0 %v2482
        %3835 = vmatmul.mubr.bf16.gmra.mrb[0].mxu0 %v2259
        %v3836 = vpop.f32.mrb[0].mxu0
        %v3837 = vadd.f32 %v3676, %v3836
        %v3838 = vpop.f32.mrb[0].mxu0
        %v3839 = vpop.f32.mrb[0].mxu0
        %v3840 = vadd.f32 %v3679, %v3839
        %v3841 = vpop.f32.mrb[0].mxu0
        %3842 = vmatprep.mubr.bf16.mxu0 %v2494
        %3843 = vmatmul.mubr.bf16.gmra.mrb[0].mxu0 %v2260
        %v3844 = vpop.f32.mrb[0].mxu0
        %v3845 = vadd.f32 %v3684, %v3844
        %v3846 = vpop.f32.mrb[0].mxu0
        %v3847 = vpop.f32.mrb[0].mxu0
        %v3848 = vadd.f32 %v3687, %v3847
        %v3849 = vpop.f32.mrb[0].mxu0
        %3850 = vmatprep.mubr.bf16.mxu0 %v2506
        %3851 = vmatmul.mubr.bf16.gmra.mrb[0].mxu0 %v2261
        %v3852 = vpop.f32.mrb[0].mxu0
        %v3853 = vadd.f32 %v3692, %v3852
        %v3854 = vpop.f32.mrb[0].mxu0
        %v3855 = vpop.f32.mrb[0].mxu0
        %v3856 = vadd.f32 %v3695, %v3855
        %v3857 = vpop.f32.mrb[0].mxu0
        %3858 = vmatprep.mubr.bf16.mxu0 %v2518
        %3859 = vmatmul.mubr.bf16.gmra.mrb[0].mxu0 %v2262
        %v3860 = vpop.f32.mrb[0].mxu0
        %v3861 = vadd.f32 %v3700, %v3860
        %v3862 = vpop.f32.mrb[0].mxu0
        %v3863 = vpop.f32.mrb[0].mxu0
        %v3864 = vadd.f32 %v3703, %v3863
        %v3865 = vpop.f32.mrb[0].mxu0
        %3866 = vdwg.mxu0
        %3867 = vmatprep.subr.bf16.mxu0 0
        %3868 = vmatpush1.bf16.msra.mxu0 %v3143
        %3869 = vmatprep.subr.bf16.mxu0 0
        %3870 = vmatpush1.bf16.msra.mxu0 %v3144
        %3871 = vmatprep.subr.bf16.mxu0 0
        %3872 = vmatpush1.bf16.msra.mxu0 %v3145
        %3873 = vmatprep.subr.bf16.mxu0 0
        %3874 = vmatpush1.bf16.msra.mxu0 %v3146
        %3875 = vmatprep.subr.bf16.mxu0 0
        %3876 = vmatpush1.bf16.msra.mxu0 %v3147
        %3877 = vmatprep.subr.bf16.mxu0 0
        %3878 = vmatpush1.bf16.msra.mxu0 %v3148
        %3879 = vmatprep.subr.bf16.mxu0 0
        %3880 = vmatpush1.bf16.msra.mxu0 %v3149
        %3881 = vmatprep.subr.bf16.mxu0 0
        %3882 = vmatpush1.bf16.msra.mxu0 %v3150
        %3883 = vmatprep.subr.bf16.mxu0 0
        %3884 = vmatpush1.bf16.msra.mxu0 0
        %3885 = vmatprep.subr.bf16.mxu0 0
        %3886 = vmatpush1.bf16.msra.mxu0 0
        %3887 = vmatprep.subr.bf16.mxu0 0
        %3888 = vmatpush1.bf16.msra.mxu0 0
        %3889 = vmatprep.subr.bf16.mxu0 0
        %3890 = vmatpush1.bf16.msra.mxu0 0
        %3891 = vmatprep.subr.bf16.mxu0 0
        %3892 = vmatpush1.bf16.msra.mxu0 0
        %3893 = vmatprep.subr.bf16.mxu0 0
        %3894 = vmatpush1.bf16.msra.mxu0 0
        %3895 = vmatprep.subr.bf16.mxu0 0
        %3896 = vmatpush1.bf16.msra.mxu0 0
        %3897 = vmatprep.subr.bf16.mxu0 0
        %3898 = vmatpush1.bf16.msra.mxu0 0
        %3899 = vmatprep.mubr.bf16.mxu0 0
        %3900 = vmatmul.mubr.bf16.gmra.mrb[0].mxu0 %v2585
        %v3901 = vpop.f32.mrb[0].mxu0
        %v3902 = vadd.f32 %v3741, %v3901
        %v3903 = vpop.f32.mrb[0].mxu0
        %v3904 = vpop.f32.mrb[0].mxu0
        %v3905 = vadd.f32 %v3744, %v3904
        %v3906 = vpop.f32.mrb[0].mxu0
        %3907 = vmatprep.mubr.bf16.mxu0 0
        %3908 = vmatmul.mubr.bf16.gmra.mrb[0].mxu0 %v2588
        %v3909 = vpop.f32.mrb[0].mxu0
        %v3910 = vadd.f32 %v3749, %v3909
        %v3911 = vpop.f32.mrb[0].mxu0
        %v3912 = vpop.f32.mrb[0].mxu0
        %v3913 = vadd.f32 %v3752, %v3912
        %v3914 = vpop.f32.mrb[0].mxu0
        %3915 = vmatprep.mubr.bf16.mxu0 0
        %3916 = vmatmul.mubr.bf16.gmra.mrb[0].mxu0 %v2591
        %v3917 = vpop.f32.mrb[0].mxu0
        %v3918 = vadd.f32 %v3757, %v3917
        %v3919 = vpop.f32.mrb[0].mxu0
        %v3920 = vpop.f32.mrb[0].mxu0
        %v3921 = vadd.f32 %v3760, %v3920
        %v3922 = vpop.f32.mrb[0].mxu0
        %3923 = vmatprep.mubr.bf16.mxu0 0
        %3924 = vmatmul.mubr.bf16.gmra.mrb[0].mxu0 %v2594
        %v3925 = vpop.f32.mrb[0].mxu0
        %v3926 = vadd.f32 %v3765, %v3925
        %v3927 = vpop.f32.mrb[0].mxu0
        %v3928 = vpop.f32.mrb[0].mxu0
        %v3929 = vadd.f32 %v3768, %v3928
        %v3930 = vpop.f32.mrb[0].mxu0
        %3931 = vmatprep.mubr.bf16.mxu0 0
        %3932 = vmatmul.mubr.bf16.gmra.mrb[0].mxu0 %v2597
        %v3933 = vpop.f32.mrb[0].mxu0
        %v3934 = vadd.f32 %v3773, %v3933
        %v3935 = vpop.f32.mrb[0].mxu0
        %v3936 = vpop.f32.mrb[0].mxu0
        %v3937 = vadd.f32 %v3776, %v3936
        %v3938 = vpop.f32.mrb[0].mxu0
        %3939 = vmatprep.mubr.bf16.mxu0 0
        %3940 = vmatmul.mubr.bf16.gmra.mrb[0].mxu0 %v2600
        %v3941 = vpop.f32.mrb[0].mxu0
        %v3942 = vadd.f32 %v3781, %v3941
        %v3943 = vpop.f32.mrb[0].mxu0
        %v3944 = vpop.f32.mrb[0].mxu0
        %v3945 = vadd.f32 %v3784, %v3944
        %v3946 = vpop.f32.mrb[0].mxu0
        %3947 = vmatprep.mubr.bf16.mxu0 0
        %3948 = vmatmul.mubr.bf16.gmra.mrb[0].mxu0 %v2603
        %v3949 = vpop.f32.mrb[0].mxu0
        %v3950 = vadd.f32 %v3789, %v3949
        %v3951 = vpop.f32.mrb[0].mxu0
        %v3952 = vpop.f32.mrb[0].mxu0
        %v3953 = vadd.f32 %v3792, %v3952
        %v3954 = vpop.f32.mrb[0].mxu0
        %3955 = vmatprep.mubr.bf16.mxu0 0
        %3956 = vmatmul.mubr.bf16.gmra.mrb[0].mxu0 %v2606
        %v3957 = vpop.f32.mrb[0].mxu0
        %v3958 = vadd.f32 %v3797, %v3957
        %v3959 = vpop.f32.mrb[0].mxu0
        %v3960 = vpop.f32.mrb[0].mxu0
        %v3961 = vadd.f32 %v3800, %v3960
        %v3962 = vpop.f32.mrb[0].mxu0
        %3963 = vmatprep.mubr.bf16.mxu0 0
        %3964 = vmatmul.mubr.bf16.gmra.mrb[0].mxu0 %v2609
        %v3965 = vpop.f32.mrb[0].mxu0
        %v3966 = vadd.f32 %v3805, %v3965
        %v3967 = vpop.f32.mrb[0].mxu0
        %v3968 = vpop.f32.mrb[0].mxu0
        %v3969 = vadd.f32 %v3808, %v3968
        %v3970 = vpop.f32.mrb[0].mxu0
        %3971 = vmatprep.mubr.bf16.mxu0 0
        %3972 = vmatmul.mubr.bf16.gmra.mrb[0].mxu0 %v2612
        %v3973 = vpop.f32.mrb[0].mxu0
        %v3974 = vadd.f32 %v3813, %v3973
        %v3975 = vpop.f32.mrb[0].mxu0
        %v3976 = vpop.f32.mrb[0].mxu0
        %v3977 = vadd.f32 %v3816, %v3976
        %v3978 = vpop.f32.mrb[0].mxu0
        %3979 = vmatprep.mubr.bf16.mxu0 0
        %3980 = vmatmul.mubr.bf16.gmra.mrb[0].mxu0 %v2615
        %v3981 = vpop.f32.mrb[0].mxu0
        %v3982 = vadd.f32 %v3821, %v3981
        %v3983 = vpop.f32.mrb[0].mxu0
        %v3984 = vpop.f32.mrb[0].mxu0
        %v3985 = vadd.f32 %v3824, %v3984
        %v3986 = vpop.f32.mrb[0].mxu0
        %3987 = vmatprep.mubr.bf16.mxu0 0
        %3988 = vmatmul.mubr.bf16.gmra.mrb[0].mxu0 %v2618
        %v3989 = vpop.f32.mrb[0].mxu0
        %v3990 = vadd.f32 %v3829, %v3989
        %v3991 = vpop.f32.mrb[0].mxu0
        %v3992 = vpop.f32.mrb[0].mxu0
        %v3993 = vadd.f32 %v3832, %v3992
        %v3994 = vpop.f32.mrb[0].mxu0
        %3995 = vmatprep.mubr.bf16.mxu0 0
        %3996 = vmatmul.mubr.bf16.gmra.mrb[0].mxu0 %v2621
        %v3997 = vpop.f32.mrb[0].mxu0
        %v3998 = vadd.f32 %v3837, %v3997
        %v3999 = vpop.f32.mrb[0].mxu0
        %v4000 = vpop.f32.mrb[0].mxu0
        %v4001 = vadd.f32 %v3840, %v4000
        %v4002 = vpop.f32.mrb[0].mxu0
        %4003 = vmatprep.mubr.bf16.mxu0 0
        %4004 = vmatmul.mubr.bf16.gmra.mrb[0].mxu0 %v2624
        %v4005 = vpop.f32.mrb[0].mxu0
        %v4006 = vadd.f32 %v3845, %v4005
        %v4007 = vpop.f32.mrb[0].mxu0
        %v4008 = vpop.f32.mrb[0].mxu0
        %v4009 = vadd.f32 %v3848, %v4008
        %v4010 = vpop.f32.mrb[0].mxu0
        %4011 = vmatprep.mubr.bf16.mxu0 0
        %4012 = vmatmul.mubr.bf16.gmra.mrb[0].mxu0 %v2627
        %v4013 = vpop.f32.mrb[0].mxu0
        %v4014 = vadd.f32 %v3853, %v4013
        %v4015 = vpop.f32.mrb[0].mxu0
        %v4016 = vpop.f32.mrb[0].mxu0
        %v4017 = vadd.f32 %v3856, %v4016
        %v4018 = vpop.f32.mrb[0].mxu0
        %4019 = vmatprep.mubr.bf16.mxu0 0
        %4020 = vmatmul.mubr.bf16.gmra.mrb[0].mxu0 %v2630
        %v4021 = vpop.f32.mrb[0].mxu0
        %v4022 = vadd.f32 %v3861, %v4021
        %v4023 = vpop.f32.mrb[0].mxu0
        %v4024 = vpop.f32.mrb[0].mxu0
        %v4025 = vadd.f32 %v3864, %v4024
        %v4026 = vpop.f32.mrb[0].mxu0
        %4027 = vdwg.mxu0
        %v4028 = vld [vmem:[%s4] sm:$0x1]
        %v4030 = vlaneseq
        %v4031 = vshrl.u32 %v4030, 7
        %v4032 = vsub.s32 0, %v4031
        %v4033 = vrot.slane %v4028, %v4032
        %v4035 = vmul.f32 %v3902, %v4033
        %v4036 = vmul.f32 %v3905, %v4033
        %v4037 = vmul.f32 %v3910, %v4033
        %v4038 = vmul.f32 %v3913, %v4033
        %v4039 = vmul.f32 %v3918, %v4033
        %v4040 = vmul.f32 %v3921, %v4033
        %v4041 = vmul.f32 %v3926, %v4033
        %v4042 = vmul.f32 %v3929, %v4033
        %v4043 = vmul.f32 %v3934, %v4033
        %v4044 = vmul.f32 %v3937, %v4033
        %v4045 = vmul.f32 %v3942, %v4033
        %v4046 = vmul.f32 %v3945, %v4033
        %v4047 = vmul.f32 %v3950, %v4033
        %v4048 = vmul.f32 %v3953, %v4033
        %v4049 = vmul.f32 %v3958, %v4033
        %v4050 = vmul.f32 %v3961, %v4033
        %v4051 = vmul.f32 %v3966, %v4033
        %v4052 = vmul.f32 %v3969, %v4033
        %v4053 = vmul.f32 %v3974, %v4033
        %v4054 = vmul.f32 %v3977, %v4033
        %v4055 = vmul.f32 %v3982, %v4033
        %v4056 = vmul.f32 %v3985, %v4033
        %v4057 = vmul.f32 %v3990, %v4033
        %v4058 = vmul.f32 %v3993, %v4033
        %v4059 = vmul.f32 %v3998, %v4033
        %v4060 = vmul.f32 %v4001, %v4033
        %v4061 = vmul.f32 %v4006, %v4033
        %v4062 = vmul.f32 %v4009, %v4033
        %v4063 = vmul.f32 %v4014, %v4033
        %v4064 = vmul.f32 %v4017, %v4033
        %v4065 = vmul.f32 %v4022, %v4033
        %v4066 = vmul.f32 %v4025, %v4033
        %v4067 = vld [vmem:[%s5] sm:$0x1]
        %v4069 = vlaneseq
        %v4070 = vshrl.u32 %v4069, 7
        %v4071 = vsub.s32 0, %v4070
        %v4072 = vrot.slane %v4067, %v4071
        %v4074 = vadd.f32 %v4035, %v4072
        %v4075 = vadd.f32 %v4036, %v4072
        %v4076 = vadd.f32 %v4037, %v4072
        %v4077 = vadd.f32 %v4038, %v4072
        %v4078 = vadd.f32 %v4039, %v4072
        %v4079 = vadd.f32 %v4040, %v4072
        %v4080 = vadd.f32 %v4041, %v4072
        %v4081 = vadd.f32 %v4042, %v4072
        %v4082 = vadd.f32 %v4043, %v4072
        %v4083 = vadd.f32 %v4044, %v4072
        %v4084 = vadd.f32 %v4045, %v4072
        %v4085 = vadd.f32 %v4046, %v4072
        %v4086 = vadd.f32 %v4047, %v4072
        %v4087 = vadd.f32 %v4048, %v4072
        %v4088 = vadd.f32 %v4049, %v4072
        %v4089 = vadd.f32 %v4050, %v4072
        %v4090 = vadd.f32 %v4051, %v4072
        %v4091 = vadd.f32 %v4052, %v4072
        %v4092 = vadd.f32 %v4053, %v4072
        %v4093 = vadd.f32 %v4054, %v4072
        %v4094 = vadd.f32 %v4055, %v4072
        %v4095 = vadd.f32 %v4056, %v4072
        %v4096 = vadd.f32 %v4057, %v4072
        %v4097 = vadd.f32 %v4058, %v4072
        %v4098 = vadd.f32 %v4059, %v4072
        %v4099 = vadd.f32 %v4060, %v4072
        %v4100 = vadd.f32 %v4061, %v4072
        %v4101 = vadd.f32 %v4062, %v4072
        %v4102 = vadd.f32 %v4063, %v4072
        %v4103 = vadd.f32 %v4064, %v4072
        %v4104 = vadd.f32 %v4065, %v4072
        %v4105 = vadd.f32 %v4066, %v4072
        %v4106 = vmax.f32 %v4074, 0.0
        %v4107 = vmax.f32 %v4075, 0.0
        %v4108 = vmax.f32 %v4076, 0.0
        %v4109 = vmax.f32 %v4077, 0.0
        %v4110 = vmax.f32 %v4078, 0.0
        %v4111 = vmax.f32 %v4079, 0.0
        %v4112 = vmax.f32 %v4080, 0.0
        %v4113 = vmax.f32 %v4081, 0.0
        %v4114 = vmax.f32 %v4082, 0.0
        %v4115 = vmax.f32 %v4083, 0.0
        %v4116 = vmax.f32 %v4084, 0.0
        %v4117 = vmax.f32 %v4085, 0.0
        %v4118 = vmax.f32 %v4086, 0.0
        %v4119 = vmax.f32 %v4087, 0.0
        %v4120 = vmax.f32 %v4088, 0.0
        %v4121 = vmax.f32 %v4089, 0.0
        %v4122 = vmax.f32 %v4090, 0.0
        %v4123 = vmax.f32 %v4091, 0.0
        %v4124 = vmax.f32 %v4092, 0.0
        %v4125 = vmax.f32 %v4093, 0.0
        %v4126 = vmax.f32 %v4094, 0.0
        %v4127 = vmax.f32 %v4095, 0.0
        %v4128 = vmax.f32 %v4096, 0.0
        %v4129 = vmax.f32 %v4097, 0.0
        %v4130 = vmax.f32 %v4098, 0.0
        %v4131 = vmax.f32 %v4099, 0.0
        %v4132 = vmax.f32 %v4100, 0.0
        %v4133 = vmax.f32 %v4101, 0.0
        %v4134 = vmax.f32 %v4102, 0.0
        %v4135 = vmax.f32 %v4103, 0.0
        %v4136 = vmax.f32 %v4104, 0.0
        %v4137 = vmax.f32 %v4105, 0.0
        %v4138 = vpack.c.bf16 %v4107, %v4106
        %v4139 = vpack.c.bf16 %v4109, %v4108
        %v4140 = vpack.c.bf16 %v4111, %v4110
        %v4141 = vpack.c.bf16 %v4113, %v4112
        %v4142 = vpack.c.bf16 %v4115, %v4114
        %v4143 = vpack.c.bf16 %v4117, %v4116
        %v4144 = vpack.c.bf16 %v4119, %v4118
        %v4145 = vpack.c.bf16 %v4121, %v4120
        %v4146 = vpack.c.bf16 %v4123, %v4122
        %v4147 = vpack.c.bf16 %v4125, %v4124
        %v4148 = vpack.c.bf16 %v4127, %v4126
        %v4149 = vpack.c.bf16 %v4129, %v4128
        %v4150 = vpack.c.bf16 %v4131, %v4130
        %v4151 = vpack.c.bf16 %v4133, %v4132
        %v4152 = vpack.c.bf16 %v4135, %v4134
        %v4153 = vpack.c.bf16 %v4137, %v4136
        %v4170 = vunpack.c.l.b16 %v4138
        %v4171 = vunpack.c.h.b16 %v4138
        %v4172 = vunpack.c.l.b16 %v4139
        %v4173 = vunpack.c.h.b16 %v4139
        %v4174 = vunpack.c.l.b16 %v4140
        %v4175 = vunpack.c.h.b16 %v4140
        %v4176 = vunpack.c.l.b16 %v4141
        %v4177 = vunpack.c.h.b16 %v4141
        %v4178 = vunpack.c.l.b16 %v4142
        %v4179 = vunpack.c.h.b16 %v4142
        %v4180 = vunpack.c.l.b16 %v4143
        %v4181 = vunpack.c.h.b16 %v4143
        %v4182 = vunpack.c.l.b16 %v4144
        %v4183 = vunpack.c.h.b16 %v4144
        %v4184 = vunpack.c.l.b16 %v4145
        %v4185 = vunpack.c.h.b16 %v4145
        %v4186 = vunpack.c.l.b16 %v4146
        %v4187 = vunpack.c.h.b16 %v4146
        %v4188 = vunpack.c.l.b16 %v4147
        %v4189 = vunpack.c.h.b16 %v4147
        %v4190 = vunpack.c.l.b16 %v4148
        %v4191 = vunpack.c.h.b16 %v4148
        %v4192 = vunpack.c.l.b16 %v4149
        %v4193 = vunpack.c.h.b16 %v4149
        %v4194 = vunpack.c.l.b16 %v4150
        %v4195 = vunpack.c.h.b16 %v4150
        %v4196 = vunpack.c.l.b16 %v4151
        %v4197 = vunpack.c.h.b16 %v4151
        %v4198 = vunpack.c.l.b16 %v4152
        %v4199 = vunpack.c.h.b16 %v4152
        %v4200 = vunpack.c.l.b16 %v4153
        %v4201 = vunpack.c.h.b16 %v4153
        %v4202 = vpack.c.b16 %v4170, %v4170
        %v4203 = vpack.c.b16 %v4171, %v4171
        %v4204 = vpack.c.b16 %v4172, %v4172
        %v4205 = vpack.c.b16 %v4173, %v4173
        %v4206 = vpack.c.b16 %v4174, %v4174
        %v4207 = vpack.c.b16 %v4175, %v4175
        %v4208 = vpack.c.b16 %v4176, %v4176
        %v4209 = vpack.c.b16 %v4177, %v4177
        %v4210 = vpack.c.b16 %v4178, %v4178
        %v4211 = vpack.c.b16 %v4179, %v4179
        %v4212 = vpack.c.b16 %v4180, %v4180
        %v4213 = vpack.c.b16 %v4181, %v4181
        %v4214 = vpack.c.b16 %v4182, %v4182
        %v4215 = vpack.c.b16 %v4183, %v4183
        %v4216 = vpack.c.b16 %v4184, %v4184
        %v4217 = vpack.c.b16 %v4185, %v4185
        %v4218 = vpack.c.b16 %v4186, %v4186
        %v4219 = vpack.c.b16 %v4187, %v4187
        %v4220 = vpack.c.b16 %v4188, %v4188
        %v4221 = vpack.c.b16 %v4189, %v4189
        %v4222 = vpack.c.b16 %v4190, %v4190
        %v4223 = vpack.c.b16 %v4191, %v4191
        %v4224 = vpack.c.b16 %v4192, %v4192
        %v4225 = vpack.c.b16 %v4193, %v4193
        %v4226 = vpack.c.b16 %v4194, %v4194
        %v4227 = vpack.c.b16 %v4195, %v4195
        %v4228 = vpack.c.b16 %v4196, %v4196
        %v4229 = vpack.c.b16 %v4197, %v4197
        %v4230 = vpack.c.b16 %v4198, %v4198
        %v4231 = vpack.c.b16 %v4199, %v4199
        %v4232 = vpack.c.b16 %v4200, %v4200
        %v4233 = vpack.c.b16 %v4201, %v4201
        %v4235 = vshrl.u32 %v4202, 16
        %v4237 = vrot.slane %v4235, 7
        %v4238 = vshll.u32 %v4202, 16
        %v4240 = vor.u32 %v4237, %v4238
        %v4241 = vrot.slane %v4237, 4
        %v4243 = vshrl.u32 %v4203, 16
        %v4245 = vrot.slane %v4243, 7
        %v4246 = vshll.u32 %v4203, 16
        %v4248 = vor.u32 %v4245, %v4246
        %v4249 = vsel %vm621, %v4241, %v4248
        %v4250 = vrot.slane %v4245, 4
        %v4252 = vshrl.u32 %v4204, 16
        %v4254 = vrot.slane %v4252, 7
        %v4255 = vshll.u32 %v4204, 16
        %v4257 = vor.u32 %v4254, %v4255
        %v4258 = vrot.slane %v4254, 4
        %v4260 = vshrl.u32 %v4205, 16
        %v4262 = vrot.slane %v4260, 7
        %v4263 = vshll.u32 %v4205, 16
        %v4265 = vor.u32 %v4262, %v4263
        %v4266 = vsel %vm621, %v4258, %v4265
        %v4267 = vrot.slane %v4262, 4
        %v4269 = vshrl.u32 %v4206, 16
        %v4271 = vrot.slane %v4269, 7
        %v4272 = vshll.u32 %v4206, 16
        %v4274 = vor.u32 %v4271, %v4272
        %v4275 = vrot.slane %v4271, 4
        %v4277 = vshrl.u32 %v4207, 16
        %v4279 = vrot.slane %v4277, 7
        %v4280 = vshll.u32 %v4207, 16
        %v4282 = vor.u32 %v4279, %v4280
        %v4283 = vsel %vm621, %v4275, %v4282
        %v4284 = vrot.slane %v4279, 4
        %v4286 = vshrl.u32 %v4208, 16
        %v4288 = vrot.slane %v4286, 7
        %v4289 = vshll.u32 %v4208, 16
        %v4291 = vor.u32 %v4288, %v4289
        %v4292 = vrot.slane %v4288, 4
        %v4294 = vshrl.u32 %v4209, 16
        %v4296 = vrot.slane %v4294, 7
        %v4297 = vshll.u32 %v4209, 16
        %v4299 = vor.u32 %v4296, %v4297
        %v4300 = vsel %vm621, %v4292, %v4299
        %v4301 = vrot.slane %v4296, 4
        %v4303 = vshrl.u32 %v4210, 16
        %v4305 = vrot.slane %v4303, 7
        %v4306 = vshll.u32 %v4210, 16
        %v4308 = vor.u32 %v4305, %v4306
        %v4309 = vrot.slane %v4305, 4
        %v4311 = vshrl.u32 %v4211, 16
        %v4313 = vrot.slane %v4311, 7
        %v4314 = vshll.u32 %v4211, 16
        %v4316 = vor.u32 %v4313, %v4314
        %v4317 = vsel %vm621, %v4309, %v4316
        %v4318 = vrot.slane %v4313, 4
        %v4320 = vshrl.u32 %v4212, 16
        %v4322 = vrot.slane %v4320, 7
        %v4323 = vshll.u32 %v4212, 16
        %v4325 = vor.u32 %v4322, %v4323
        %v4326 = vrot.slane %v4322, 4
        %v4328 = vshrl.u32 %v4213, 16
        %v4330 = vrot.slane %v4328, 7
        %v4331 = vshll.u32 %v4213, 16
        %v4333 = vor.u32 %v4330, %v4331
        %v4334 = vsel %vm621, %v4326, %v4333
        %v4335 = vrot.slane %v4330, 4
        %v4337 = vshrl.u32 %v4214, 16
        %v4339 = vrot.slane %v4337, 7
        %v4340 = vshll.u32 %v4214, 16
        %v4342 = vor.u32 %v4339, %v4340
        %v4343 = vrot.slane %v4339, 4
        %v4345 = vshrl.u32 %v4215, 16
        %v4347 = vrot.slane %v4345, 7
        %v4348 = vshll.u32 %v4215, 16
        %v4350 = vor.u32 %v4347, %v4348
        %v4351 = vsel %vm621, %v4343, %v4350
        %v4352 = vrot.slane %v4347, 4
        %v4354 = vshrl.u32 %v4216, 16
        %v4356 = vrot.slane %v4354, 7
        %v4357 = vshll.u32 %v4216, 16
        %v4359 = vor.u32 %v4356, %v4357
        %v4360 = vrot.slane %v4356, 4
        %v4362 = vshrl.u32 %v4217, 16
        %v4364 = vrot.slane %v4362, 7
        %v4365 = vshll.u32 %v4217, 16
        %v4367 = vor.u32 %v4364, %v4365
        %v4368 = vsel %vm621, %v4360, %v4367
        %v4369 = vrot.slane %v4364, 4
        %v4371 = vshrl.u32 %v4218, 16
        %v4373 = vrot.slane %v4371, 7
        %v4374 = vshll.u32 %v4218, 16
        %v4376 = vor.u32 %v4373, %v4374
        %v4377 = vrot.slane %v4373, 4
        %v4379 = vshrl.u32 %v4219, 16
        %v4381 = vrot.slane %v4379, 7
        %v4382 = vshll.u32 %v4219, 16
        %v4384 = vor.u32 %v4381, %v4382
        %v4385 = vsel %vm621, %v4377, %v4384
        %v4386 = vrot.slane %v4381, 4
        %v4388 = vshrl.u32 %v4220, 16
        %v4390 = vrot.slane %v4388, 7
        %v4391 = vshll.u32 %v4220, 16
        %v4393 = vor.u32 %v4390, %v4391
        %v4394 = vrot.slane %v4390, 4
        %v4396 = vshrl.u32 %v4221, 16
        %v4398 = vrot.slane %v4396, 7
        %v4399 = vshll.u32 %v4221, 16
        %v4401 = vor.u32 %v4398, %v4399
        %v4402 = vsel %vm621, %v4394, %v4401
        %v4403 = vrot.slane %v4398, 4
        %v4405 = vshrl.u32 %v4222, 16
        %v4407 = vrot.slane %v4405, 7
        %v4408 = vshll.u32 %v4222, 16
        %v4410 = vor.u32 %v4407, %v4408
        %v4411 = vrot.slane %v4407, 4
        %v4413 = vshrl.u32 %v4223, 16
        %v4415 = vrot.slane %v4413, 7
        %v4416 = vshll.u32 %v4223, 16
        %v4418 = vor.u32 %v4415, %v4416
        %v4419 = vsel %vm621, %v4411, %v4418
        %v4420 = vrot.slane %v4415, 4
        %v4422 = vshrl.u32 %v4224, 16
        %v4424 = vrot.slane %v4422, 7
        %v4425 = vshll.u32 %v4224, 16
        %v4427 = vor.u32 %v4424, %v4425
        %v4428 = vrot.slane %v4424, 4
        %v4430 = vshrl.u32 %v4225, 16
        %v4432 = vrot.slane %v4430, 7
        %v4433 = vshll.u32 %v4225, 16
        %v4435 = vor.u32 %v4432, %v4433
        %v4436 = vsel %vm621, %v4428, %v4435
        %v4437 = vrot.slane %v4432, 4
        %v4439 = vshrl.u32 %v4226, 16
        %v4441 = vrot.slane %v4439, 7
        %v4442 = vshll.u32 %v4226, 16
        %v4444 = vor.u32 %v4441, %v4442
        %v4445 = vrot.slane %v4441, 4
        %v4447 = vshrl.u32 %v4227, 16
        %v4449 = vrot.slane %v4447, 7
        %v4450 = vshll.u32 %v4227, 16
        %v4452 = vor.u32 %v4449, %v4450
        %v4453 = vsel %vm621, %v4445, %v4452
        %v4454 = vrot.slane %v4449, 4
        %v4456 = vshrl.u32 %v4228, 16
        %v4458 = vrot.slane %v4456, 7
        %v4459 = vshll.u32 %v4228, 16
        %v4461 = vor.u32 %v4458, %v4459
        %v4462 = vrot.slane %v4458, 4
        %v4464 = vshrl.u32 %v4229, 16
        %v4466 = vrot.slane %v4464, 7
        %v4467 = vshll.u32 %v4229, 16
        %v4469 = vor.u32 %v4466, %v4467
        %v4470 = vsel %vm621, %v4462, %v4469
        %v4471 = vrot.slane %v4466, 4
        %v4473 = vshrl.u32 %v4230, 16
        %v4475 = vrot.slane %v4473, 7
        %v4476 = vshll.u32 %v4230, 16
        %v4478 = vor.u32 %v4475, %v4476
        %v4479 = vrot.slane %v4475, 4
        %v4481 = vshrl.u32 %v4231, 16
        %v4483 = vrot.slane %v4481, 7
        %v4484 = vshll.u32 %v4231, 16
        %v4486 = vor.u32 %v4483, %v4484
        %v4487 = vsel %vm621, %v4479, %v4486
        %v4488 = vrot.slane %v4483, 4
        %v4490 = vshrl.u32 %v4232, 16
        %v4492 = vrot.slane %v4490, 7
        %v4493 = vshll.u32 %v4232, 16
        %v4495 = vor.u32 %v4492, %v4493
        %v4496 = vrot.slane %v4492, 4
        %v4498 = vshrl.u32 %v4233, 16
        %v4500 = vrot.slane %v4498, 7
        %v4501 = vshll.u32 %v4233, 16
        %v4503 = vor.u32 %v4500, %v4501
        %v4504 = vsel %vm621, %v4496, %v4503
        %v4505 = vrot.slane %v4500, 4
        %v4554 = vsel %vm945, %v4240, %v1124
        %4555 = vst [vmem:[%s942] sm:$0xf] %v4554
        %4556 = vst [vmem:[%s942 + $0x4] sm:$0xf] %v4249
        %v4557 = vld [vmem:[%s942 + $0x8] sm:$0x1]
        %v4558 = vsel %vm951, %v4250, %v4557
        %4559 = vst [vmem:[%s942 + $0x8] sm:$0x1] %v4558
        %v4560 = vld [vmem:[%s942 + $0xc] sm:$0xf]
        %v4561 = vsel %vm945, %v4257, %v4560
        %4562 = vst [vmem:[%s942 + $0xc] sm:$0xf] %v4561
        %4563 = vst [vmem:[%s942 + $0x10] sm:$0xf] %v4266
        %v4564 = vld [vmem:[%s942 + $0x14] sm:$0x1]
        %v4565 = vsel %vm951, %v4267, %v4564
        %4566 = vst [vmem:[%s942 + $0x14] sm:$0x1] %v4565
        %v4567 = vld [vmem:[%s942 + $0x18] sm:$0xf]
        %v4568 = vsel %vm945, %v4274, %v4567
        %4569 = vst [vmem:[%s942 + $0x18] sm:$0xf] %v4568
        %4570 = vst [vmem:[%s942 + $0x1c] sm:$0xf] %v4283
        %v4571 = vld [vmem:[%s942 + $0x20] sm:$0x1]
        %v4572 = vsel %vm951, %v4284, %v4571
        %4573 = vst [vmem:[%s942 + $0x20] sm:$0x1] %v4572
        %v4574 = vld [vmem:[%s942 + $0x24] sm:$0xf]
        %v4575 = vsel %vm945, %v4291, %v4574
        %4576 = vst [vmem:[%s942 + $0x24] sm:$0xf] %v4575
        %4577 = vst [vmem:[%s942 + $0x28] sm:$0xf] %v4300
        %v4578 = vld [vmem:[%s942 + $0x2c] sm:$0x1]
        %v4579 = vsel %vm951, %v4301, %v4578
        %4580 = vst [vmem:[%s942 + $0x2c] sm:$0x1] %v4579
        %v4581 = vld [vmem:[%s942 + $0x30] sm:$0xf]
        %v4582 = vsel %vm945, %v4308, %v4581
        %4583 = vst [vmem:[%s942 + $0x30] sm:$0xf] %v4582
        %4584 = vst [vmem:[%s942 + $0x34] sm:$0xf] %v4317
        %v4585 = vld [vmem:[%s942 + $0x38] sm:$0x1]
        %v4586 = vsel %vm951, %v4318, %v4585
        %4587 = vst [vmem:[%s942 + $0x38] sm:$0x1] %v4586
        %v4588 = vld [vmem:[%s942 + $0x3c] sm:$0xf]
        %v4589 = vsel %vm945, %v4325, %v4588
        %4590 = vst [vmem:[%s942 + $0x3c] sm:$0xf] %v4589
        %4591 = vst [vmem:[%s942 + $0x40] sm:$0xf] %v4334
        %v4592 = vld [vmem:[%s942 + $0x44] sm:$0x1]
        %v4593 = vsel %vm951, %v4335, %v4592
        %4594 = vst [vmem:[%s942 + $0x44] sm:$0x1] %v4593
        %v4595 = vld [vmem:[%s942 + $0x48] sm:$0xf]
        %v4596 = vsel %vm945, %v4342, %v4595
        %4597 = vst [vmem:[%s942 + $0x48] sm:$0xf] %v4596
        %4598 = vst [vmem:[%s942 + $0x4c] sm:$0xf] %v4351
        %v4599 = vld [vmem:[%s942 + $0x50] sm:$0x1]
        %v4600 = vsel %vm951, %v4352, %v4599
        %4601 = vst [vmem:[%s942 + $0x50] sm:$0x1] %v4600
        %v4602 = vld [vmem:[%s942 + $0x54] sm:$0xf]
        %v4603 = vsel %vm945, %v4359, %v4602
        %4604 = vst [vmem:[%s942 + $0x54] sm:$0xf] %v4603
        %4605 = vst [vmem:[%s942 + $0x58] sm:$0xf] %v4368
        %v4606 = vld [vmem:[%s942 + $0x5c] sm:$0x1]
        %v4607 = vsel %vm951, %v4369, %v4606
        %4608 = vst [vmem:[%s942 + $0x5c] sm:$0x1] %v4607
        %v4609 = vld [vmem:[%s942 + $0x60] sm:$0xf]
        %v4610 = vsel %vm945, %v4376, %v4609
        %4611 = vst [vmem:[%s942 + $0x60] sm:$0xf] %v4610
        %4612 = vst [vmem:[%s942 + $0x64] sm:$0xf] %v4385
        %v4613 = vld [vmem:[%s942 + $0x68] sm:$0x1]
        %v4614 = vsel %vm951, %v4386, %v4613
        %4615 = vst [vmem:[%s942 + $0x68] sm:$0x1] %v4614
        %v4616 = vld [vmem:[%s942 + $0x6c] sm:$0xf]
        %v4617 = vsel %vm945, %v4393, %v4616
        %4618 = vst [vmem:[%s942 + $0x6c] sm:$0xf] %v4617
        %4619 = vst [vmem:[%s942 + $0x70] sm:$0xf] %v4402
        %v4620 = vld [vmem:[%s942 + $0x74] sm:$0x1]
        %v4621 = vsel %vm951, %v4403, %v4620
        %4622 = vst [vmem:[%s942 + $0x74] sm:$0x1] %v4621
        %v4623 = vld [vmem:[%s942 + $0x78] sm:$0xf]
        %v4624 = vsel %vm945, %v4410, %v4623
        %4625 = vst [vmem:[%s942 + $0x78] sm:$0xf] %v4624
        %4626 = vst [vmem:[%s942 + $0x7c] sm:$0xf] %v4419
        %v4627 = vld [vmem:[%s942 + $0x80] sm:$0x1]
        %v4628 = vsel %vm951, %v4420, %v4627
        %4629 = vst [vmem:[%s942 + $0x80] sm:$0x1] %v4628
        %v4630 = vld [vmem:[%s942 + $0x84] sm:$0xf]
        %v4631 = vsel %vm945, %v4427, %v4630
        %4632 = vst [vmem:[%s942 + $0x84] sm:$0xf] %v4631
        %4633 = vst [vmem:[%s942 + $0x88] sm:$0xf] %v4436
        %v4634 = vld [vmem:[%s942 + $0x8c] sm:$0x1]
        %v4635 = vsel %vm951, %v4437, %v4634
        %4636 = vst [vmem:[%s942 + $0x8c] sm:$0x1] %v4635
        %v4637 = vld [vmem:[%s942 + $0x90] sm:$0xf]
        %v4638 = vsel %vm945, %v4444, %v4637
        %4639 = vst [vmem:[%s942 + $0x90] sm:$0xf] %v4638
        %4640 = vst [vmem:[%s942 + $0x94] sm:$0xf] %v4453
        %v4641 = vld [vmem:[%s942 + $0x98] sm:$0x1]
        %v4642 = vsel %vm951, %v4454, %v4641
        %4643 = vst [vmem:[%s942 + $0x98] sm:$0x1] %v4642
        %v4644 = vld [vmem:[%s942 + $0x9c] sm:$0xf]
        %v4645 = vsel %vm945, %v4461, %v4644
        %4646 = vst [vmem:[%s942 + $0x9c] sm:$0xf] %v4645
        %4647 = vst [vmem:[%s942 + $0xa0] sm:$0xf] %v4470
        %v4648 = vld [vmem:[%s942 + $0xa4] sm:$0x1]
        %v4649 = vsel %vm951, %v4471, %v4648
        %4650 = vst [vmem:[%s942 + $0xa4] sm:$0x1] %v4649
        %v4651 = vld [vmem:[%s942 + $0xa8] sm:$0xf]
        %v4652 = vsel %vm945, %v4478, %v4651
        %4653 = vst [vmem:[%s942 + $0xa8] sm:$0xf] %v4652
        %4654 = vst [vmem:[%s942 + $0xac] sm:$0xf] %v4487
        %v4655 = vld [vmem:[%s942 + $0xb0] sm:$0x1]
        %v4656 = vsel %vm951, %v4488, %v4655
        %4657 = vst [vmem:[%s942 + $0xb0] sm:$0x1] %v4656
        %v4658 = vld [vmem:[%s942 + $0xb4] sm:$0xf]
        %v4659 = vsel %vm945, %v4495, %v4658
        %4660 = vst [vmem:[%s942 + $0xb4] sm:$0xf] %v4659
        %4661 = vst [vmem:[%s942 + $0xb8] sm:$0xf] %v4504
        %v4662 = vld [vmem:[%s942 + $0xbc] sm:$0x1]
        %v4663 = vsel %vm951, %v4505, %v4662
        %4664 = vst [vmem:[%s942 + $0xbc] sm:$0x1] %v4663
        %v4665 = vld [vmem:[#allocation2] sm:$0xf]
        %v4666 = vld [vmem:[#allocation2 + $0x4] sm:$0xf]
        %v4667 = vld [vmem:[#allocation2 + $0xc] sm:$0xf]
        %v4668 = vld [vmem:[#allocation2 + $0x10] sm:$0xf]
        %v4669 = vld [vmem:[#allocation2 + $0x18] sm:$0xf]
        %v4670 = vld [vmem:[#allocation2 + $0x1c] sm:$0xf]
        %v4671 = vld [vmem:[#allocation2 + $0x24] sm:$0xf]
        %v4672 = vld [vmem:[#allocation2 + $0x28] sm:$0xf]
        %v4673 = vld [vmem:[#allocation2 + $0x30] sm:$0xf]
        %v4674 = vld [vmem:[#allocation2 + $0x34] sm:$0xf]
        %v4675 = vld [vmem:[#allocation2 + $0x3c] sm:$0xf]
        %v4676 = vld [vmem:[#allocation2 + $0x40] sm:$0xf]
        %v4677 = vld [vmem:[#allocation2 + $0x48] sm:$0xf]
        %v4678 = vld [vmem:[#allocation2 + $0x4c] sm:$0xf]
        %v4679 = vld [vmem:[#allocation2 + $0x54] sm:$0xf]
        %v4680 = vld [vmem:[#allocation2 + $0x58] sm:$0xf]
        %v4681 = vld [vmem:[#allocation2 + $0x60] sm:$0xf]
        %v4682 = vld [vmem:[#allocation2 + $0x64] sm:$0xf]
        %v4683 = vld [vmem:[#allocation2 + $0x6c] sm:$0xf]
        %v4684 = vld [vmem:[#allocation2 + $0x70] sm:$0xf]
        %v4685 = vld [vmem:[#allocation2 + $0x78] sm:$0xf]
        %v4686 = vld [vmem:[#allocation2 + $0x7c] sm:$0xf]
        %v4687 = vld [vmem:[#allocation2 + $0x84] sm:$0xf]
        %v4688 = vld [vmem:[#allocation2 + $0x88] sm:$0xf]
        %v4689 = vld [vmem:[#allocation2 + $0x90] sm:$0xf]
        %v4690 = vld [vmem:[#allocation2 + $0x94] sm:$0xf]
        %v4691 = vld [vmem:[#allocation2 + $0x9c] sm:$0xf]
        %v4692 = vld [vmem:[#allocation2 + $0xa0] sm:$0xf]
        %v4693 = vld [vmem:[#allocation2 + $0xa8] sm:$0xf]
        %v4694 = vld [vmem:[#allocation2 + $0xac] sm:$0xf]
        %v4695 = vld [vmem:[#allocation2 + $0xb4] sm:$0xf]
        %v4696 = vld [vmem:[#allocation2 + $0xb8] sm:$0xf]
        %v4697 = vld [vmem:[#allocation2 + $0x8] sm:$0x1]
        %v4698 = vld [vmem:[#allocation2 + $0x14] sm:$0x1]
        %v4699 = vld [vmem:[#allocation2 + $0x20] sm:$0x1]
        %v4700 = vld [vmem:[#allocation2 + $0x2c] sm:$0x1]
        %v4701 = vld [vmem:[#allocation2 + $0x38] sm:$0x1]
        %v4702 = vld [vmem:[#allocation2 + $0x44] sm:$0x1]
        %v4703 = vld [vmem:[#allocation2 + $0x50] sm:$0x1]
        %v4704 = vld [vmem:[#allocation2 + $0x5c] sm:$0x1]
        %v4705 = vld [vmem:[#allocation2 + $0x68] sm:$0x1]
        %v4706 = vld [vmem:[#allocation2 + $0x74] sm:$0x1]
        %v4707 = vld [vmem:[#allocation2 + $0x80] sm:$0x1]
        %v4708 = vld [vmem:[#allocation2 + $0x8c] sm:$0x1]
        %v4709 = vld [vmem:[#allocation2 + $0x98] sm:$0x1]
        %v4710 = vld [vmem:[#allocation2 + $0xa4] sm:$0x1]
        %v4711 = vld [vmem:[#allocation2 + $0xb0] sm:$0x1]
        %v4712 = vld [vmem:[#allocation2 + $0xbc] sm:$0x1]
        %v4713 = vld [vmem:[#allocation2] sm:$0xe]
        %v4714 = vld [vmem:[#allocation2 + $0xc] sm:$0xe]
        %v4715 = vld [vmem:[#allocation2 + $0x18] sm:$0xe]
        %v4716 = vld [vmem:[#allocation2 + $0x24] sm:$0xe]
        %v4717 = vld [vmem:[#allocation2 + $0x30] sm:$0xe]
        %v4718 = vld [vmem:[#allocation2 + $0x3c] sm:$0xe]
        %v4719 = vld [vmem:[#allocation2 + $0x48] sm:$0xe]
        %v4720 = vld [vmem:[#allocation2 + $0x54] sm:$0xe]
        %v4721 = vld [vmem:[#allocation2 + $0x60] sm:$0xe]
        %v4722 = vld [vmem:[#allocation2 + $0x6c] sm:$0xe]
        %v4723 = vld [vmem:[#allocation2 + $0x78] sm:$0xe]
        %v4724 = vld [vmem:[#allocation2 + $0x84] sm:$0xe]
        %v4725 = vld [vmem:[#allocation2 + $0x90] sm:$0xe]
        %v4726 = vld [vmem:[#allocation2 + $0x9c] sm:$0xe]
        %v4727 = vld [vmem:[#allocation2 + $0xa8] sm:$0xe]
        %v4728 = vld [vmem:[#allocation2 + $0xb4] sm:$0xe]
        %v4729 = vld [vmem:[%s942] sm:$0xf]
        %v4730 = vld [vmem:[%s942 + $0x4] sm:$0xf]
        %v4731 = vld [vmem:[%s942 + $0xc] sm:$0xf]
        %v4732 = vld [vmem:[%s942 + $0x10] sm:$0xf]
        %v4733 = vld [vmem:[%s942 + $0x18] sm:$0xf]
        %v4734 = vld [vmem:[%s942 + $0x1c] sm:$0xf]
        %v4735 = vld [vmem:[%s942 + $0x24] sm:$0xf]
        %v4736 = vld [vmem:[%s942 + $0x28] sm:$0xf]
        %v4737 = vld [vmem:[%s942 + $0x30] sm:$0xf]
        %v4738 = vld [vmem:[%s942 + $0x34] sm:$0xf]
        %v4739 = vld [vmem:[%s942 + $0x3c] sm:$0xf]
        %v4740 = vld [vmem:[%s942 + $0x40] sm:$0xf]
        %v4741 = vld [vmem:[%s942 + $0x48] sm:$0xf]
        %v4742 = vld [vmem:[%s942 + $0x4c] sm:$0xf]
        %v4743 = vld [vmem:[%s942 + $0x54] sm:$0xf]
        %v4744 = vld [vmem:[%s942 + $0x58] sm:$0xf]
        %v4745 = vld [vmem:[%s942 + $0x60] sm:$0xf]
        %v4746 = vld [vmem:[%s942 + $0x64] sm:$0xf]
        %v4747 = vld [vmem:[%s942 + $0x6c] sm:$0xf]
        %v4748 = vld [vmem:[%s942 + $0x70] sm:$0xf]
        %v4749 = vld [vmem:[%s942 + $0x78] sm:$0xf]
        %v4750 = vld [vmem:[%s942 + $0x7c] sm:$0xf]
        %v4751 = vld [vmem:[%s942 + $0x84] sm:$0xf]
        %v4752 = vld [vmem:[%s942 + $0x88] sm:$0xf]
        %v4753 = vld [vmem:[%s942 + $0x90] sm:$0xf]
        %v4754 = vld [vmem:[%s942 + $0x94] sm:$0xf]
        %v4755 = vld [vmem:[%s942 + $0x9c] sm:$0xf]
        %v4756 = vld [vmem:[%s942 + $0xa0] sm:$0xf]
        %v4757 = vld [vmem:[%s942 + $0xa8] sm:$0xf]
        %v4758 = vld [vmem:[%s942 + $0xac] sm:$0xf]
        %v4759 = vld [vmem:[%s942 + $0xb4] sm:$0xf]
        %v4760 = vld [vmem:[%s942 + $0xb8] sm:$0xf]
        %v4761 = vld [vmem:[%s942 + $0x8] sm:$0x1]
        %v4762 = vld [vmem:[%s942 + $0x14] sm:$0x1]
        %v4763 = vld [vmem:[%s942 + $0x20] sm:$0x1]
        %v4764 = vld [vmem:[%s942 + $0x2c] sm:$0x1]
        %v4765 = vld [vmem:[%s942 + $0x38] sm:$0x1]
        %v4766 = vld [vmem:[%s942 + $0x44] sm:$0x1]
        %v4767 = vld [vmem:[%s942 + $0x50] sm:$0x1]
        %v4768 = vld [vmem:[%s942 + $0x5c] sm:$0x1]
        %v4769 = vld [vmem:[%s942 + $0x68] sm:$0x1]
        %v4770 = vld [vmem:[%s942 + $0x74] sm:$0x1]
        %v4771 = vld [vmem:[%s942 + $0x80] sm:$0x1]
        %v4772 = vld [vmem:[%s942 + $0x8c] sm:$0x1]
        %v4773 = vld [vmem:[%s942 + $0x98] sm:$0x1]
        %v4774 = vld [vmem:[%s942 + $0xa4] sm:$0x1]
        %v4775 = vld [vmem:[%s942 + $0xb0] sm:$0x1]
        %v4776 = vld [vmem:[%s942 + $0xbc] sm:$0x1]
        %v4777 = vld [vmem:[%s942] sm:$0xe]
        %v4778 = vld [vmem:[%s942 + $0xc] sm:$0xe]
        %v4779 = vld [vmem:[%s942 + $0x18] sm:$0xe]
        %v4780 = vld [vmem:[%s942 + $0x24] sm:$0xe]
        %v4781 = vld [vmem:[%s942 + $0x30] sm:$0xe]
        %v4782 = vld [vmem:[%s942 + $0x3c] sm:$0xe]
        %v4783 = vld [vmem:[%s942 + $0x48] sm:$0xe]
        %v4784 = vld [vmem:[%s942 + $0x54] sm:$0xe]
        %v4785 = vld [vmem:[%s942 + $0x60] sm:$0xe]
        %v4786 = vld [vmem:[%s942 + $0x6c] sm:$0xe]
        %v4787 = vld [vmem:[%s942 + $0x78] sm:$0xe]
        %v4788 = vld [vmem:[%s942 + $0x84] sm:$0xe]
        %v4789 = vld [vmem:[%s942 + $0x90] sm:$0xe]
        %v4790 = vld [vmem:[%s942 + $0x9c] sm:$0xe]
        %v4791 = vld [vmem:[%s942 + $0xa8] sm:$0xe]
        %v4792 = vld [vmem:[%s942 + $0xb4] sm:$0xe]
        %v4793 = vld [vmem:[%s1188] sm:$0xf]
        %v4794 = vld [vmem:[%s1188 + $0x4] sm:$0xf]
        %v4795 = vld [vmem:[%s1188 + $0xc] sm:$0xf]
        %v4796 = vld [vmem:[%s1188 + $0x10] sm:$0xf]
        %v4797 = vld [vmem:[%s1188 + $0x18] sm:$0xf]
        %v4798 = vld [vmem:[%s1188 + $0x1c] sm:$0xf]
        %v4799 = vld [vmem:[%s1188 + $0x24] sm:$0xf]
        %v4800 = vld [vmem:[%s1188 + $0x28] sm:$0xf]
        %v4801 = vld [vmem:[%s1188 + $0x30] sm:$0xf]
        %v4802 = vld [vmem:[%s1188 + $0x34] sm:$0xf]
        %v4803 = vld [vmem:[%s1188 + $0x3c] sm:$0xf]
        %v4804 = vld [vmem:[%s1188 + $0x40] sm:$0xf]
        %v4805 = vld [vmem:[%s1188 + $0x48] sm:$0xf]
        %v4806 = vld [vmem:[%s1188 + $0x4c] sm:$0xf]
        %v4807 = vld [vmem:[%s1188 + $0x54] sm:$0xf]
        %v4808 = vld [vmem:[%s1188 + $0x58] sm:$0xf]
        %v4809 = vld [vmem:[%s1188 + $0x60] sm:$0xf]
        %v4810 = vld [vmem:[%s1188 + $0x64] sm:$0xf]
        %v4811 = vld [vmem:[%s1188 + $0x6c] sm:$0xf]
        %v4812 = vld [vmem:[%s1188 + $0x70] sm:$0xf]
        %v4813 = vld [vmem:[%s1188 + $0x78] sm:$0xf]
        %v4814 = vld [vmem:[%s1188 + $0x7c] sm:$0xf]
        %v4815 = vld [vmem:[%s1188 + $0x84] sm:$0xf]
        %v4816 = vld [vmem:[%s1188 + $0x88] sm:$0xf]
        %v4817 = vld [vmem:[%s1188 + $0x90] sm:$0xf]
        %v4818 = vld [vmem:[%s1188 + $0x94] sm:$0xf]
        %v4819 = vld [vmem:[%s1188 + $0x9c] sm:$0xf]
        %v4820 = vld [vmem:[%s1188 + $0xa0] sm:$0xf]
        %v4821 = vld [vmem:[%s1188 + $0xa8] sm:$0xf]
        %v4822 = vld [vmem:[%s1188 + $0xac] sm:$0xf]
        %v4823 = vld [vmem:[%s1188 + $0xb4] sm:$0xf]
        %v4824 = vld [vmem:[%s1188 + $0xb8] sm:$0xf]
        %v4825 = vld [vmem:[%s1188 + $0x8] sm:$0x1]
        %v4826 = vld [vmem:[%s1188 + $0x14] sm:$0x1]
        %v4827 = vld [vmem:[%s1188 + $0x20] sm:$0x1]
        %v4828 = vld [vmem:[%s1188 + $0x2c] sm:$0x1]
        %v4829 = vld [vmem:[%s1188 + $0x38] sm:$0x1]
        %v4830 = vld [vmem:[%s1188 + $0x44] sm:$0x1]
        %v4831 = vld [vmem:[%s1188 + $0x50] sm:$0x1]
        %v4832 = vld [vmem:[%s1188 + $0x5c] sm:$0x1]
        %v4833 = vld [vmem:[%s1188 + $0x68] sm:$0x1]
        %v4834 = vld [vmem:[%s1188 + $0x74] sm:$0x1]
        %v4835 = vld [vmem:[%s1188 + $0x80] sm:$0x1]
        %v4836 = vld [vmem:[%s1188 + $0x8c] sm:$0x1]
        %v4837 = vld [vmem:[%s1188 + $0x98] sm:$0x1]
        %v4838 = vld [vmem:[%s1188 + $0xa4] sm:$0x1]
        %v4839 = vld [vmem:[%s1188 + $0xb0] sm:$0x1]
        %v4840 = vld [vmem:[%s1188 + $0xbc] sm:$0x1]
        %v4841 = vld [vmem:[%s1188] sm:$0xe]
        %v4842 = vld [vmem:[%s1188 + $0xc] sm:$0xe]
        %v4843 = vld [vmem:[%s1188 + $0x18] sm:$0xe]
        %v4844 = vld [vmem:[%s1188 + $0x24] sm:$0xe]
        %v4845 = vld [vmem:[%s1188 + $0x30] sm:$0xe]
        %v4846 = vld [vmem:[%s1188 + $0x3c] sm:$0xe]
        %v4847 = vld [vmem:[%s1188 + $0x48] sm:$0xe]
        %v4848 = vld [vmem:[%s1188 + $0x54] sm:$0xe]
        %v4849 = vld [vmem:[%s1188 + $0x60] sm:$0xe]
        %v4850 = vld [vmem:[%s1188 + $0x6c] sm:$0xe]
        %v4851 = vld [vmem:[%s1188 + $0x78] sm:$0xe]
        %v4852 = vld [vmem:[%s1188 + $0x84] sm:$0xe]
        %v4853 = vld [vmem:[%s1188 + $0x90] sm:$0xe]
        %v4854 = vld [vmem:[%s1188 + $0x9c] sm:$0xe]
        %v4855 = vld [vmem:[%s1188 + $0xa8] sm:$0xe]
        %v4856 = vld [vmem:[%s1188 + $0xb4] sm:$0xe]
        %v4889 = vunpack.c.l.b16 %v4665
        %v4890 = vunpack.c.l.b16 %v4666
        %v4891 = vunpack.c.l.b16 %v4667
        %v4892 = vunpack.c.l.b16 %v4668
        %v4893 = vunpack.c.l.b16 %v4669
        %v4894 = vunpack.c.l.b16 %v4670
        %v4895 = vunpack.c.l.b16 %v4671
        %v4896 = vunpack.c.l.b16 %v4672
        %v4897 = vunpack.c.l.b16 %v4673
        %v4898 = vunpack.c.l.b16 %v4674
        %v4899 = vunpack.c.l.b16 %v4675
        %v4900 = vunpack.c.l.b16 %v4676
        %v4901 = vunpack.c.l.b16 %v4677
        %v4902 = vunpack.c.l.b16 %v4678
        %v4903 = vunpack.c.l.b16 %v4679
        %v4904 = vunpack.c.l.b16 %v4680
        %v4905 = vunpack.c.l.b16 %v4681
        %v4906 = vunpack.c.l.b16 %v4682
        %v4907 = vunpack.c.l.b16 %v4683
        %v4908 = vunpack.c.l.b16 %v4684
        %v4909 = vunpack.c.l.b16 %v4685
        %v4910 = vunpack.c.l.b16 %v4686
        %v4911 = vunpack.c.l.b16 %v4687
        %v4912 = vunpack.c.l.b16 %v4688
        %v4913 = vunpack.c.l.b16 %v4689
        %v4914 = vunpack.c.l.b16 %v4690
        %v4915 = vunpack.c.l.b16 %v4691
        %v4916 = vunpack.c.l.b16 %v4692
        %v4917 = vunpack.c.l.b16 %v4693
        %v4918 = vunpack.c.l.b16 %v4694
        %v4919 = vunpack.c.l.b16 %v4695
        %v4920 = vunpack.c.l.b16 %v4696
        %v4921 = vpack.c.b16 %v4890, %v4889
        %v4922 = vpack.c.b16 %v4892, %v4891
        %v4923 = vpack.c.b16 %v4894, %v4893
        %v4924 = vpack.c.b16 %v4896, %v4895
        %v4925 = vpack.c.b16 %v4898, %v4897
        %v4926 = vpack.c.b16 %v4900, %v4899
        %v4927 = vpack.c.b16 %v4902, %v4901
        %v4928 = vpack.c.b16 %v4904, %v4903
        %v4929 = vpack.c.b16 %v4906, %v4905
        %v4930 = vpack.c.b16 %v4908, %v4907
        %v4931 = vpack.c.b16 %v4910, %v4909
        %v4932 = vpack.c.b16 %v4912, %v4911
        %v4933 = vpack.c.b16 %v4914, %v4913
        %v4934 = vpack.c.b16 %v4916, %v4915
        %v4935 = vpack.c.b16 %v4918, %v4917
        %v4936 = vpack.c.b16 %v4920, %v4919
        %v4969 = vunpack.c.l.b16 %v4697
        %v4970 = vunpack.c.l.b16 %v4698
        %v4971 = vunpack.c.l.b16 %v4699
        %v4972 = vunpack.c.l.b16 %v4700
        %v4973 = vunpack.c.l.b16 %v4701
        %v4974 = vunpack.c.l.b16 %v4702
        %v4975 = vunpack.c.l.b16 %v4703
        %v4976 = vunpack.c.l.b16 %v4704
        %v4977 = vunpack.c.l.b16 %v4705
        %v4978 = vunpack.c.l.b16 %v4706
        %v4979 = vunpack.c.l.b16 %v4707
        %v4980 = vunpack.c.l.b16 %v4708
        %v4981 = vunpack.c.l.b16 %v4709
        %v4982 = vunpack.c.l.b16 %v4710
        %v4983 = vunpack.c.l.b16 %v4711
        %v4984 = vunpack.c.l.b16 %v4712
        %v4985 = vpack.c.b16 %v4969, %v4969
        %v4986 = vpack.c.b16 %v4970, %v4970
        %v4987 = vpack.c.b16 %v4971, %v4971
        %v4988 = vpack.c.b16 %v4972, %v4972
        %v4989 = vpack.c.b16 %v4973, %v4973
        %v4990 = vpack.c.b16 %v4974, %v4974
        %v4991 = vpack.c.b16 %v4975, %v4975
        %v4992 = vpack.c.b16 %v4976, %v4976
        %v4993 = vpack.c.b16 %v4977, %v4977
        %v4994 = vpack.c.b16 %v4978, %v4978
        %v4995 = vpack.c.b16 %v4979, %v4979
        %v4996 = vpack.c.b16 %v4980, %v4980
        %v4997 = vpack.c.b16 %v4981, %v4981
        %v4998 = vpack.c.b16 %v4982, %v4982
        %v4999 = vpack.c.b16 %v4983, %v4983
        %v5000 = vpack.c.b16 %v4984, %v4984
        %v5002 = vshrl.u32 %v4921, 16
        %v5004 = vshll.u32 %v4921, 16
        %v5006 = vrot.slane %v5004, 1
        %v5007 = vor.u32 %v5002, %v5006
        %v5009 = vshll.u32 %v4985, 16
        %v5011 = vrot.slane %v5009, 1
        %v5012 = vsel %vm1397, %v5007, %v5011
        %v5014 = vshrl.u32 %v4922, 16
        %v5016 = vshll.u32 %v4922, 16
        %v5018 = vrot.slane %v5016, 1
        %v5019 = vor.u32 %v5014, %v5018
        %v5021 = vshll.u32 %v4986, 16
        %v5023 = vrot.slane %v5021, 1
        %v5024 = vsel %vm1397, %v5019, %v5023
        %v5026 = vshrl.u32 %v4923, 16
        %v5028 = vshll.u32 %v4923, 16
        %v5030 = vrot.slane %v5028, 1
        %v5031 = vor.u32 %v5026, %v5030
        %v5033 = vshll.u32 %v4987, 16
        %v5035 = vrot.slane %v5033, 1
        %v5036 = vsel %vm1397, %v5031, %v5035
        %v5038 = vshrl.u32 %v4924, 16
        %v5040 = vshll.u32 %v4924, 16
        %v5042 = vrot.slane %v5040, 1
        %v5043 = vor.u32 %v5038, %v5042
        %v5045 = vshll.u32 %v4988, 16
        %v5047 = vrot.slane %v5045, 1
        %v5048 = vsel %vm1397, %v5043, %v5047
        %v5050 = vshrl.u32 %v4925, 16
        %v5052 = vshll.u32 %v4925, 16
        %v5054 = vrot.slane %v5052, 1
        %v5055 = vor.u32 %v5050, %v5054
        %v5057 = vshll.u32 %v4989, 16
        %v5059 = vrot.slane %v5057, 1
        %v5060 = vsel %vm1397, %v5055, %v5059
        %v5062 = vshrl.u32 %v4926, 16
        %v5064 = vshll.u32 %v4926, 16
        %v5066 = vrot.slane %v5064, 1
        %v5067 = vor.u32 %v5062, %v5066
        %v5069 = vshll.u32 %v4990, 16
        %v5071 = vrot.slane %v5069, 1
        %v5072 = vsel %vm1397, %v5067, %v5071
        %v5074 = vshrl.u32 %v4927, 16
        %v5076 = vshll.u32 %v4927, 16
        %v5078 = vrot.slane %v5076, 1
        %v5079 = vor.u32 %v5074, %v5078
        %v5081 = vshll.u32 %v4991, 16
        %v5083 = vrot.slane %v5081, 1
        %v5084 = vsel %vm1397, %v5079, %v5083
        %v5086 = vshrl.u32 %v4928, 16
        %v5088 = vshll.u32 %v4928, 16
        %v5090 = vrot.slane %v5088, 1
        %v5091 = vor.u32 %v5086, %v5090
        %v5093 = vshll.u32 %v4992, 16
        %v5095 = vrot.slane %v5093, 1
        %v5096 = vsel %vm1397, %v5091, %v5095
        %v5098 = vshrl.u32 %v4929, 16
        %v5100 = vshll.u32 %v4929, 16
        %v5102 = vrot.slane %v5100, 1
        %v5103 = vor.u32 %v5098, %v5102
        %v5105 = vshll.u32 %v4993, 16
        %v5107 = vrot.slane %v5105, 1
        %v5108 = vsel %vm1397, %v5103, %v5107
        %v5110 = vshrl.u32 %v4930, 16
        %v5112 = vshll.u32 %v4930, 16
        %v5114 = vrot.slane %v5112, 1
        %v5115 = vor.u32 %v5110, %v5114
        %v5117 = vshll.u32 %v4994, 16
        %v5119 = vrot.slane %v5117, 1
        %v5120 = vsel %vm1397, %v5115, %v5119
        %v5122 = vshrl.u32 %v4931, 16
        %v5124 = vshll.u32 %v4931, 16
        %v5126 = vrot.slane %v5124, 1
        %v5127 = vor.u32 %v5122, %v5126
        %v5129 = vshll.u32 %v4995, 16
        %v5131 = vrot.slane %v5129, 1
        %v5132 = vsel %vm1397, %v5127, %v5131
        %v5134 = vshrl.u32 %v4932, 16
        %v5136 = vshll.u32 %v4932, 16
        %v5138 = vrot.slane %v5136, 1
        %v5139 = vor.u32 %v5134, %v5138
        %v5141 = vshll.u32 %v4996, 16
        %v5143 = vrot.slane %v5141, 1
        %v5144 = vsel %vm1397, %v5139, %v5143
        %v5146 = vshrl.u32 %v4933, 16
        %v5148 = vshll.u32 %v4933, 16
        %v5150 = vrot.slane %v5148, 1
        %v5151 = vor.u32 %v5146, %v5150
        %v5153 = vshll.u32 %v4997, 16
        %v5155 = vrot.slane %v5153, 1
        %v5156 = vsel %vm1397, %v5151, %v5155
        %v5158 = vshrl.u32 %v4934, 16
        %v5160 = vshll.u32 %v4934, 16
        %v5162 = vrot.slane %v5160, 1
        %v5163 = vor.u32 %v5158, %v5162
        %v5165 = vshll.u32 %v4998, 16
        %v5167 = vrot.slane %v5165, 1
        %v5168 = vsel %vm1397, %v5163, %v5167
        %v5170 = vshrl.u32 %v4935, 16
        %v5172 = vshll.u32 %v4935, 16
        %v5174 = vrot.slane %v5172, 1
        %v5175 = vor.u32 %v5170, %v5174
        %v5177 = vshll.u32 %v4999, 16
        %v5179 = vrot.slane %v5177, 1
        %v5180 = vsel %vm1397, %v5175, %v5179
        %v5182 = vshrl.u32 %v4936, 16
        %v5184 = vshll.u32 %v4936, 16
        %v5186 = vrot.slane %v5184, 1
        %v5187 = vor.u32 %v5182, %v5186
        %v5189 = vshll.u32 %v5000, 16
        %v5191 = vrot.slane %v5189, 1
        %v5192 = vsel %vm1397, %v5187, %v5191
        %v5225 = vunpack.c.l.b16 %v4713
        %v5226 = vunpack.c.l.b16 %v4714
        %v5227 = vunpack.c.l.b16 %v4715
        %v5228 = vunpack.c.l.b16 %v4716
        %v5229 = vunpack.c.l.b16 %v4717
        %v5230 = vunpack.c.l.b16 %v4718
        %v5231 = vunpack.c.l.b16 %v4719
        %v5232 = vunpack.c.l.b16 %v4720
        %v5233 = vunpack.c.l.b16 %v4721
        %v5234 = vunpack.c.l.b16 %v4722
        %v5235 = vunpack.c.l.b16 %v4723
        %v5236 = vunpack.c.l.b16 %v4724
        %v5237 = vunpack.c.l.b16 %v4725
        %v5238 = vunpack.c.l.b16 %v4726
        %v5239 = vunpack.c.l.b16 %v4727
        %v5240 = vunpack.c.l.b16 %v4728
        %v5241 = vpack.c.b16 %v4890, %v5225
        %v5242 = vpack.c.b16 %v4892, %v5226
        %v5243 = vpack.c.b16 %v4894, %v5227
        %v5244 = vpack.c.b16 %v4896, %v5228
        %v5245 = vpack.c.b16 %v4898, %v5229
        %v5246 = vpack.c.b16 %v4900, %v5230
        %v5247 = vpack.c.b16 %v4902, %v5231
        %v5248 = vpack.c.b16 %v4904, %v5232
        %v5249 = vpack.c.b16 %v4906, %v5233
        %v5250 = vpack.c.b16 %v4908, %v5234
        %v5251 = vpack.c.b16 %v4910, %v5235
        %v5252 = vpack.c.b16 %v4912, %v5236
        %v5253 = vpack.c.b16 %v4914, %v5237
        %v5254 = vpack.c.b16 %v4916, %v5238
        %v5255 = vpack.c.b16 %v4918, %v5239
        %v5256 = vpack.c.b16 %v4920, %v5240
        %v5257 = vrot.slane %v5241, 1
        %v5258 = vrot.slane %v4985, 1
        %v5259 = vsel %vm1654, %v5257, %v5258
        %v5260 = vrot.slane %v5242, 1
        %v5261 = vrot.slane %v4986, 1
        %v5262 = vsel %vm1654, %v5260, %v5261
        %v5263 = vrot.slane %v5243, 1
        %v5264 = vrot.slane %v4987, 1
        %v5265 = vsel %vm1654, %v5263, %v5264
        %v5266 = vrot.slane %v5244, 1
        %v5267 = vrot.slane %v4988, 1
        %v5268 = vsel %vm1654, %v5266, %v5267
        %v5269 = vrot.slane %v5245, 1
        %v5270 = vrot.slane %v4989, 1
        %v5271 = vsel %vm1654, %v5269, %v5270
        %v5272 = vrot.slane %v5246, 1
        %v5273 = vrot.slane %v4990, 1
        %v5274 = vsel %vm1654, %v5272, %v5273
        %v5275 = vrot.slane %v5247, 1
        %v5276 = vrot.slane %v4991, 1
        %v5277 = vsel %vm1654, %v5275, %v5276
        %v5278 = vrot.slane %v5248, 1
        %v5279 = vrot.slane %v4992, 1
        %v5280 = vsel %vm1654, %v5278, %v5279
        %v5281 = vrot.slane %v5249, 1
        %v5282 = vrot.slane %v4993, 1
        %v5283 = vsel %vm1654, %v5281, %v5282
        %v5284 = vrot.slane %v5250, 1
        %v5285 = vrot.slane %v4994, 1
        %v5286 = vsel %vm1654, %v5284, %v5285
        %v5287 = vrot.slane %v5251, 1
        %v5288 = vrot.slane %v4995, 1
        %v5289 = vsel %vm1654, %v5287, %v5288
        %v5290 = vrot.slane %v5252, 1
        %v5291 = vrot.slane %v4996, 1
        %v5292 = vsel %vm1654, %v5290, %v5291
        %v5293 = vrot.slane %v5253, 1
        %v5294 = vrot.slane %v4997, 1
        %v5295 = vsel %vm1654, %v5293, %v5294
        %v5296 = vrot.slane %v5254, 1
        %v5297 = vrot.slane %v4998, 1
        %v5298 = vsel %vm1654, %v5296, %v5297
        %v5299 = vrot.slane %v5255, 1
        %v5300 = vrot.slane %v4999, 1
        %v5301 = vsel %vm1654, %v5299, %v5300
        %v5302 = vrot.slane %v5256, 1
        %v5303 = vrot.slane %v5000, 1
        %v5304 = vsel %vm1654, %v5302, %v5303
        %v5353 = vunpack.c.l.b16 %v4729
        %v5354 = vunpack.c.l.b16 %v4730
        %v5355 = vunpack.c.l.b16 %v4731
        %v5356 = vunpack.c.l.b16 %v4732
        %v5357 = vunpack.c.l.b16 %v4733
        %v5358 = vunpack.c.l.b16 %v4734
        %v5359 = vunpack.c.l.b16 %v4735
        %v5360 = vunpack.c.l.b16 %v4736
        %v5361 = vunpack.c.l.b16 %v4737
        %v5362 = vunpack.c.l.b16 %v4738
        %v5363 = vunpack.c.l.b16 %v4739
        %v5364 = vunpack.c.l.b16 %v4740
        %v5365 = vunpack.c.l.b16 %v4741
        %v5366 = vunpack.c.l.b16 %v4742
        %v5367 = vunpack.c.l.b16 %v4743
        %v5368 = vunpack.c.l.b16 %v4744
        %v5369 = vunpack.c.l.b16 %v4745
        %v5370 = vunpack.c.l.b16 %v4746
        %v5371 = vunpack.c.l.b16 %v4747
        %v5372 = vunpack.c.l.b16 %v4748
        %v5373 = vunpack.c.l.b16 %v4749
        %v5374 = vunpack.c.l.b16 %v4750
        %v5375 = vunpack.c.l.b16 %v4751
        %v5376 = vunpack.c.l.b16 %v4752
        %v5377 = vunpack.c.l.b16 %v4753
        %v5378 = vunpack.c.l.b16 %v4754
        %v5379 = vunpack.c.l.b16 %v4755
        %v5380 = vunpack.c.l.b16 %v4756
        %v5381 = vunpack.c.l.b16 %v4757
        %v5382 = vunpack.c.l.b16 %v4758
        %v5383 = vunpack.c.l.b16 %v4759
        %v5384 = vunpack.c.l.b16 %v4760
        %v5385 = vpack.c.b16 %v5354, %v5353
        %v5386 = vpack.c.b16 %v5356, %v5355
        %v5387 = vpack.c.b16 %v5358, %v5357
        %v5388 = vpack.c.b16 %v5360, %v5359
        %v5389 = vpack.c.b16 %v5362, %v5361
        %v5390 = vpack.c.b16 %v5364, %v5363
        %v5391 = vpack.c.b16 %v5366, %v5365
        %v5392 = vpack.c.b16 %v5368, %v5367
        %v5393 = vpack.c.b16 %v5370, %v5369
        %v5394 = vpack.c.b16 %v5372, %v5371
        %v5395 = vpack.c.b16 %v5374, %v5373
        %v5396 = vpack.c.b16 %v5376, %v5375
        %v5397 = vpack.c.b16 %v5378, %v5377
        %v5398 = vpack.c.b16 %v5380, %v5379
        %v5399 = vpack.c.b16 %v5382, %v5381
        %v5400 = vpack.c.b16 %v5384, %v5383
        %v5433 = vunpack.c.l.b16 %v4761
        %v5434 = vunpack.c.l.b16 %v4762
        %v5435 = vunpack.c.l.b16 %v4763
        %v5436 = vunpack.c.l.b16 %v4764
        %v5437 = vunpack.c.l.b16 %v4765
        %v5438 = vunpack.c.l.b16 %v4766
        %v5439 = vunpack.c.l.b16 %v4767
        %v5440 = vunpack.c.l.b16 %v4768
        %v5441 = vunpack.c.l.b16 %v4769
        %v5442 = vunpack.c.l.b16 %v4770
        %v5443 = vunpack.c.l.b16 %v4771
        %v5444 = vunpack.c.l.b16 %v4772
        %v5445 = vunpack.c.l.b16 %v4773
        %v5446 = vunpack.c.l.b16 %v4774
        %v5447 = vunpack.c.l.b16 %v4775
        %v5448 = vunpack.c.l.b16 %v4776
        %v5449 = vpack.c.b16 %v5433, %v5433
        %v5450 = vpack.c.b16 %v5434, %v5434
        %v5451 = vpack.c.b16 %v5435, %v5435
        %v5452 = vpack.c.b16 %v5436, %v5436
        %v5453 = vpack.c.b16 %v5437, %v5437
        %v5454 = vpack.c.b16 %v5438, %v5438
        %v5455 = vpack.c.b16 %v5439, %v5439
        %v5456 = vpack.c.b16 %v5440, %v5440
        %v5457 = vpack.c.b16 %v5441, %v5441
        %v5458 = vpack.c.b16 %v5442, %v5442
        %v5459 = vpack.c.b16 %v5443, %v5443
        %v5460 = vpack.c.b16 %v5444, %v5444
        %v5461 = vpack.c.b16 %v5445, %v5445
        %v5462 = vpack.c.b16 %v5446, %v5446
        %v5463 = vpack.c.b16 %v5447, %v5447
        %v5464 = vpack.c.b16 %v5448, %v5448
        %v5466 = vshrl.u32 %v5385, 16
        %v5468 = vshll.u32 %v5385, 16
        %v5470 = vrot.slane %v5468, 1
        %v5471 = vor.u32 %v5466, %v5470
        %v5473 = vshll.u32 %v5449, 16
        %v5475 = vrot.slane %v5473, 1
        %v5476 = vsel %vm1397, %v5471, %v5475
        %v5478 = vshrl.u32 %v5386, 16
        %v5480 = vshll.u32 %v5386, 16
        %v5482 = vrot.slane %v5480, 1
        %v5483 = vor.u32 %v5478, %v5482
        %v5485 = vshll.u32 %v5450, 16
        %v5487 = vrot.slane %v5485, 1
        %v5488 = vsel %vm1397, %v5483, %v5487
        %v5490 = vshrl.u32 %v5387, 16
        %v5492 = vshll.u32 %v5387, 16
        %v5494 = vrot.slane %v5492, 1
        %v5495 = vor.u32 %v5490, %v5494
        %v5497 = vshll.u32 %v5451, 16
        %v5499 = vrot.slane %v5497, 1
        %v5500 = vsel %vm1397, %v5495, %v5499
        %v5502 = vshrl.u32 %v5388, 16
        %v5504 = vshll.u32 %v5388, 16
        %v5506 = vrot.slane %v5504, 1
        %v5507 = vor.u32 %v5502, %v5506
        %v5509 = vshll.u32 %v5452, 16
        %v5511 = vrot.slane %v5509, 1
        %v5512 = vsel %vm1397, %v5507, %v5511
        %v5514 = vshrl.u32 %v5389, 16
        %v5516 = vshll.u32 %v5389, 16
        %v5518 = vrot.slane %v5516, 1
        %v5519 = vor.u32 %v5514, %v5518
        %v5521 = vshll.u32 %v5453, 16
        %v5523 = vrot.slane %v5521, 1
        %v5524 = vsel %vm1397, %v5519, %v5523
        %v5526 = vshrl.u32 %v5390, 16
        %v5528 = vshll.u32 %v5390, 16
        %v5530 = vrot.slane %v5528, 1
        %v5531 = vor.u32 %v5526, %v5530
        %v5533 = vshll.u32 %v5454, 16
        %v5535 = vrot.slane %v5533, 1
        %v5536 = vsel %vm1397, %v5531, %v5535
        %v5538 = vshrl.u32 %v5391, 16
        %v5540 = vshll.u32 %v5391, 16
        %v5542 = vrot.slane %v5540, 1
        %v5543 = vor.u32 %v5538, %v5542
        %v5545 = vshll.u32 %v5455, 16
        %v5547 = vrot.slane %v5545, 1
        %v5548 = vsel %vm1397, %v5543, %v5547
        %v5550 = vshrl.u32 %v5392, 16
        %v5552 = vshll.u32 %v5392, 16
        %v5554 = vrot.slane %v5552, 1
        %v5555 = vor.u32 %v5550, %v5554
        %v5557 = vshll.u32 %v5456, 16
        %v5559 = vrot.slane %v5557, 1
        %v5560 = vsel %vm1397, %v5555, %v5559
        %v5562 = vshrl.u32 %v5393, 16
        %v5564 = vshll.u32 %v5393, 16
        %v5566 = vrot.slane %v5564, 1
        %v5567 = vor.u32 %v5562, %v5566
        %v5569 = vshll.u32 %v5457, 16
        %v5571 = vrot.slane %v5569, 1
        %v5572 = vsel %vm1397, %v5567, %v5571
        %v5574 = vshrl.u32 %v5394, 16
        %v5576 = vshll.u32 %v5394, 16
        %v5578 = vrot.slane %v5576, 1
        %v5579 = vor.u32 %v5574, %v5578
        %v5581 = vshll.u32 %v5458, 16
        %v5583 = vrot.slane %v5581, 1
        %v5584 = vsel %vm1397, %v5579, %v5583
        %v5586 = vshrl.u32 %v5395, 16
        %v5588 = vshll.u32 %v5395, 16
        %v5590 = vrot.slane %v5588, 1
        %v5591 = vor.u32 %v5586, %v5590
        %v5593 = vshll.u32 %v5459, 16
        %v5595 = vrot.slane %v5593, 1
        %v5596 = vsel %vm1397, %v5591, %v5595
        %v5598 = vshrl.u32 %v5396, 16
        %v5600 = vshll.u32 %v5396, 16
        %v5602 = vrot.slane %v5600, 1
        %v5603 = vor.u32 %v5598, %v5602
        %v5605 = vshll.u32 %v5460, 16
        %v5607 = vrot.slane %v5605, 1
        %v5608 = vsel %vm1397, %v5603, %v5607
        %v5610 = vshrl.u32 %v5397, 16
        %v5612 = vshll.u32 %v5397, 16
        %v5614 = vrot.slane %v5612, 1
        %v5615 = vor.u32 %v5610, %v5614
        %v5617 = vshll.u32 %v5461, 16
        %v5619 = vrot.slane %v5617, 1
        %v5620 = vsel %vm1397, %v5615, %v5619
        %v5622 = vshrl.u32 %v5398, 16
        %v5624 = vshll.u32 %v5398, 16
        %v5626 = vrot.slane %v5624, 1
        %v5627 = vor.u32 %v5622, %v5626
        %v5629 = vshll.u32 %v5462, 16
        %v5631 = vrot.slane %v5629, 1
        %v5632 = vsel %vm1397, %v5627, %v5631
        %v5634 = vshrl.u32 %v5399, 16
        %v5636 = vshll.u32 %v5399, 16
        %v5638 = vrot.slane %v5636, 1
        %v5639 = vor.u32 %v5634, %v5638
        %v5641 = vshll.u32 %v5463, 16
        %v5643 = vrot.slane %v5641, 1
        %v5644 = vsel %vm1397, %v5639, %v5643
        %v5646 = vshrl.u32 %v5400, 16
        %v5648 = vshll.u32 %v5400, 16
        %v5650 = vrot.slane %v5648, 1
        %v5651 = vor.u32 %v5646, %v5650
        %v5653 = vshll.u32 %v5464, 16
        %v5655 = vrot.slane %v5653, 1
        %v5656 = vsel %vm1397, %v5651, %v5655
        %v5689 = vunpack.c.l.b16 %v4777
        %v5690 = vunpack.c.l.b16 %v4778
        %v5691 = vunpack.c.l.b16 %v4779
        %v5692 = vunpack.c.l.b16 %v4780
        %v5693 = vunpack.c.l.b16 %v4781
        %v5694 = vunpack.c.l.b16 %v4782
        %v5695 = vunpack.c.l.b16 %v4783
        %v5696 = vunpack.c.l.b16 %v4784
        %v5697 = vunpack.c.l.b16 %v4785
        %v5698 = vunpack.c.l.b16 %v4786
        %v5699 = vunpack.c.l.b16 %v4787
        %v5700 = vunpack.c.l.b16 %v4788
        %v5701 = vunpack.c.l.b16 %v4789
        %v5702 = vunpack.c.l.b16 %v4790
        %v5703 = vunpack.c.l.b16 %v4791
        %v5704 = vunpack.c.l.b16 %v4792
        %v5705 = vpack.c.b16 %v5354, %v5689
        %v5706 = vpack.c.b16 %v5356, %v5690
        %v5707 = vpack.c.b16 %v5358, %v5691
        %v5708 = vpack.c.b16 %v5360, %v5692
        %v5709 = vpack.c.b16 %v5362, %v5693
        %v5710 = vpack.c.b16 %v5364, %v5694
        %v5711 = vpack.c.b16 %v5366, %v5695
        %v5712 = vpack.c.b16 %v5368, %v5696
        %v5713 = vpack.c.b16 %v5370, %v5697
        %v5714 = vpack.c.b16 %v5372, %v5698
        %v5715 = vpack.c.b16 %v5374, %v5699
        %v5716 = vpack.c.b16 %v5376, %v5700
        %v5717 = vpack.c.b16 %v5378, %v5701
        %v5718 = vpack.c.b16 %v5380, %v5702
        %v5719 = vpack.c.b16 %v5382, %v5703
        %v5720 = vpack.c.b16 %v5384, %v5704
        %v5721 = vrot.slane %v5705, 1
        %v5722 = vrot.slane %v5449, 1
        %v5723 = vsel %vm1654, %v5721, %v5722
        %v5724 = vrot.slane %v5706, 1
        %v5725 = vrot.slane %v5450, 1
        %v5726 = vsel %vm1654, %v5724, %v5725
        %v5727 = vrot.slane %v5707, 1
        %v5728 = vrot.slane %v5451, 1
        %v5729 = vsel %vm1654, %v5727, %v5728
        %v5730 = vrot.slane %v5708, 1
        %v5731 = vrot.slane %v5452, 1
        %v5732 = vsel %vm1654, %v5730, %v5731
        %v5733 = vrot.slane %v5709, 1
        %v5734 = vrot.slane %v5453, 1
        %v5735 = vsel %vm1654, %v5733, %v5734
        %v5736 = vrot.slane %v5710, 1
        %v5737 = vrot.slane %v5454, 1
        %v5738 = vsel %vm1654, %v5736, %v5737
        %v5739 = vrot.slane %v5711, 1
        %v5740 = vrot.slane %v5455, 1
        %v5741 = vsel %vm1654, %v5739, %v5740
        %v5742 = vrot.slane %v5712, 1
        %v5743 = vrot.slane %v5456, 1
        %v5744 = vsel %vm1654, %v5742, %v5743
        %v5745 = vrot.slane %v5713, 1
        %v5746 = vrot.slane %v5457, 1
        %v5747 = vsel %vm1654, %v5745, %v5746
        %v5748 = vrot.slane %v5714, 1
        %v5749 = vrot.slane %v5458, 1
        %v5750 = vsel %vm1654, %v5748, %v5749
        %v5751 = vrot.slane %v5715, 1
        %v5752 = vrot.slane %v5459, 1
        %v5753 = vsel %vm1654, %v5751, %v5752
        %v5754 = vrot.slane %v5716, 1
        %v5755 = vrot.slane %v5460, 1
        %v5756 = vsel %vm1654, %v5754, %v5755
        %v5757 = vrot.slane %v5717, 1
        %v5758 = vrot.slane %v5461, 1
        %v5759 = vsel %vm1654, %v5757, %v5758
        %v5760 = vrot.slane %v5718, 1
        %v5761 = vrot.slane %v5462, 1
        %v5762 = vsel %vm1654, %v5760, %v5761
        %v5763 = vrot.slane %v5719, 1
        %v5764 = vrot.slane %v5463, 1
        %v5765 = vsel %vm1654, %v5763, %v5764
        %v5766 = vrot.slane %v5720, 1
        %v5767 = vrot.slane %v5464, 1
        %v5768 = vsel %vm1654, %v5766, %v5767
        %v5817 = vunpack.c.l.b16 %v4793
        %v5818 = vunpack.c.l.b16 %v4794
        %v5819 = vunpack.c.l.b16 %v4795
        %v5820 = vunpack.c.l.b16 %v4796
        %v5821 = vunpack.c.l.b16 %v4797
        %v5822 = vunpack.c.l.b16 %v4798
        %v5823 = vunpack.c.l.b16 %v4799
        %v5824 = vunpack.c.l.b16 %v4800
        %v5825 = vunpack.c.l.b16 %v4801
        %v5826 = vunpack.c.l.b16 %v4802
        %v5827 = vunpack.c.l.b16 %v4803
        %v5828 = vunpack.c.l.b16 %v4804
        %v5829 = vunpack.c.l.b16 %v4805
        %v5830 = vunpack.c.l.b16 %v4806
        %v5831 = vunpack.c.l.b16 %v4807
        %v5832 = vunpack.c.l.b16 %v4808
        %v5833 = vunpack.c.l.b16 %v4809
        %v5834 = vunpack.c.l.b16 %v4810
        %v5835 = vunpack.c.l.b16 %v4811
        %v5836 = vunpack.c.l.b16 %v4812
        %v5837 = vunpack.c.l.b16 %v4813
        %v5838 = vunpack.c.l.b16 %v4814
        %v5839 = vunpack.c.l.b16 %v4815
        %v5840 = vunpack.c.l.b16 %v4816
        %v5841 = vunpack.c.l.b16 %v4817
        %v5842 = vunpack.c.l.b16 %v4818
        %v5843 = vunpack.c.l.b16 %v4819
        %v5844 = vunpack.c.l.b16 %v4820
        %v5845 = vunpack.c.l.b16 %v4821
        %v5846 = vunpack.c.l.b16 %v4822
        %v5847 = vunpack.c.l.b16 %v4823
        %v5848 = vunpack.c.l.b16 %v4824
        %v5849 = vpack.c.b16 %v5818, %v5817
        %v5850 = vpack.c.b16 %v5820, %v5819
        %v5851 = vpack.c.b16 %v5822, %v5821
        %v5852 = vpack.c.b16 %v5824, %v5823
        %v5853 = vpack.c.b16 %v5826, %v5825
        %v5854 = vpack.c.b16 %v5828, %v5827
        %v5855 = vpack.c.b16 %v5830, %v5829
        %v5856 = vpack.c.b16 %v5832, %v5831
        %v5857 = vpack.c.b16 %v5834, %v5833
        %v5858 = vpack.c.b16 %v5836, %v5835
        %v5859 = vpack.c.b16 %v5838, %v5837
        %v5860 = vpack.c.b16 %v5840, %v5839
        %v5861 = vpack.c.b16 %v5842, %v5841
        %v5862 = vpack.c.b16 %v5844, %v5843
        %v5863 = vpack.c.b16 %v5846, %v5845
        %v5864 = vpack.c.b16 %v5848, %v5847
        %v5897 = vunpack.c.l.b16 %v4825
        %v5898 = vunpack.c.l.b16 %v4826
        %v5899 = vunpack.c.l.b16 %v4827
        %v5900 = vunpack.c.l.b16 %v4828
        %v5901 = vunpack.c.l.b16 %v4829
        %v5902 = vunpack.c.l.b16 %v4830
        %v5903 = vunpack.c.l.b16 %v4831
        %v5904 = vunpack.c.l.b16 %v4832
        %v5905 = vunpack.c.l.b16 %v4833
        %v5906 = vunpack.c.l.b16 %v4834
        %v5907 = vunpack.c.l.b16 %v4835
        %v5908 = vunpack.c.l.b16 %v4836
        %v5909 = vunpack.c.l.b16 %v4837
        %v5910 = vunpack.c.l.b16 %v4838
        %v5911 = vunpack.c.l.b16 %v4839
        %v5912 = vunpack.c.l.b16 %v4840
        %v5913 = vpack.c.b16 %v5897, %v5897
        %v5914 = vpack.c.b16 %v5898, %v5898
        %v5915 = vpack.c.b16 %v5899, %v5899
        %v5916 = vpack.c.b16 %v5900, %v5900
        %v5917 = vpack.c.b16 %v5901, %v5901
        %v5918 = vpack.c.b16 %v5902, %v5902
        %v5919 = vpack.c.b16 %v5903, %v5903
        %v5920 = vpack.c.b16 %v5904, %v5904
        %v5921 = vpack.c.b16 %v5905, %v5905
        %v5922 = vpack.c.b16 %v5906, %v5906
        %v5923 = vpack.c.b16 %v5907, %v5907
        %v5924 = vpack.c.b16 %v5908, %v5908
        %v5925 = vpack.c.b16 %v5909, %v5909
        %v5926 = vpack.c.b16 %v5910, %v5910
        %v5927 = vpack.c.b16 %v5911, %v5911
        %v5928 = vpack.c.b16 %v5912, %v5912
        %v5930 = vshrl.u32 %v5849, 16
        %v5932 = vshll.u32 %v5849, 16
        %v5934 = vrot.slane %v5932, 1
        %v5935 = vor.u32 %v5930, %v5934
        %v5937 = vshll.u32 %v5913, 16
        %v5939 = vrot.slane %v5937, 1
        %v5940 = vsel %vm1397, %v5935, %v5939
        %v5942 = vshrl.u32 %v5850, 16
        %v5944 = vshll.u32 %v5850, 16
        %v5946 = vrot.slane %v5944, 1
        %v5947 = vor.u32 %v5942, %v5946
        %v5949 = vshll.u32 %v5914, 16
        %v5951 = vrot.slane %v5949, 1
        %v5952 = vsel %vm1397, %v5947, %v5951
        %v5954 = vshrl.u32 %v5851, 16
        %v5956 = vshll.u32 %v5851, 16
        %v5958 = vrot.slane %v5956, 1
        %v5959 = vor.u32 %v5954, %v5958
        %v5961 = vshll.u32 %v5915, 16
        %v5963 = vrot.slane %v5961, 1
        %v5964 = vsel %vm1397, %v5959, %v5963
        %v5966 = vshrl.u32 %v5852, 16
        %v5968 = vshll.u32 %v5852, 16
        %v5970 = vrot.slane %v5968, 1
        %v5971 = vor.u32 %v5966, %v5970
        %v5973 = vshll.u32 %v5916, 16
        %v5975 = vrot.slane %v5973, 1
        %v5976 = vsel %vm1397, %v5971, %v5975
        %v5978 = vshrl.u32 %v5853, 16
        %v5980 = vshll.u32 %v5853, 16
        %v5982 = vrot.slane %v5980, 1
        %v5983 = vor.u32 %v5978, %v5982
        %v5985 = vshll.u32 %v5917, 16
        %v5987 = vrot.slane %v5985, 1
        %v5988 = vsel %vm1397, %v5983, %v5987
        %v5990 = vshrl.u32 %v5854, 16
        %v5992 = vshll.u32 %v5854, 16
        %v5994 = vrot.slane %v5992, 1
        %v5995 = vor.u32 %v5990, %v5994
        %v5997 = vshll.u32 %v5918, 16
        %v5999 = vrot.slane %v5997, 1
        %v6000 = vsel %vm1397, %v5995, %v5999
        %v6002 = vshrl.u32 %v5855, 16
        %v6004 = vshll.u32 %v5855, 16
        %v6006 = vrot.slane %v6004, 1
        %v6007 = vor.u32 %v6002, %v6006
        %v6009 = vshll.u32 %v5919, 16
        %v6011 = vrot.slane %v6009, 1
        %v6012 = vsel %vm1397, %v6007, %v6011
        %v6014 = vshrl.u32 %v5856, 16
        %v6016 = vshll.u32 %v5856, 16
        %v6018 = vrot.slane %v6016, 1
        %v6019 = vor.u32 %v6014, %v6018
        %v6021 = vshll.u32 %v5920, 16
        %v6023 = vrot.slane %v6021, 1
        %v6024 = vsel %vm1397, %v6019, %v6023
        %v6026 = vshrl.u32 %v5857, 16
        %v6028 = vshll.u32 %v5857, 16
        %v6030 = vrot.slane %v6028, 1
        %v6031 = vor.u32 %v6026, %v6030
        %v6033 = vshll.u32 %v5921, 16
        %v6035 = vrot.slane %v6033, 1
        %v6036 = vsel %vm1397, %v6031, %v6035
        %v6038 = vshrl.u32 %v5858, 16
        %v6040 = vshll.u32 %v5858, 16
        %v6042 = vrot.slane %v6040, 1
        %v6043 = vor.u32 %v6038, %v6042
        %v6045 = vshll.u32 %v5922, 16
        %v6047 = vrot.slane %v6045, 1
        %v6048 = vsel %vm1397, %v6043, %v6047
        %v6050 = vshrl.u32 %v5859, 16
        %v6052 = vshll.u32 %v5859, 16
        %v6054 = vrot.slane %v6052, 1
        %v6055 = vor.u32 %v6050, %v6054
        %v6057 = vshll.u32 %v5923, 16
        %v6059 = vrot.slane %v6057, 1
        %v6060 = vsel %vm1397, %v6055, %v6059
        %v6062 = vshrl.u32 %v5860, 16
        %v6064 = vshll.u32 %v5860, 16
        %v6066 = vrot.slane %v6064, 1
        %v6067 = vor.u32 %v6062, %v6066
        %v6069 = vshll.u32 %v5924, 16
        %v6071 = vrot.slane %v6069, 1
        %v6072 = vsel %vm1397, %v6067, %v6071
        %v6074 = vshrl.u32 %v5861, 16
        %v6076 = vshll.u32 %v5861, 16
        %v6078 = vrot.slane %v6076, 1
        %v6079 = vor.u32 %v6074, %v6078
        %v6081 = vshll.u32 %v5925, 16
        %v6083 = vrot.slane %v6081, 1
        %v6084 = vsel %vm1397, %v6079, %v6083
        %v6086 = vshrl.u32 %v5862, 16
        %v6088 = vshll.u32 %v5862, 16
        %v6090 = vrot.slane %v6088, 1
        %v6091 = vor.u32 %v6086, %v6090
        %v6093 = vshll.u32 %v5926, 16
        %v6095 = vrot.slane %v6093, 1
        %v6096 = vsel %vm1397, %v6091, %v6095
        %v6098 = vshrl.u32 %v5863, 16
        %v6100 = vshll.u32 %v5863, 16
        %v6102 = vrot.slane %v6100, 1
        %v6103 = vor.u32 %v6098, %v6102
        %v6105 = vshll.u32 %v5927, 16
        %v6107 = vrot.slane %v6105, 1
        %v6108 = vsel %vm1397, %v6103, %v6107
        %v6110 = vshrl.u32 %v5864, 16
        %v6112 = vshll.u32 %v5864, 16
        %v6114 = vrot.slane %v6112, 1
        %v6115 = vor.u32 %v6110, %v6114
        %v6117 = vshll.u32 %v5928, 16
        %v6119 = vrot.slane %v6117, 1
        %v6120 = vsel %vm1397, %v6115, %v6119
        %v6153 = vunpack.c.l.b16 %v4841
        %v6154 = vunpack.c.l.b16 %v4842
        %v6155 = vunpack.c.l.b16 %v4843
        %v6156 = vunpack.c.l.b16 %v4844
        %v6157 = vunpack.c.l.b16 %v4845
        %v6158 = vunpack.c.l.b16 %v4846
        %v6159 = vunpack.c.l.b16 %v4847
        %v6160 = vunpack.c.l.b16 %v4848
        %v6161 = vunpack.c.l.b16 %v4849
        %v6162 = vunpack.c.l.b16 %v4850
        %v6163 = vunpack.c.l.b16 %v4851
        %v6164 = vunpack.c.l.b16 %v4852
        %v6165 = vunpack.c.l.b16 %v4853
        %v6166 = vunpack.c.l.b16 %v4854
        %v6167 = vunpack.c.l.b16 %v4855
        %v6168 = vunpack.c.l.b16 %v4856
        %v6169 = vpack.c.b16 %v5818, %v6153
        %v6170 = vpack.c.b16 %v5820, %v6154
        %v6171 = vpack.c.b16 %v5822, %v6155
        %v6172 = vpack.c.b16 %v5824, %v6156
        %v6173 = vpack.c.b16 %v5826, %v6157
        %v6174 = vpack.c.b16 %v5828, %v6158
        %v6175 = vpack.c.b16 %v5830, %v6159
        %v6176 = vpack.c.b16 %v5832, %v6160
        %v6177 = vpack.c.b16 %v5834, %v6161
        %v6178 = vpack.c.b16 %v5836, %v6162
        %v6179 = vpack.c.b16 %v5838, %v6163
        %v6180 = vpack.c.b16 %v5840, %v6164
        %v6181 = vpack.c.b16 %v5842, %v6165
        %v6182 = vpack.c.b16 %v5844, %v6166
        %v6183 = vpack.c.b16 %v5846, %v6167
        %v6184 = vpack.c.b16 %v5848, %v6168
        %v6185 = vrot.slane %v6169, 1
        %v6186 = vrot.slane %v5913, 1
        %v6187 = vsel %vm1654, %v6185, %v6186
        %v6188 = vrot.slane %v6170, 1
        %v6189 = vrot.slane %v5914, 1
        %v6190 = vsel %vm1654, %v6188, %v6189
        %v6191 = vrot.slane %v6171, 1
        %v6192 = vrot.slane %v5915, 1
        %v6193 = vsel %vm1654, %v6191, %v6192
        %v6194 = vrot.slane %v6172, 1
        %v6195 = vrot.slane %v5916, 1
        %v6196 = vsel %vm1654, %v6194, %v6195
        %v6197 = vrot.slane %v6173, 1
        %v6198 = vrot.slane %v5917, 1
        %v6199 = vsel %vm1654, %v6197, %v6198
        %v6200 = vrot.slane %v6174, 1
        %v6201 = vrot.slane %v5918, 1
        %v6202 = vsel %vm1654, %v6200, %v6201
        %v6203 = vrot.slane %v6175, 1
        %v6204 = vrot.slane %v5919, 1
        %v6205 = vsel %vm1654, %v6203, %v6204
        %v6206 = vrot.slane %v6176, 1
        %v6207 = vrot.slane %v5920, 1
        %v6208 = vsel %vm1654, %v6206, %v6207
        %v6209 = vrot.slane %v6177, 1
        %v6210 = vrot.slane %v5921, 1
        %v6211 = vsel %vm1654, %v6209, %v6210
        %v6212 = vrot.slane %v6178, 1
        %v6213 = vrot.slane %v5922, 1
        %v6214 = vsel %vm1654, %v6212, %v6213
        %v6215 = vrot.slane %v6179, 1
        %v6216 = vrot.slane %v5923, 1
        %v6217 = vsel %vm1654, %v6215, %v6216
        %v6218 = vrot.slane %v6180, 1
        %v6219 = vrot.slane %v5924, 1
        %v6220 = vsel %vm1654, %v6218, %v6219
        %v6221 = vrot.slane %v6181, 1
        %v6222 = vrot.slane %v5925, 1
        %v6223 = vsel %vm1654, %v6221, %v6222
        %v6224 = vrot.slane %v6182, 1
        %v6225 = vrot.slane %v5926, 1
        %v6226 = vsel %vm1654, %v6224, %v6225
        %v6227 = vrot.slane %v6183, 1
        %v6228 = vrot.slane %v5927, 1
        %v6229 = vsel %vm1654, %v6227, %v6228
        %v6230 = vrot.slane %v6184, 1
        %v6231 = vrot.slane %v5928, 1
        %v6232 = vsel %vm1654, %v6230, %v6231
        %v6249 = vld [vmem:[#allocation8] sm:$0xf]
        %v6250 = vld [vmem:[#allocation8 + $0x4] sm:$0xf]
        %v6251 = vld [vmem:[#allocation8 + $0x8] sm:$0xf]
        %v6252 = vld [vmem:[#allocation8 + $0xc] sm:$0xf]
        %v6253 = vld [vmem:[#allocation8 + $0x10] sm:$0xf]
        %v6254 = vld [vmem:[#allocation8 + $0x14] sm:$0xf]
        %v6255 = vld [vmem:[#allocation8 + $0x18] sm:$0xf]
        %v6256 = vld [vmem:[#allocation8 + $0x1c] sm:$0xf]
        %v6257 = vld [vmem:[#allocation8 + $0x20] sm:$0xf]
        %v6258 = vld [vmem:[#allocation8 + $0x24] sm:$0xf]
        %v6259 = vld [vmem:[#allocation8 + $0x28] sm:$0xf]
        %v6260 = vld [vmem:[#allocation8 + $0x2c] sm:$0xf]
        %v6261 = vld [vmem:[#allocation8 + $0x30] sm:$0xf]
        %v6262 = vld [vmem:[#allocation8 + $0x34] sm:$0xf]
        %v6263 = vld [vmem:[#allocation8 + $0x38] sm:$0xf]
        %v6264 = vld [vmem:[#allocation8 + $0x3c] sm:$0xf]
        %v6265 = vld [vmem:[#allocation8 + $0x40] sm:$0xf]
        %v6266 = vld [vmem:[#allocation8 + $0x44] sm:$0xf]
        %v6267 = vld [vmem:[#allocation8 + $0x48] sm:$0xf]
        %v6268 = vld [vmem:[#allocation8 + $0x4c] sm:$0xf]
        %v6269 = vld [vmem:[#allocation8 + $0x50] sm:$0xf]
        %v6270 = vld [vmem:[#allocation8 + $0x54] sm:$0xf]
        %v6271 = vld [vmem:[#allocation8 + $0x58] sm:$0xf]
        %v6272 = vld [vmem:[#allocation8 + $0x5c] sm:$0xf]
        %v6273 = vld [vmem:[#allocation8 + $0x60] sm:$0xf]
        %v6274 = vld [vmem:[#allocation8 + $0x64] sm:$0xf]
        %v6275 = vld [vmem:[#allocation8 + $0x68] sm:$0xf]
        %v6276 = vld [vmem:[#allocation8 + $0x6c] sm:$0xf]
        %v6277 = vld [vmem:[#allocation8 + $0x70] sm:$0xf]
        %v6278 = vld [vmem:[#allocation8 + $0x74] sm:$0xf]
        %v6279 = vld [vmem:[#allocation8 + $0x78] sm:$0xf]
        %v6280 = vld [vmem:[#allocation8 + $0x7c] sm:$0xf]
        %v6281 = vld [vmem:[#allocation8 + $0x80] sm:$0xf]
        %v6282 = vld [vmem:[#allocation8 + $0x84] sm:$0xf]
        %v6283 = vld [vmem:[#allocation8 + $0x88] sm:$0xf]
        %v6284 = vld [vmem:[#allocation8 + $0x8c] sm:$0xf]
        %v6285 = vld [vmem:[#allocation8 + $0x90] sm:$0xf]
        %v6286 = vld [vmem:[#allocation8 + $0x94] sm:$0xf]
        %v6287 = vld [vmem:[#allocation8 + $0x98] sm:$0xf]
        %v6288 = vld [vmem:[#allocation8 + $0x9c] sm:$0xf]
        %v6289 = vld [vmem:[#allocation8 + $0xa0] sm:$0xf]
        %v6290 = vld [vmem:[#allocation8 + $0xa4] sm:$0xf]
        %v6291 = vld [vmem:[#allocation8 + $0xa8] sm:$0xf]
        %v6292 = vld [vmem:[#allocation8 + $0xac] sm:$0xf]
        %v6293 = vld [vmem:[#allocation8 + $0xb0] sm:$0xf]
        %v6294 = vld [vmem:[#allocation8 + $0xb4] sm:$0xf]
        %v6295 = vld [vmem:[#allocation8 + $0xb8] sm:$0xf]
        %v6296 = vld [vmem:[#allocation8 + $0xbc] sm:$0xf]
        %v6297 = vld [vmem:[#allocation8 + $0xc0] sm:$0xf]
        %v6298 = vld [vmem:[#allocation8 + $0xc4] sm:$0xf]
        %v6299 = vld [vmem:[#allocation8 + $0xc8] sm:$0xf]
        %v6300 = vld [vmem:[#allocation8 + $0xcc] sm:$0xf]
        %v6301 = vld [vmem:[#allocation8 + $0xd0] sm:$0xf]
        %v6302 = vld [vmem:[#allocation8 + $0xd4] sm:$0xf]
        %v6303 = vld [vmem:[#allocation8 + $0xd8] sm:$0xf]
        %v6304 = vld [vmem:[#allocation8 + $0xdc] sm:$0xf]
        %v6305 = vld [vmem:[#allocation8 + $0xe0] sm:$0xf]
        %v6306 = vld [vmem:[#allocation8 + $0xe4] sm:$0xf]
        %v6307 = vld [vmem:[#allocation8 + $0xe8] sm:$0xf]
        %v6308 = vld [vmem:[#allocation8 + $0xec] sm:$0xf]
        %v6309 = vld [vmem:[#allocation8 + $0xf0] sm:$0xf]
        %v6310 = vld [vmem:[#allocation8 + $0xf4] sm:$0xf]
        %v6311 = vld [vmem:[#allocation8 + $0xf8] sm:$0xf]
        %v6312 = vld [vmem:[#allocation8 + $0xfc] sm:$0xf]
        %v6313 = vld [vmem:[#allocation8 + $0x100] sm:$0xf]
        %v6314 = vld [vmem:[#allocation8 + $0x104] sm:$0xf]
        %v6315 = vld [vmem:[#allocation8 + $0x108] sm:$0xf]
        %v6316 = vld [vmem:[#allocation8 + $0x10c] sm:$0xf]
        %v6317 = vld [vmem:[#allocation8 + $0x110] sm:$0xf]
        %v6318 = vld [vmem:[#allocation8 + $0x114] sm:$0xf]
        %v6319 = vld [vmem:[#allocation8 + $0x118] sm:$0xf]
        %v6320 = vld [vmem:[#allocation8 + $0x11c] sm:$0xf]
        %v6321 = vld [vmem:[#allocation8 + $0x120] sm:$0xf]
        %v6322 = vld [vmem:[#allocation8 + $0x124] sm:$0xf]
        %v6323 = vld [vmem:[#allocation8 + $0x128] sm:$0xf]
        %v6324 = vld [vmem:[#allocation8 + $0x12c] sm:$0xf]
        %v6325 = vld [vmem:[#allocation8 + $0x130] sm:$0xf]
        %v6326 = vld [vmem:[#allocation8 + $0x134] sm:$0xf]
        %v6327 = vld [vmem:[#allocation8 + $0x138] sm:$0xf]
        %v6328 = vld [vmem:[#allocation8 + $0x13c] sm:$0xf]
        %v6329 = vld [vmem:[#allocation8 + $0x140] sm:$0xf]
        %v6330 = vld [vmem:[#allocation8 + $0x144] sm:$0xf]
        %v6331 = vld [vmem:[#allocation8 + $0x148] sm:$0xf]
        %v6332 = vld [vmem:[#allocation8 + $0x14c] sm:$0xf]
        %v6333 = vld [vmem:[#allocation8 + $0x150] sm:$0xf]
        %v6334 = vld [vmem:[#allocation8 + $0x154] sm:$0xf]
        %v6335 = vld [vmem:[#allocation8 + $0x158] sm:$0xf]
        %v6336 = vld [vmem:[#allocation8 + $0x15c] sm:$0xf]
        %v6337 = vld [vmem:[#allocation8 + $0x160] sm:$0xf]
        %v6338 = vld [vmem:[#allocation8 + $0x164] sm:$0xf]
        %v6339 = vld [vmem:[#allocation8 + $0x168] sm:$0xf]
        %v6340 = vld [vmem:[#allocation8 + $0x16c] sm:$0xf]
        %v6341 = vld [vmem:[#allocation8 + $0x170] sm:$0xf]
        %v6342 = vld [vmem:[#allocation8 + $0x174] sm:$0xf]
        %v6343 = vld [vmem:[#allocation8 + $0x178] sm:$0xf]
        %v6344 = vld [vmem:[#allocation8 + $0x17c] sm:$0xf]
        %v6345 = vld [vmem:[#allocation8 + $0x180] sm:$0xf]
        %v6346 = vld [vmem:[#allocation8 + $0x184] sm:$0xf]
        %v6347 = vld [vmem:[#allocation8 + $0x188] sm:$0xf]
        %v6348 = vld [vmem:[#allocation8 + $0x18c] sm:$0xf]
        %v6349 = vld [vmem:[#allocation8 + $0x190] sm:$0xf]
        %v6350 = vld [vmem:[#allocation8 + $0x194] sm:$0xf]
        %v6351 = vld [vmem:[#allocation8 + $0x198] sm:$0xf]
        %v6352 = vld [vmem:[#allocation8 + $0x19c] sm:$0xf]
        %v6353 = vld [vmem:[#allocation8 + $0x1a0] sm:$0xf]
        %v6354 = vld [vmem:[#allocation8 + $0x1a4] sm:$0xf]
        %v6355 = vld [vmem:[#allocation8 + $0x1a8] sm:$0xf]
        %v6356 = vld [vmem:[#allocation8 + $0x1ac] sm:$0xf]
        %v6357 = vld [vmem:[#allocation8 + $0x1b0] sm:$0xf]
        %v6358 = vld [vmem:[#allocation8 + $0x1b4] sm:$0xf]
        %v6359 = vld [vmem:[#allocation8 + $0x1b8] sm:$0xf]
        %v6360 = vld [vmem:[#allocation8 + $0x1bc] sm:$0xf]
        %v6361 = vld [vmem:[#allocation8 + $0x1c0] sm:$0xf]
        %v6362 = vld [vmem:[#allocation8 + $0x1c4] sm:$0xf]
        %v6363 = vld [vmem:[#allocation8 + $0x1c8] sm:$0xf]
        %v6364 = vld [vmem:[#allocation8 + $0x1cc] sm:$0xf]
        %v6365 = vld [vmem:[#allocation8 + $0x1d0] sm:$0xf]
        %v6366 = vld [vmem:[#allocation8 + $0x1d4] sm:$0xf]
        %v6367 = vld [vmem:[#allocation8 + $0x1d8] sm:$0xf]
        %v6368 = vld [vmem:[#allocation8 + $0x1dc] sm:$0xf]
        %v6369 = vld [vmem:[#allocation8 + $0x1e0] sm:$0xf]
        %v6370 = vld [vmem:[#allocation8 + $0x1e4] sm:$0xf]
        %v6371 = vld [vmem:[#allocation8 + $0x1e8] sm:$0xf]
        %v6372 = vld [vmem:[#allocation8 + $0x1ec] sm:$0xf]
        %v6373 = vld [vmem:[#allocation8 + $0x1f0] sm:$0xf]
        %v6374 = vld [vmem:[#allocation8 + $0x1f4] sm:$0xf]
        %v6375 = vld [vmem:[#allocation8 + $0x1f8] sm:$0xf]
        %v6376 = vld [vmem:[#allocation8 + $0x1fc] sm:$0xf]
        %v6377 = vld [vmem:[#allocation8 + $0x200] sm:$0xf]
        %v6378 = vld [vmem:[#allocation8 + $0x204] sm:$0xf]
        %v6379 = vld [vmem:[#allocation8 + $0x208] sm:$0xf]
        %v6380 = vld [vmem:[#allocation8 + $0x20c] sm:$0xf]
        %v6381 = vld [vmem:[#allocation8 + $0x210] sm:$0xf]
        %v6382 = vld [vmem:[#allocation8 + $0x214] sm:$0xf]
        %v6383 = vld [vmem:[#allocation8 + $0x218] sm:$0xf]
        %v6384 = vld [vmem:[#allocation8 + $0x21c] sm:$0xf]
        %v6385 = vld [vmem:[#allocation8 + $0x220] sm:$0xf]
        %v6386 = vld [vmem:[#allocation8 + $0x224] sm:$0xf]
        %v6387 = vld [vmem:[#allocation8 + $0x228] sm:$0xf]
        %v6388 = vld [vmem:[#allocation8 + $0x22c] sm:$0xf]
        %v6389 = vld [vmem:[#allocation8 + $0x230] sm:$0xf]
        %v6390 = vld [vmem:[#allocation8 + $0x234] sm:$0xf]
        %v6391 = vld [vmem:[#allocation8 + $0x238] sm:$0xf]
        %v6392 = vld [vmem:[#allocation8 + $0x23c] sm:$0xf]
        %v6537 = vunpack.c.l.b16 %v6249
        %v6538 = vunpack.c.l.b16 %v6250
        %v6539 = vunpack.c.l.b16 %v6251
        %v6540 = vunpack.c.l.b16 %v6252
        %v6541 = vunpack.c.l.b16 %v6253
        %v6542 = vunpack.c.l.b16 %v6254
        %v6543 = vunpack.c.l.b16 %v6255
        %v6544 = vunpack.c.l.b16 %v6256
        %v6545 = vunpack.c.l.b16 %v6257
        %v6546 = vunpack.c.l.b16 %v6258
        %v6547 = vunpack.c.l.b16 %v6259
        %v6548 = vunpack.c.l.b16 %v6260
        %v6549 = vunpack.c.l.b16 %v6261
        %v6550 = vunpack.c.l.b16 %v6262
        %v6551 = vunpack.c.l.b16 %v6263
        %v6552 = vunpack.c.l.b16 %v6264
        %v6553 = vunpack.c.l.b16 %v6265
        %v6554 = vunpack.c.l.b16 %v6266
        %v6555 = vunpack.c.l.b16 %v6267
        %v6556 = vunpack.c.l.b16 %v6268
        %v6557 = vunpack.c.l.b16 %v6269
        %v6558 = vunpack.c.l.b16 %v6270
        %v6559 = vunpack.c.l.b16 %v6271
        %v6560 = vunpack.c.l.b16 %v6272
        %v6561 = vunpack.c.l.b16 %v6273
        %v6562 = vunpack.c.l.b16 %v6274
        %v6563 = vunpack.c.l.b16 %v6275
        %v6564 = vunpack.c.l.b16 %v6276
        %v6565 = vunpack.c.l.b16 %v6277
        %v6566 = vunpack.c.l.b16 %v6278
        %v6567 = vunpack.c.l.b16 %v6279
        %v6568 = vunpack.c.l.b16 %v6280
        %v6569 = vunpack.c.l.b16 %v6281
        %v6570 = vunpack.c.l.b16 %v6282
        %v6571 = vunpack.c.l.b16 %v6283
        %v6572 = vunpack.c.l.b16 %v6284
        %v6573 = vunpack.c.l.b16 %v6285
        %v6574 = vunpack.c.l.b16 %v6286
        %v6575 = vunpack.c.l.b16 %v6287
        %v6576 = vunpack.c.l.b16 %v6288
        %v6577 = vunpack.c.l.b16 %v6289
        %v6578 = vunpack.c.l.b16 %v6290
        %v6579 = vunpack.c.l.b16 %v6291
        %v6580 = vunpack.c.l.b16 %v6292
        %v6581 = vunpack.c.l.b16 %v6293
        %v6582 = vunpack.c.l.b16 %v6294
        %v6583 = vunpack.c.l.b16 %v6295
        %v6584 = vunpack.c.l.b16 %v6296
        %v6585 = vunpack.c.l.b16 %v6297
        %v6586 = vunpack.c.l.b16 %v6298
        %v6587 = vunpack.c.l.b16 %v6299
        %v6588 = vunpack.c.l.b16 %v6300
        %v6589 = vunpack.c.l.b16 %v6301
        %v6590 = vunpack.c.l.b16 %v6302
        %v6591 = vunpack.c.l.b16 %v6303
        %v6592 = vunpack.c.l.b16 %v6304
        %v6593 = vunpack.c.l.b16 %v6305
        %v6594 = vunpack.c.l.b16 %v6306
        %v6595 = vunpack.c.l.b16 %v6307
        %v6596 = vunpack.c.l.b16 %v6308
        %v6597 = vunpack.c.l.b16 %v6309
        %v6598 = vunpack.c.l.b16 %v6310
        %v6599 = vunpack.c.l.b16 %v6311
        %v6600 = vunpack.c.l.b16 %v6312
        %v6601 = vunpack.c.l.b16 %v6313
        %v6602 = vunpack.c.l.b16 %v6314
        %v6603 = vunpack.c.l.b16 %v6315
        %v6604 = vunpack.c.l.b16 %v6316
        %v6605 = vunpack.c.l.b16 %v6317
        %v6606 = vunpack.c.l.b16 %v6318
        %v6607 = vunpack.c.l.b16 %v6319
        %v6608 = vunpack.c.l.b16 %v6320
        %v6609 = vunpack.c.l.b16 %v6321
        %v6610 = vunpack.c.l.b16 %v6322
        %v6611 = vunpack.c.l.b16 %v6323
        %v6612 = vunpack.c.l.b16 %v6324
        %v6613 = vunpack.c.l.b16 %v6325
        %v6614 = vunpack.c.l.b16 %v6326
        %v6615 = vunpack.c.l.b16 %v6327
        %v6616 = vunpack.c.l.b16 %v6328
        %v6617 = vunpack.c.l.b16 %v6329
        %v6618 = vunpack.c.l.b16 %v6330
        %v6619 = vunpack.c.l.b16 %v6331
        %v6620 = vunpack.c.l.b16 %v6332
        %v6621 = vunpack.c.l.b16 %v6333
        %v6622 = vunpack.c.l.b16 %v6334
        %v6623 = vunpack.c.l.b16 %v6335
        %v6624 = vunpack.c.l.b16 %v6336
        %v6625 = vunpack.c.l.b16 %v6337
        %v6626 = vunpack.c.l.b16 %v6338
        %v6627 = vunpack.c.l.b16 %v6339
        %v6628 = vunpack.c.l.b16 %v6340
        %v6629 = vunpack.c.l.b16 %v6341
        %v6630 = vunpack.c.l.b16 %v6342
        %v6631 = vunpack.c.l.b16 %v6343
        %v6632 = vunpack.c.l.b16 %v6344
        %v6633 = vunpack.c.l.b16 %v6345
        %v6634 = vunpack.c.l.b16 %v6346
        %v6635 = vunpack.c.l.b16 %v6347
        %v6636 = vunpack.c.l.b16 %v6348
        %v6637 = vunpack.c.l.b16 %v6349
        %v6638 = vunpack.c.l.b16 %v6350
        %v6639 = vunpack.c.l.b16 %v6351
        %v6640 = vunpack.c.l.b16 %v6352
        %v6641 = vunpack.c.l.b16 %v6353
        %v6642 = vunpack.c.l.b16 %v6354
        %v6643 = vunpack.c.l.b16 %v6355
        %v6644 = vunpack.c.l.b16 %v6356
        %v6645 = vunpack.c.l.b16 %v6357
        %v6646 = vunpack.c.l.b16 %v6358
        %v6647 = vunpack.c.l.b16 %v6359
        %v6648 = vunpack.c.l.b16 %v6360
        %v6649 = vunpack.c.l.b16 %v6361
        %v6650 = vunpack.c.l.b16 %v6362
        %v6651 = vunpack.c.l.b16 %v6363
        %v6652 = vunpack.c.l.b16 %v6364
        %v6653 = vunpack.c.l.b16 %v6365
        %v6654 = vunpack.c.l.b16 %v6366
        %v6655 = vunpack.c.l.b16 %v6367
        %v6656 = vunpack.c.l.b16 %v6368
        %v6657 = vunpack.c.l.b16 %v6369
        %v6658 = vunpack.c.l.b16 %v6370
        %v6659 = vunpack.c.l.b16 %v6371
        %v6660 = vunpack.c.l.b16 %v6372
        %v6661 = vunpack.c.l.b16 %v6373
        %v6662 = vunpack.c.l.b16 %v6374
        %v6663 = vunpack.c.l.b16 %v6375
        %v6664 = vunpack.c.l.b16 %v6376
        %v6665 = vunpack.c.l.b16 %v6377
        %v6666 = vunpack.c.l.b16 %v6378
        %v6667 = vunpack.c.l.b16 %v6379
        %v6668 = vunpack.c.l.b16 %v6380
        %v6669 = vunpack.c.l.b16 %v6381
        %v6670 = vunpack.c.l.b16 %v6382
        %v6671 = vunpack.c.l.b16 %v6383
        %v6672 = vunpack.c.l.b16 %v6384
        %v6673 = vunpack.c.l.b16 %v6385
        %v6674 = vunpack.c.l.b16 %v6386
        %v6675 = vunpack.c.l.b16 %v6387
        %v6676 = vunpack.c.l.b16 %v6388
        %v6677 = vunpack.c.l.b16 %v6389
        %v6678 = vunpack.c.l.b16 %v6390
        %v6679 = vunpack.c.l.b16 %v6391
        %v6680 = vunpack.c.l.b16 %v6392
        %v6681 = vpack.c.b16 %v6538, %v6537
        %v6682 = vpack.c.b16 %v6540, %v6539
        %v6683 = vpack.c.b16 %v6542, %v6541
        %v6684 = vpack.c.b16 %v6544, %v6543
        %v6685 = vpack.c.b16 %v6546, %v6545
        %v6686 = vpack.c.b16 %v6548, %v6547
        %v6687 = vpack.c.b16 %v6550, %v6549
        %v6688 = vpack.c.b16 %v6552, %v6551
        %v6689 = vpack.c.b16 %v6554, %v6553
        %v6690 = vpack.c.b16 %v6556, %v6555
        %v6691 = vpack.c.b16 %v6558, %v6557
        %v6692 = vpack.c.b16 %v6560, %v6559
        %v6693 = vpack.c.b16 %v6562, %v6561
        %v6694 = vpack.c.b16 %v6564, %v6563
        %v6695 = vpack.c.b16 %v6566, %v6565
        %v6696 = vpack.c.b16 %v6568, %v6567
        %v6697 = vpack.c.b16 %v6570, %v6569
        %v6698 = vpack.c.b16 %v6572, %v6571
        %v6699 = vpack.c.b16 %v6574, %v6573
        %v6700 = vpack.c.b16 %v6576, %v6575
        %v6701 = vpack.c.b16 %v6578, %v6577
        %v6702 = vpack.c.b16 %v6580, %v6579
        %v6703 = vpack.c.b16 %v6582, %v6581
        %v6704 = vpack.c.b16 %v6584, %v6583
        %v6705 = vpack.c.b16 %v6586, %v6585
        %v6706 = vpack.c.b16 %v6588, %v6587
        %v6707 = vpack.c.b16 %v6590, %v6589
        %v6708 = vpack.c.b16 %v6592, %v6591
        %v6709 = vpack.c.b16 %v6594, %v6593
        %v6710 = vpack.c.b16 %v6596, %v6595
        %v6711 = vpack.c.b16 %v6598, %v6597
        %v6712 = vpack.c.b16 %v6600, %v6599
        %v6713 = vpack.c.b16 %v6602, %v6601
        %v6714 = vpack.c.b16 %v6604, %v6603
        %v6715 = vpack.c.b16 %v6606, %v6605
        %v6716 = vpack.c.b16 %v6608, %v6607
        %v6717 = vpack.c.b16 %v6610, %v6609
        %v6718 = vpack.c.b16 %v6612, %v6611
        %v6719 = vpack.c.b16 %v6614, %v6613
        %v6720 = vpack.c.b16 %v6616, %v6615
        %v6721 = vpack.c.b16 %v6618, %v6617
        %v6722 = vpack.c.b16 %v6620, %v6619
        %v6723 = vpack.c.b16 %v6622, %v6621
        %v6724 = vpack.c.b16 %v6624, %v6623
        %v6725 = vpack.c.b16 %v6626, %v6625
        %v6726 = vpack.c.b16 %v6628, %v6627
        %v6727 = vpack.c.b16 %v6630, %v6629
        %v6728 = vpack.c.b16 %v6632, %v6631
        %v6729 = vpack.c.b16 %v6634, %v6633
        %v6730 = vpack.c.b16 %v6636, %v6635
        %v6731 = vpack.c.b16 %v6638, %v6637
        %v6732 = vpack.c.b16 %v6640, %v6639
        %v6733 = vpack.c.b16 %v6642, %v6641
        %v6734 = vpack.c.b16 %v6644, %v6643
        %v6735 = vpack.c.b16 %v6646, %v6645
        %v6736 = vpack.c.b16 %v6648, %v6647
        %v6737 = vpack.c.b16 %v6650, %v6649
        %v6738 = vpack.c.b16 %v6652, %v6651
        %v6739 = vpack.c.b16 %v6654, %v6653
        %v6740 = vpack.c.b16 %v6656, %v6655
        %v6741 = vpack.c.b16 %v6658, %v6657
        %v6742 = vpack.c.b16 %v6660, %v6659
        %v6743 = vpack.c.b16 %v6662, %v6661
        %v6744 = vpack.c.b16 %v6664, %v6663
        %v6745 = vpack.c.b16 %v6666, %v6665
        %v6746 = vpack.c.b16 %v6668, %v6667
        %v6747 = vpack.c.b16 %v6670, %v6669
        %v6748 = vpack.c.b16 %v6672, %v6671
        %v6749 = vpack.c.b16 %v6674, %v6673
        %v6750 = vpack.c.b16 %v6676, %v6675
        %v6751 = vpack.c.b16 %v6678, %v6677
        %v6752 = vpack.c.b16 %v6680, %v6679
        %6825 = vmatprep.subr.bf16.mxu0 0
        %6826 = vmatpush1.bf16.msra.mxu0 %v6681
        %6827 = vmatprep.subr.bf16.mxu0 0
        %6828 = vmatpush1.bf16.msra.mxu0 %v6682
        %6829 = vmatprep.subr.bf16.mxu0 0
        %6830 = vmatpush1.bf16.msra.mxu0 %v6683
        %6831 = vmatprep.subr.bf16.mxu0 0
        %6832 = vmatpush1.bf16.msra.mxu0 %v6684
        %6833 = vmatprep.subr.bf16.mxu0 0
        %6834 = vmatpush1.bf16.msra.mxu0 %v6685
        %6835 = vmatprep.subr.bf16.mxu0 0
        %6836 = vmatpush1.bf16.msra.mxu0 %v6686
        %6837 = vmatprep.subr.bf16.mxu0 0
        %6838 = vmatpush1.bf16.msra.mxu0 %v6687
        %6839 = vmatprep.subr.bf16.mxu0 0
        %6840 = vmatpush1.bf16.msra.mxu0 %v6688
        %6841 = vmatprep.subr.bf16.mxu0 0
        %6842 = vmatpush1.bf16.msra.mxu0 %v6689
        %6843 = vmatprep.subr.bf16.mxu0 0
        %6844 = vmatpush1.bf16.msra.mxu0 %v6690
        %6845 = vmatprep.subr.bf16.mxu0 0
        %6846 = vmatpush1.bf16.msra.mxu0 %v6691
        %6847 = vmatprep.subr.bf16.mxu0 0
        %6848 = vmatpush1.bf16.msra.mxu0 %v6692
        %6849 = vmatprep.subr.bf16.mxu0 0
        %6850 = vmatpush1.bf16.msra.mxu0 %v6693
        %6851 = vmatprep.subr.bf16.mxu0 0
        %6852 = vmatpush1.bf16.msra.mxu0 %v6694
        %6853 = vmatprep.subr.bf16.mxu0 0
        %6854 = vmatpush1.bf16.msra.mxu0 %v6695
        %6855 = vmatprep.subr.bf16.mxu0 0
        %6856 = vmatpush1.bf16.msra.mxu0 %v6696
        %6857 = vmatprep.mubr.bf16.mxu0 %v5012
        %6858 = vmatmul.mubr.bf16.gmra.mrb[0].mxu0 %v4921
        %v6859 = vpop.f32.mrb[0].mxu0
        %v6860 = vadd.f32 0.0, %v6859
        %v6861 = vpop.f32.mrb[0].mxu0
        %v6862 = vpop.f32.mrb[0].mxu0
        %v6863 = vadd.f32 0.0, %v6862
        %v6864 = vpop.f32.mrb[0].mxu0
        %6865 = vmatprep.mubr.bf16.mxu0 %v5024
        %6866 = vmatmul.mubr.bf16.gmra.mrb[0].mxu0 %v4922
        %v6867 = vpop.f32.mrb[0].mxu0
        %v6868 = vadd.f32 0.0, %v6867
        %v6869 = vpop.f32.mrb[0].mxu0
        %v6870 = vpop.f32.mrb[0].mxu0
        %v6871 = vadd.f32 0.0, %v6870
        %v6872 = vpop.f32.mrb[0].mxu0
        %6873 = vmatprep.mubr.bf16.mxu0 %v5036
        %6874 = vmatmul.mubr.bf16.gmra.mrb[0].mxu0 %v4923
        %v6875 = vpop.f32.mrb[0].mxu0
        %v6876 = vadd.f32 0.0, %v6875
        %v6877 = vpop.f32.mrb[0].mxu0
        %v6878 = vpop.f32.mrb[0].mxu0
        %v6879 = vadd.f32 0.0, %v6878
        %v6880 = vpop.f32.mrb[0].mxu0
        %6881 = vmatprep.mubr.bf16.mxu0 %v5048
        %6882 = vmatmul.mubr.bf16.gmra.mrb[0].mxu0 %v4924
        %v6883 = vpop.f32.mrb[0].mxu0
        %v6884 = vadd.f32 0.0, %v6883
        %v6885 = vpop.f32.mrb[0].mxu0
        %v6886 = vpop.f32.mrb[0].mxu0
        %v6887 = vadd.f32 0.0, %v6886
        %v6888 = vpop.f32.mrb[0].mxu0
        %6889 = vmatprep.mubr.bf16.mxu0 %v5060
        %6890 = vmatmul.mubr.bf16.gmra.mrb[0].mxu0 %v4925
        %v6891 = vpop.f32.mrb[0].mxu0
        %v6892 = vadd.f32 0.0, %v6891
        %v6893 = vpop.f32.mrb[0].mxu0
        %v6894 = vpop.f32.mrb[0].mxu0
        %v6895 = vadd.f32 0.0, %v6894
        %v6896 = vpop.f32.mrb[0].mxu0
        %6897 = vmatprep.mubr.bf16.mxu0 %v5072
        %6898 = vmatmul.mubr.bf16.gmra.mrb[0].mxu0 %v4926
        %v6899 = vpop.f32.mrb[0].mxu0
        %v6900 = vadd.f32 0.0, %v6899
        %v6901 = vpop.f32.mrb[0].mxu0
        %v6902 = vpop.f32.mrb[0].mxu0
        %v6903 = vadd.f32 0.0, %v6902
        %v6904 = vpop.f32.mrb[0].mxu0
        %6905 = vmatprep.mubr.bf16.mxu0 %v5084
        %6906 = vmatmul.mubr.bf16.gmra.mrb[0].mxu0 %v4927
        %v6907 = vpop.f32.mrb[0].mxu0
        %v6908 = vadd.f32 0.0, %v6907
        %v6909 = vpop.f32.mrb[0].mxu0
        %v6910 = vpop.f32.mrb[0].mxu0
        %v6911 = vadd.f32 0.0, %v6910
        %v6912 = vpop.f32.mrb[0].mxu0
        %6913 = vmatprep.mubr.bf16.mxu0 %v5096
        %6914 = vmatmul.mubr.bf16.gmra.mrb[0].mxu0 %v4928
        %v6915 = vpop.f32.mrb[0].mxu0
        %v6916 = vadd.f32 0.0, %v6915
        %v6917 = vpop.f32.mrb[0].mxu0
        %v6918 = vpop.f32.mrb[0].mxu0
        %v6919 = vadd.f32 0.0, %v6918
        %v6920 = vpop.f32.mrb[0].mxu0
        %6921 = vmatprep.mubr.bf16.mxu0 %v5108
        %6922 = vmatmul.mubr.bf16.gmra.mrb[0].mxu0 %v4929
        %v6923 = vpop.f32.mrb[0].mxu0
        %v6924 = vadd.f32 0.0, %v6923
        %v6925 = vpop.f32.mrb[0].mxu0
        %v6926 = vpop.f32.mrb[0].mxu0
        %v6927 = vadd.f32 0.0, %v6926
        %v6928 = vpop.f32.mrb[0].mxu0
        %6929 = vmatprep.mubr.bf16.mxu0 %v5120
        %6930 = vmatmul.mubr.bf16.gmra.mrb[0].mxu0 %v4930
        %v6931 = vpop.f32.mrb[0].mxu0
        %v6932 = vadd.f32 0.0, %v6931
        %v6933 = vpop.f32.mrb[0].mxu0
        %v6934 = vpop.f32.mrb[0].mxu0
        %v6935 = vadd.f32 0.0, %v6934
        %v6936 = vpop.f32.mrb[0].mxu0
        %6937 = vmatprep.mubr.bf16.mxu0 %v5132
        %6938 = vmatmul.mubr.bf16.gmra.mrb[0].mxu0 %v4931
        %v6939 = vpop.f32.mrb[0].mxu0
        %v6940 = vadd.f32 0.0, %v6939
        %v6941 = vpop.f32.mrb[0].mxu0
        %v6942 = vpop.f32.mrb[0].mxu0
        %v6943 = vadd.f32 0.0, %v6942
        %v6944 = vpop.f32.mrb[0].mxu0
        %6945 = vmatprep.mubr.bf16.mxu0 %v5144
        %6946 = vmatmul.mubr.bf16.gmra.mrb[0].mxu0 %v4932
        %v6947 = vpop.f32.mrb[0].mxu0
        %v6948 = vadd.f32 0.0, %v6947
        %v6949 = vpop.f32.mrb[0].mxu0
        %v6950 = vpop.f32.mrb[0].mxu0
        %v6951 = vadd.f32 0.0, %v6950
        %v6952 = vpop.f32.mrb[0].mxu0
        %6953 = vmatprep.mubr.bf16.mxu0 %v5156
        %6954 = vmatmul.mubr.bf16.gmra.mrb[0].mxu0 %v4933
        %v6955 = vpop.f32.mrb[0].mxu0
        %v6956 = vadd.f32 0.0, %v6955
        %v6957 = vpop.f32.mrb[0].mxu0
        %v6958 = vpop.f32.mrb[0].mxu0
        %v6959 = vadd.f32 0.0, %v6958
        %v6960 = vpop.f32.mrb[0].mxu0
        %6961 = vmatprep.mubr.bf16.mxu0 %v5168
        %6962 = vmatmul.mubr.bf16.gmra.mrb[0].mxu0 %v4934
        %v6963 = vpop.f32.mrb[0].mxu0
        %v6964 = vadd.f32 0.0, %v6963
        %v6965 = vpop.f32.mrb[0].mxu0
        %v6966 = vpop.f32.mrb[0].mxu0
        %v6967 = vadd.f32 0.0, %v6966
        %v6968 = vpop.f32.mrb[0].mxu0
        %6969 = vmatprep.mubr.bf16.mxu0 %v5180
        %6970 = vmatmul.mubr.bf16.gmra.mrb[0].mxu0 %v4935
        %v6971 = vpop.f32.mrb[0].mxu0
        %v6972 = vadd.f32 0.0, %v6971
        %v6973 = vpop.f32.mrb[0].mxu0
        %v6974 = vpop.f32.mrb[0].mxu0
        %v6975 = vadd.f32 0.0, %v6974
        %v6976 = vpop.f32.mrb[0].mxu0
        %6977 = vmatprep.mubr.bf16.mxu0 %v5192
        %6978 = vmatmul.mubr.bf16.gmra.mrb[0].mxu0 %v4936
        %v6979 = vpop.f32.mrb[0].mxu0
        %v6980 = vadd.f32 0.0, %v6979
        %v6981 = vpop.f32.mrb[0].mxu0
        %v6982 = vpop.f32.mrb[0].mxu0
        %v6983 = vadd.f32 0.0, %v6982
        %v6984 = vpop.f32.mrb[0].mxu0
        %6985 = vdwg.mxu0
        %6986 = vmatprep.subr.bf16.mxu0 0
        %6987 = vmatpush1.bf16.msra.mxu0 %v6697
        %6988 = vmatprep.subr.bf16.mxu0 0
        %6989 = vmatpush1.bf16.msra.mxu0 %v6698
        %6990 = vmatprep.subr.bf16.mxu0 0
        %6991 = vmatpush1.bf16.msra.mxu0 %v6699
        %6992 = vmatprep.subr.bf16.mxu0 0
        %6993 = vmatpush1.bf16.msra.mxu0 %v6700
        %6994 = vmatprep.subr.bf16.mxu0 0
        %6995 = vmatpush1.bf16.msra.mxu0 %v6701
        %6996 = vmatprep.subr.bf16.mxu0 0
        %6997 = vmatpush1.bf16.msra.mxu0 %v6702
        %6998 = vmatprep.subr.bf16.mxu0 0
        %6999 = vmatpush1.bf16.msra.mxu0 %v6703
        %7000 = vmatprep.subr.bf16.mxu0 0
        %7001 = vmatpush1.bf16.msra.mxu0 %v6704
        %7002 = vmatprep.subr.bf16.mxu0 0
        %7003 = vmatpush1.bf16.msra.mxu0 %v6705
        %7004 = vmatprep.subr.bf16.mxu0 0
        %7005 = vmatpush1.bf16.msra.mxu0 %v6706
        %7006 = vmatprep.subr.bf16.mxu0 0
        %7007 = vmatpush1.bf16.msra.mxu0 %v6707
        %7008 = vmatprep.subr.bf16.mxu0 0
        %7009 = vmatpush1.bf16.msra.mxu0 %v6708
        %7010 = vmatprep.subr.bf16.mxu0 0
        %7011 = vmatpush1.bf16.msra.mxu0 %v6709
        %7012 = vmatprep.subr.bf16.mxu0 0
        %7013 = vmatpush1.bf16.msra.mxu0 %v6710
        %7014 = vmatprep.subr.bf16.mxu0 0
        %7015 = vmatpush1.bf16.msra.mxu0 %v6711
        %7016 = vmatprep.subr.bf16.mxu0 0
        %7017 = vmatpush1.bf16.msra.mxu0 %v6712
        %7018 = vmatprep.mubr.bf16.mxu0 %v5385
        %7019 = vmatmul.mubr.bf16.gmra.mrb[0].mxu0 %v5259
        %v7020 = vpop.f32.mrb[0].mxu0
        %v7021 = vadd.f32 %v6860, %v7020
        %v7022 = vpop.f32.mrb[0].mxu0
        %v7023 = vpop.f32.mrb[0].mxu0
        %v7024 = vadd.f32 %v6863, %v7023
        %v7025 = vpop.f32.mrb[0].mxu0
        %7026 = vmatprep.mubr.bf16.mxu0 %v5386
        %7027 = vmatmul.mubr.bf16.gmra.mrb[0].mxu0 %v5262
        %v7028 = vpop.f32.mrb[0].mxu0
        %v7029 = vadd.f32 %v6868, %v7028
        %v7030 = vpop.f32.mrb[0].mxu0
        %v7031 = vpop.f32.mrb[0].mxu0
        %v7032 = vadd.f32 %v6871, %v7031
        %v7033 = vpop.f32.mrb[0].mxu0
        %7034 = vmatprep.mubr.bf16.mxu0 %v5387
        %7035 = vmatmul.mubr.bf16.gmra.mrb[0].mxu0 %v5265
        %v7036 = vpop.f32.mrb[0].mxu0
        %v7037 = vadd.f32 %v6876, %v7036
        %v7038 = vpop.f32.mrb[0].mxu0
        %v7039 = vpop.f32.mrb[0].mxu0
        %v7040 = vadd.f32 %v6879, %v7039
        %v7041 = vpop.f32.mrb[0].mxu0
        %7042 = vmatprep.mubr.bf16.mxu0 %v5388
        %7043 = vmatmul.mubr.bf16.gmra.mrb[0].mxu0 %v5268
        %v7044 = vpop.f32.mrb[0].mxu0
        %v7045 = vadd.f32 %v6884, %v7044
        %v7046 = vpop.f32.mrb[0].mxu0
        %v7047 = vpop.f32.mrb[0].mxu0
        %v7048 = vadd.f32 %v6887, %v7047
        %v7049 = vpop.f32.mrb[0].mxu0
        %7050 = vmatprep.mubr.bf16.mxu0 %v5389
        %7051 = vmatmul.mubr.bf16.gmra.mrb[0].mxu0 %v5271
        %v7052 = vpop.f32.mrb[0].mxu0
        %v7053 = vadd.f32 %v6892, %v7052
        %v7054 = vpop.f32.mrb[0].mxu0
        %v7055 = vpop.f32.mrb[0].mxu0
        %v7056 = vadd.f32 %v6895, %v7055
        %v7057 = vpop.f32.mrb[0].mxu0
        %7058 = vmatprep.mubr.bf16.mxu0 %v5390
        %7059 = vmatmul.mubr.bf16.gmra.mrb[0].mxu0 %v5274
        %v7060 = vpop.f32.mrb[0].mxu0
        %v7061 = vadd.f32 %v6900, %v7060
        %v7062 = vpop.f32.mrb[0].mxu0
        %v7063 = vpop.f32.mrb[0].mxu0
        %v7064 = vadd.f32 %v6903, %v7063
        %v7065 = vpop.f32.mrb[0].mxu0
        %7066 = vmatprep.mubr.bf16.mxu0 %v5391
        %7067 = vmatmul.mubr.bf16.gmra.mrb[0].mxu0 %v5277
        %v7068 = vpop.f32.mrb[0].mxu0
        %v7069 = vadd.f32 %v6908, %v7068
        %v7070 = vpop.f32.mrb[0].mxu0
        %v7071 = vpop.f32.mrb[0].mxu0
        %v7072 = vadd.f32 %v6911, %v7071
        %v7073 = vpop.f32.mrb[0].mxu0
        %7074 = vmatprep.mubr.bf16.mxu0 %v5392
        %7075 = vmatmul.mubr.bf16.gmra.mrb[0].mxu0 %v5280
        %v7076 = vpop.f32.mrb[0].mxu0
        %v7077 = vadd.f32 %v6916, %v7076
        %v7078 = vpop.f32.mrb[0].mxu0
        %v7079 = vpop.f32.mrb[0].mxu0
        %v7080 = vadd.f32 %v6919, %v7079
        %v7081 = vpop.f32.mrb[0].mxu0
        %7082 = vmatprep.mubr.bf16.mxu0 %v5393
        %7083 = vmatmul.mubr.bf16.gmra.mrb[0].mxu0 %v5283
        %v7084 = vpop.f32.mrb[0].mxu0
        %v7085 = vadd.f32 %v6924, %v7084
        %v7086 = vpop.f32.mrb[0].mxu0
        %v7087 = vpop.f32.mrb[0].mxu0
        %v7088 = vadd.f32 %v6927, %v7087
        %v7089 = vpop.f32.mrb[0].mxu0
        %7090 = vmatprep.mubr.bf16.mxu0 %v5394
        %7091 = vmatmul.mubr.bf16.gmra.mrb[0].mxu0 %v5286
        %v7092 = vpop.f32.mrb[0].mxu0
        %v7093 = vadd.f32 %v6932, %v7092
        %v7094 = vpop.f32.mrb[0].mxu0
        %v7095 = vpop.f32.mrb[0].mxu0
        %v7096 = vadd.f32 %v6935, %v7095
        %v7097 = vpop.f32.mrb[0].mxu0
        %7098 = vmatprep.mubr.bf16.mxu0 %v5395
        %7099 = vmatmul.mubr.bf16.gmra.mrb[0].mxu0 %v5289
        %v7100 = vpop.f32.mrb[0].mxu0
        %v7101 = vadd.f32 %v6940, %v7100
        %v7102 = vpop.f32.mrb[0].mxu0
        %v7103 = vpop.f32.mrb[0].mxu0
        %v7104 = vadd.f32 %v6943, %v7103
        %v7105 = vpop.f32.mrb[0].mxu0
        %7106 = vmatprep.mubr.bf16.mxu0 %v5396
        %7107 = vmatmul.mubr.bf16.gmra.mrb[0].mxu0 %v5292
        %v7108 = vpop.f32.mrb[0].mxu0
        %v7109 = vadd.f32 %v6948, %v7108
        %v7110 = vpop.f32.mrb[0].mxu0
        %v7111 = vpop.f32.mrb[0].mxu0
        %v7112 = vadd.f32 %v6951, %v7111
        %v7113 = vpop.f32.mrb[0].mxu0
        %7114 = vmatprep.mubr.bf16.mxu0 %v5397
        %7115 = vmatmul.mubr.bf16.gmra.mrb[0].mxu0 %v5295
        %v7116 = vpop.f32.mrb[0].mxu0
        %v7117 = vadd.f32 %v6956, %v7116
        %v7118 = vpop.f32.mrb[0].mxu0
        %v7119 = vpop.f32.mrb[0].mxu0
        %v7120 = vadd.f32 %v6959, %v7119
        %v7121 = vpop.f32.mrb[0].mxu0
        %7122 = vmatprep.mubr.bf16.mxu0 %v5398
        %7123 = vmatmul.mubr.bf16.gmra.mrb[0].mxu0 %v5298
        %v7124 = vpop.f32.mrb[0].mxu0
        %v7125 = vadd.f32 %v6964, %v7124
        %v7126 = vpop.f32.mrb[0].mxu0
        %v7127 = vpop.f32.mrb[0].mxu0
        %v7128 = vadd.f32 %v6967, %v7127
        %v7129 = vpop.f32.mrb[0].mxu0
        %7130 = vmatprep.mubr.bf16.mxu0 %v5399
        %7131 = vmatmul.mubr.bf16.gmra.mrb[0].mxu0 %v5301
        %v7132 = vpop.f32.mrb[0].mxu0
        %v7133 = vadd.f32 %v6972, %v7132
        %v7134 = vpop.f32.mrb[0].mxu0
        %v7135 = vpop.f32.mrb[0].mxu0
        %v7136 = vadd.f32 %v6975, %v7135
        %v7137 = vpop.f32.mrb[0].mxu0
        %7138 = vmatprep.mubr.bf16.mxu0 %v5400
        %7139 = vmatmul.mubr.bf16.gmra.mrb[0].mxu0 %v5304
        %v7140 = vpop.f32.mrb[0].mxu0
        %v7141 = vadd.f32 %v6980, %v7140
        %v7142 = vpop.f32.mrb[0].mxu0
        %v7143 = vpop.f32.mrb[0].mxu0
        %v7144 = vadd.f32 %v6983, %v7143
        %v7145 = vpop.f32.mrb[0].mxu0
        %7146 = vdwg.mxu0
        %7147 = vmatprep.subr.bf16.mxu0 0
        %7148 = vmatpush1.bf16.msra.mxu0 %v6713
        %7149 = vmatprep.subr.bf16.mxu0 0
        %7150 = vmatpush1.bf16.msra.mxu0 %v6714
        %7151 = vmatprep.subr.bf16.mxu0 0
        %7152 = vmatpush1.bf16.msra.mxu0 %v6715
        %7153 = vmatprep.subr.bf16.mxu0 0
        %7154 = vmatpush1.bf16.msra.mxu0 %v6716
        %7155 = vmatprep.subr.bf16.mxu0 0
        %7156 = vmatpush1.bf16.msra.mxu0 %v6717
        %7157 = vmatprep.subr.bf16.mxu0 0
        %7158 = vmatpush1.bf16.msra.mxu0 %v6718
        %7159 = vmatprep.subr.bf16.mxu0 0
        %7160 = vmatpush1.bf16.msra.mxu0 %v6719
        %7161 = vmatprep.subr.bf16.mxu0 0
        %7162 = vmatpush1.bf16.msra.mxu0 %v6720
        %7163 = vmatprep.subr.bf16.mxu0 0
        %7164 = vmatpush1.bf16.msra.mxu0 %v6721
        %7165 = vmatprep.subr.bf16.mxu0 0
        %7166 = vmatpush1.bf16.msra.mxu0 %v6722
        %7167 = vmatprep.subr.bf16.mxu0 0
        %7168 = vmatpush1.bf16.msra.mxu0 %v6723
        %7169 = vmatprep.subr.bf16.mxu0 0
        %7170 = vmatpush1.bf16.msra.mxu0 %v6724
        %7171 = vmatprep.subr.bf16.mxu0 0
        %7172 = vmatpush1.bf16.msra.mxu0 %v6725
        %7173 = vmatprep.subr.bf16.mxu0 0
        %7174 = vmatpush1.bf16.msra.mxu0 %v6726
        %7175 = vmatprep.subr.bf16.mxu0 0
        %7176 = vmatpush1.bf16.msra.mxu0 %v6727
        %7177 = vmatprep.subr.bf16.mxu0 0
        %7178 = vmatpush1.bf16.msra.mxu0 %v6728
        %7179 = vmatprep.mubr.bf16.mxu0 %v5723
        %7180 = vmatmul.mubr.bf16.gmra.mrb[0].mxu0 %v5476
        %v7181 = vpop.f32.mrb[0].mxu0
        %v7182 = vadd.f32 %v7021, %v7181
        %v7183 = vpop.f32.mrb[0].mxu0
        %v7184 = vpop.f32.mrb[0].mxu0
        %v7185 = vadd.f32 %v7024, %v7184
        %v7186 = vpop.f32.mrb[0].mxu0
        %7187 = vmatprep.mubr.bf16.mxu0 %v5726
        %7188 = vmatmul.mubr.bf16.gmra.mrb[0].mxu0 %v5488
        %v7189 = vpop.f32.mrb[0].mxu0
        %v7190 = vadd.f32 %v7029, %v7189
        %v7191 = vpop.f32.mrb[0].mxu0
        %v7192 = vpop.f32.mrb[0].mxu0
        %v7193 = vadd.f32 %v7032, %v7192
        %v7194 = vpop.f32.mrb[0].mxu0
        %7195 = vmatprep.mubr.bf16.mxu0 %v5729
        %7196 = vmatmul.mubr.bf16.gmra.mrb[0].mxu0 %v5500
        %v7197 = vpop.f32.mrb[0].mxu0
        %v7198 = vadd.f32 %v7037, %v7197
        %v7199 = vpop.f32.mrb[0].mxu0
        %v7200 = vpop.f32.mrb[0].mxu0
        %v7201 = vadd.f32 %v7040, %v7200
        %v7202 = vpop.f32.mrb[0].mxu0
        %7203 = vmatprep.mubr.bf16.mxu0 %v5732
        %7204 = vmatmul.mubr.bf16.gmra.mrb[0].mxu0 %v5512
        %v7205 = vpop.f32.mrb[0].mxu0
        %v7206 = vadd.f32 %v7045, %v7205
        %v7207 = vpop.f32.mrb[0].mxu0
        %v7208 = vpop.f32.mrb[0].mxu0
        %v7209 = vadd.f32 %v7048, %v7208
        %v7210 = vpop.f32.mrb[0].mxu0
        %7211 = vmatprep.mubr.bf16.mxu0 %v5735
        %7212 = vmatmul.mubr.bf16.gmra.mrb[0].mxu0 %v5524
        %v7213 = vpop.f32.mrb[0].mxu0
        %v7214 = vadd.f32 %v7053, %v7213
        %v7215 = vpop.f32.mrb[0].mxu0
        %v7216 = vpop.f32.mrb[0].mxu0
        %v7217 = vadd.f32 %v7056, %v7216
        %v7218 = vpop.f32.mrb[0].mxu0
        %7219 = vmatprep.mubr.bf16.mxu0 %v5738
        %7220 = vmatmul.mubr.bf16.gmra.mrb[0].mxu0 %v5536
        %v7221 = vpop.f32.mrb[0].mxu0
        %v7222 = vadd.f32 %v7061, %v7221
        %v7223 = vpop.f32.mrb[0].mxu0
        %v7224 = vpop.f32.mrb[0].mxu0
        %v7225 = vadd.f32 %v7064, %v7224
        %v7226 = vpop.f32.mrb[0].mxu0
        %7227 = vmatprep.mubr.bf16.mxu0 %v5741
        %7228 = vmatmul.mubr.bf16.gmra.mrb[0].mxu0 %v5548
        %v7229 = vpop.f32.mrb[0].mxu0
        %v7230 = vadd.f32 %v7069, %v7229
        %v7231 = vpop.f32.mrb[0].mxu0
        %v7232 = vpop.f32.mrb[0].mxu0
        %v7233 = vadd.f32 %v7072, %v7232
        %v7234 = vpop.f32.mrb[0].mxu0
        %7235 = vmatprep.mubr.bf16.mxu0 %v5744
        %7236 = vmatmul.mubr.bf16.gmra.mrb[0].mxu0 %v5560
        %v7237 = vpop.f32.mrb[0].mxu0
        %v7238 = vadd.f32 %v7077, %v7237
        %v7239 = vpop.f32.mrb[0].mxu0
        %v7240 = vpop.f32.mrb[0].mxu0
        %v7241 = vadd.f32 %v7080, %v7240
        %v7242 = vpop.f32.mrb[0].mxu0
        %7243 = vmatprep.mubr.bf16.mxu0 %v5747
        %7244 = vmatmul.mubr.bf16.gmra.mrb[0].mxu0 %v5572
        %v7245 = vpop.f32.mrb[0].mxu0
        %v7246 = vadd.f32 %v7085, %v7245
        %v7247 = vpop.f32.mrb[0].mxu0
        %v7248 = vpop.f32.mrb[0].mxu0
        %v7249 = vadd.f32 %v7088, %v7248
        %v7250 = vpop.f32.mrb[0].mxu0
        %7251 = vmatprep.mubr.bf16.mxu0 %v5750
        %7252 = vmatmul.mubr.bf16.gmra.mrb[0].mxu0 %v5584
        %v7253 = vpop.f32.mrb[0].mxu0
        %v7254 = vadd.f32 %v7093, %v7253
        %v7255 = vpop.f32.mrb[0].mxu0
        %v7256 = vpop.f32.mrb[0].mxu0
        %v7257 = vadd.f32 %v7096, %v7256
        %v7258 = vpop.f32.mrb[0].mxu0
        %7259 = vmatprep.mubr.bf16.mxu0 %v5753
        %7260 = vmatmul.mubr.bf16.gmra.mrb[0].mxu0 %v5596
        %v7261 = vpop.f32.mrb[0].mxu0
        %v7262 = vadd.f32 %v7101, %v7261
        %v7263 = vpop.f32.mrb[0].mxu0
        %v7264 = vpop.f32.mrb[0].mxu0
        %v7265 = vadd.f32 %v7104, %v7264
        %v7266 = vpop.f32.mrb[0].mxu0
        %7267 = vmatprep.mubr.bf16.mxu0 %v5756
        %7268 = vmatmul.mubr.bf16.gmra.mrb[0].mxu0 %v5608
        %v7269 = vpop.f32.mrb[0].mxu0
        %v7270 = vadd.f32 %v7109, %v7269
        %v7271 = vpop.f32.mrb[0].mxu0
        %v7272 = vpop.f32.mrb[0].mxu0
        %v7273 = vadd.f32 %v7112, %v7272
        %v7274 = vpop.f32.mrb[0].mxu0
        %7275 = vmatprep.mubr.bf16.mxu0 %v5759
        %7276 = vmatmul.mubr.bf16.gmra.mrb[0].mxu0 %v5620
        %v7277 = vpop.f32.mrb[0].mxu0
        %v7278 = vadd.f32 %v7117, %v7277
        %v7279 = vpop.f32.mrb[0].mxu0
        %v7280 = vpop.f32.mrb[0].mxu0
        %v7281 = vadd.f32 %v7120, %v7280
        %v7282 = vpop.f32.mrb[0].mxu0
        %7283 = vmatprep.mubr.bf16.mxu0 %v5762
        %7284 = vmatmul.mubr.bf16.gmra.mrb[0].mxu0 %v5632
        %v7285 = vpop.f32.mrb[0].mxu0
        %v7286 = vadd.f32 %v7125, %v7285
        %v7287 = vpop.f32.mrb[0].mxu0
        %v7288 = vpop.f32.mrb[0].mxu0
        %v7289 = vadd.f32 %v7128, %v7288
        %v7290 = vpop.f32.mrb[0].mxu0
        %7291 = vmatprep.mubr.bf16.mxu0 %v5765
        %7292 = vmatmul.mubr.bf16.gmra.mrb[0].mxu0 %v5644
        %v7293 = vpop.f32.mrb[0].mxu0
        %v7294 = vadd.f32 %v7133, %v7293
        %v7295 = vpop.f32.mrb[0].mxu0
        %v7296 = vpop.f32.mrb[0].mxu0
        %v7297 = vadd.f32 %v7136, %v7296
        %v7298 = vpop.f32.mrb[0].mxu0
        %7299 = vmatprep.mubr.bf16.mxu0 %v5768
        %7300 = vmatmul.mubr.bf16.gmra.mrb[0].mxu0 %v5656
        %v7301 = vpop.f32.mrb[0].mxu0
        %v7302 = vadd.f32 %v7141, %v7301
        %v7303 = vpop.f32.mrb[0].mxu0
        %v7304 = vpop.f32.mrb[0].mxu0
        %v7305 = vadd.f32 %v7144, %v7304
        %v7306 = vpop.f32.mrb[0].mxu0
        %7307 = vdwg.mxu0
        %7308 = vmatprep.subr.bf16.mxu0 0
        %7309 = vmatpush1.bf16.msra.mxu0 %v6729
        %7310 = vmatprep.subr.bf16.mxu0 0
        %7311 = vmatpush1.bf16.msra.mxu0 %v6730
        %7312 = vmatprep.subr.bf16.mxu0 0
        %7313 = vmatpush1.bf16.msra.mxu0 %v6731
        %7314 = vmatprep.subr.bf16.mxu0 0
        %7315 = vmatpush1.bf16.msra.mxu0 %v6732
        %7316 = vmatprep.subr.bf16.mxu0 0
        %7317 = vmatpush1.bf16.msra.mxu0 %v6733
        %7318 = vmatprep.subr.bf16.mxu0 0
        %7319 = vmatpush1.bf16.msra.mxu0 %v6734
        %7320 = vmatprep.subr.bf16.mxu0 0
        %7321 = vmatpush1.bf16.msra.mxu0 %v6735
        %7322 = vmatprep.subr.bf16.mxu0 0
        %7323 = vmatpush1.bf16.msra.mxu0 %v6736
        %7324 = vmatprep.subr.bf16.mxu0 0
        %7325 = vmatpush1.bf16.msra.mxu0 %v6737
        %7326 = vmatprep.subr.bf16.mxu0 0
        %7327 = vmatpush1.bf16.msra.mxu0 %v6738
        %7328 = vmatprep.subr.bf16.mxu0 0
        %7329 = vmatpush1.bf16.msra.mxu0 %v6739
        %7330 = vmatprep.subr.bf16.mxu0 0
        %7331 = vmatpush1.bf16.msra.mxu0 %v6740
        %7332 = vmatprep.subr.bf16.mxu0 0
        %7333 = vmatpush1.bf16.msra.mxu0 %v6741
        %7334 = vmatprep.subr.bf16.mxu0 0
        %7335 = vmatpush1.bf16.msra.mxu0 %v6742
        %7336 = vmatprep.subr.bf16.mxu0 0
        %7337 = vmatpush1.bf16.msra.mxu0 %v6743
        %7338 = vmatprep.subr.bf16.mxu0 0
        %7339 = vmatpush1.bf16.msra.mxu0 %v6744
        %7340 = vmatprep.mubr.bf16.mxu0 %v5940
        %7341 = vmatmul.mubr.bf16.gmra.mrb[0].mxu0 %v5849
        %v7342 = vpop.f32.mrb[0].mxu0
        %v7343 = vadd.f32 %v7182, %v7342
        %v7344 = vpop.f32.mrb[0].mxu0
        %v7345 = vpop.f32.mrb[0].mxu0
        %v7346 = vadd.f32 %v7185, %v7345
        %v7347 = vpop.f32.mrb[0].mxu0
        %7348 = vmatprep.mubr.bf16.mxu0 %v5952
        %7349 = vmatmul.mubr.bf16.gmra.mrb[0].mxu0 %v5850
        %v7350 = vpop.f32.mrb[0].mxu0
        %v7351 = vadd.f32 %v7190, %v7350
        %v7352 = vpop.f32.mrb[0].mxu0
        %v7353 = vpop.f32.mrb[0].mxu0
        %v7354 = vadd.f32 %v7193, %v7353
        %v7355 = vpop.f32.mrb[0].mxu0
        %7356 = vmatprep.mubr.bf16.mxu0 %v5964
        %7357 = vmatmul.mubr.bf16.gmra.mrb[0].mxu0 %v5851
        %v7358 = vpop.f32.mrb[0].mxu0
        %v7359 = vadd.f32 %v7198, %v7358
        %v7360 = vpop.f32.mrb[0].mxu0
        %v7361 = vpop.f32.mrb[0].mxu0
        %v7362 = vadd.f32 %v7201, %v7361
        %v7363 = vpop.f32.mrb[0].mxu0
        %7364 = vmatprep.mubr.bf16.mxu0 %v5976
        %7365 = vmatmul.mubr.bf16.gmra.mrb[0].mxu0 %v5852
        %v7366 = vpop.f32.mrb[0].mxu0
        %v7367 = vadd.f32 %v7206, %v7366
        %v7368 = vpop.f32.mrb[0].mxu0
        %v7369 = vpop.f32.mrb[0].mxu0
        %v7370 = vadd.f32 %v7209, %v7369
        %v7371 = vpop.f32.mrb[0].mxu0
        %7372 = vmatprep.mubr.bf16.mxu0 %v5988
        %7373 = vmatmul.mubr.bf16.gmra.mrb[0].mxu0 %v5853
        %v7374 = vpop.f32.mrb[0].mxu0
        %v7375 = vadd.f32 %v7214, %v7374
        %v7376 = vpop.f32.mrb[0].mxu0
        %v7377 = vpop.f32.mrb[0].mxu0
        %v7378 = vadd.f32 %v7217, %v7377
        %v7379 = vpop.f32.mrb[0].mxu0
        %7380 = vmatprep.mubr.bf16.mxu0 %v6000
        %7381 = vmatmul.mubr.bf16.gmra.mrb[0].mxu0 %v5854
        %v7382 = vpop.f32.mrb[0].mxu0
        %v7383 = vadd.f32 %v7222, %v7382
        %v7384 = vpop.f32.mrb[0].mxu0
        %v7385 = vpop.f32.mrb[0].mxu0
        %v7386 = vadd.f32 %v7225, %v7385
        %v7387 = vpop.f32.mrb[0].mxu0
        %7388 = vmatprep.mubr.bf16.mxu0 %v6012
        %7389 = vmatmul.mubr.bf16.gmra.mrb[0].mxu0 %v5855
        %v7390 = vpop.f32.mrb[0].mxu0
        %v7391 = vadd.f32 %v7230, %v7390
        %v7392 = vpop.f32.mrb[0].mxu0
        %v7393 = vpop.f32.mrb[0].mxu0
        %v7394 = vadd.f32 %v7233, %v7393
        %v7395 = vpop.f32.mrb[0].mxu0
        %7396 = vmatprep.mubr.bf16.mxu0 %v6024
        %7397 = vmatmul.mubr.bf16.gmra.mrb[0].mxu0 %v5856
        %v7398 = vpop.f32.mrb[0].mxu0
        %v7399 = vadd.f32 %v7238, %v7398
        %v7400 = vpop.f32.mrb[0].mxu0
        %v7401 = vpop.f32.mrb[0].mxu0
        %v7402 = vadd.f32 %v7241, %v7401
        %v7403 = vpop.f32.mrb[0].mxu0
        %7404 = vmatprep.mubr.bf16.mxu0 %v6036
        %7405 = vmatmul.mubr.bf16.gmra.mrb[0].mxu0 %v5857
        %v7406 = vpop.f32.mrb[0].mxu0
        %v7407 = vadd.f32 %v7246, %v7406
        %v7408 = vpop.f32.mrb[0].mxu0
        %v7409 = vpop.f32.mrb[0].mxu0
        %v7410 = vadd.f32 %v7249, %v7409
        %v7411 = vpop.f32.mrb[0].mxu0
        %7412 = vmatprep.mubr.bf16.mxu0 %v6048
        %7413 = vmatmul.mubr.bf16.gmra.mrb[0].mxu0 %v5858
        %v7414 = vpop.f32.mrb[0].mxu0
        %v7415 = vadd.f32 %v7254, %v7414
        %v7416 = vpop.f32.mrb[0].mxu0
        %v7417 = vpop.f32.mrb[0].mxu0
        %v7418 = vadd.f32 %v7257, %v7417
        %v7419 = vpop.f32.mrb[0].mxu0
        %7420 = vmatprep.mubr.bf16.mxu0 %v6060
        %7421 = vmatmul.mubr.bf16.gmra.mrb[0].mxu0 %v5859
        %v7422 = vpop.f32.mrb[0].mxu0
        %v7423 = vadd.f32 %v7262, %v7422
        %v7424 = vpop.f32.mrb[0].mxu0
        %v7425 = vpop.f32.mrb[0].mxu0
        %v7426 = vadd.f32 %v7265, %v7425
        %v7427 = vpop.f32.mrb[0].mxu0
        %7428 = vmatprep.mubr.bf16.mxu0 %v6072
        %7429 = vmatmul.mubr.bf16.gmra.mrb[0].mxu0 %v5860
        %v7430 = vpop.f32.mrb[0].mxu0
        %v7431 = vadd.f32 %v7270, %v7430
        %v7432 = vpop.f32.mrb[0].mxu0
        %v7433 = vpop.f32.mrb[0].mxu0
        %v7434 = vadd.f32 %v7273, %v7433
        %v7435 = vpop.f32.mrb[0].mxu0
        %7436 = vmatprep.mubr.bf16.mxu0 %v6084
        %7437 = vmatmul.mubr.bf16.gmra.mrb[0].mxu0 %v5861
        %v7438 = vpop.f32.mrb[0].mxu0
        %v7439 = vadd.f32 %v7278, %v7438
        %v7440 = vpop.f32.mrb[0].mxu0
        %v7441 = vpop.f32.mrb[0].mxu0
        %v7442 = vadd.f32 %v7281, %v7441
        %v7443 = vpop.f32.mrb[0].mxu0
        %7444 = vmatprep.mubr.bf16.mxu0 %v6096
        %7445 = vmatmul.mubr.bf16.gmra.mrb[0].mxu0 %v5862
        %v7446 = vpop.f32.mrb[0].mxu0
        %v7447 = vadd.f32 %v7286, %v7446
        %v7448 = vpop.f32.mrb[0].mxu0
        %v7449 = vpop.f32.mrb[0].mxu0
        %v7450 = vadd.f32 %v7289, %v7449
        %v7451 = vpop.f32.mrb[0].mxu0
        %7452 = vmatprep.mubr.bf16.mxu0 %v6108
        %7453 = vmatmul.mubr.bf16.gmra.mrb[0].mxu0 %v5863
        %v7454 = vpop.f32.mrb[0].mxu0
        %v7455 = vadd.f32 %v7294, %v7454
        %v7456 = vpop.f32.mrb[0].mxu0
        %v7457 = vpop.f32.mrb[0].mxu0
        %v7458 = vadd.f32 %v7297, %v7457
        %v7459 = vpop.f32.mrb[0].mxu0
        %7460 = vmatprep.mubr.bf16.mxu0 %v6120
        %7461 = vmatmul.mubr.bf16.gmra.mrb[0].mxu0 %v5864
        %v7462 = vpop.f32.mrb[0].mxu0
        %v7463 = vadd.f32 %v7302, %v7462
        %v7464 = vpop.f32.mrb[0].mxu0
        %v7465 = vpop.f32.mrb[0].mxu0
        %v7466 = vadd.f32 %v7305, %v7465
        %v7467 = vpop.f32.mrb[0].mxu0
        %7468 = vdwg.mxu0
        %7469 = vmatprep.subr.bf16.mxu0 0
        %7470 = vmatpush1.bf16.msra.mxu0 %v6745
        %7471 = vmatprep.subr.bf16.mxu0 0
        %7472 = vmatpush1.bf16.msra.mxu0 %v6746
        %7473 = vmatprep.subr.bf16.mxu0 0
        %7474 = vmatpush1.bf16.msra.mxu0 %v6747
        %7475 = vmatprep.subr.bf16.mxu0 0
        %7476 = vmatpush1.bf16.msra.mxu0 %v6748
        %7477 = vmatprep.subr.bf16.mxu0 0
        %7478 = vmatpush1.bf16.msra.mxu0 %v6749
        %7479 = vmatprep.subr.bf16.mxu0 0
        %7480 = vmatpush1.bf16.msra.mxu0 %v6750
        %7481 = vmatprep.subr.bf16.mxu0 0
        %7482 = vmatpush1.bf16.msra.mxu0 %v6751
        %7483 = vmatprep.subr.bf16.mxu0 0
        %7484 = vmatpush1.bf16.msra.mxu0 %v6752
        %7485 = vmatprep.subr.bf16.mxu0 0
        %7486 = vmatpush1.bf16.msra.mxu0 0
        %7487 = vmatprep.subr.bf16.mxu0 0
        %7488 = vmatpush1.bf16.msra.mxu0 0
        %7489 = vmatprep.subr.bf16.mxu0 0
        %7490 = vmatpush1.bf16.msra.mxu0 0
        %7491 = vmatprep.subr.bf16.mxu0 0
        %7492 = vmatpush1.bf16.msra.mxu0 0
        %7493 = vmatprep.subr.bf16.mxu0 0
        %7494 = vmatpush1.bf16.msra.mxu0 0
        %7495 = vmatprep.subr.bf16.mxu0 0
        %7496 = vmatpush1.bf16.msra.mxu0 0
        %7497 = vmatprep.subr.bf16.mxu0 0
        %7498 = vmatpush1.bf16.msra.mxu0 0
        %7499 = vmatprep.subr.bf16.mxu0 0
        %7500 = vmatpush1.bf16.msra.mxu0 0
        %7501 = vmatprep.mubr.bf16.mxu0 0
        %7502 = vmatmul.mubr.bf16.gmra.mrb[0].mxu0 %v6187
        %v7503 = vpop.f32.mrb[0].mxu0
        %v7504 = vadd.f32 %v7343, %v7503
        %v7505 = vpop.f32.mrb[0].mxu0
        %v7506 = vpop.f32.mrb[0].mxu0
        %v7507 = vadd.f32 %v7346, %v7506
        %v7508 = vpop.f32.mrb[0].mxu0
        %7509 = vmatprep.mubr.bf16.mxu0 0
        %7510 = vmatmul.mubr.bf16.gmra.mrb[0].mxu0 %v6190
        %v7511 = vpop.f32.mrb[0].mxu0
        %v7512 = vadd.f32 %v7351, %v7511
        %v7513 = vpop.f32.mrb[0].mxu0
        %v7514 = vpop.f32.mrb[0].mxu0
        %v7515 = vadd.f32 %v7354, %v7514
        %v7516 = vpop.f32.mrb[0].mxu0
        %7517 = vmatprep.mubr.bf16.mxu0 0
        %7518 = vmatmul.mubr.bf16.gmra.mrb[0].mxu0 %v6193
        %v7519 = vpop.f32.mrb[0].mxu0
        %v7520 = vadd.f32 %v7359, %v7519
        %v7521 = vpop.f32.mrb[0].mxu0
        %v7522 = vpop.f32.mrb[0].mxu0
        %v7523 = vadd.f32 %v7362, %v7522
        %v7524 = vpop.f32.mrb[0].mxu0
        %7525 = vmatprep.mubr.bf16.mxu0 0
        %7526 = vmatmul.mubr.bf16.gmra.mrb[0].mxu0 %v6196
        %v7527 = vpop.f32.mrb[0].mxu0
        %v7528 = vadd.f32 %v7367, %v7527
        %v7529 = vpop.f32.mrb[0].mxu0
        %v7530 = vpop.f32.mrb[0].mxu0
        %v7531 = vadd.f32 %v7370, %v7530
        %v7532 = vpop.f32.mrb[0].mxu0
        %7533 = vmatprep.mubr.bf16.mxu0 0
        %7534 = vmatmul.mubr.bf16.gmra.mrb[0].mxu0 %v6199
        %v7535 = vpop.f32.mrb[0].mxu0
        %v7536 = vadd.f32 %v7375, %v7535
        %v7537 = vpop.f32.mrb[0].mxu0
        %v7538 = vpop.f32.mrb[0].mxu0
        %v7539 = vadd.f32 %v7378, %v7538
        %v7540 = vpop.f32.mrb[0].mxu0
        %7541 = vmatprep.mubr.bf16.mxu0 0
        %7542 = vmatmul.mubr.bf16.gmra.mrb[0].mxu0 %v6202
        %v7543 = vpop.f32.mrb[0].mxu0
        %v7544 = vadd.f32 %v7383, %v7543
        %v7545 = vpop.f32.mrb[0].mxu0
        %v7546 = vpop.f32.mrb[0].mxu0
        %v7547 = vadd.f32 %v7386, %v7546
        %v7548 = vpop.f32.mrb[0].mxu0
        %7549 = vmatprep.mubr.bf16.mxu0 0
        %7550 = vmatmul.mubr.bf16.gmra.mrb[0].mxu0 %v6205
        %v7551 = vpop.f32.mrb[0].mxu0
        %v7552 = vadd.f32 %v7391, %v7551
        %v7553 = vpop.f32.mrb[0].mxu0
        %v7554 = vpop.f32.mrb[0].mxu0
        %v7555 = vadd.f32 %v7394, %v7554
        %v7556 = vpop.f32.mrb[0].mxu0
        %7557 = vmatprep.mubr.bf16.mxu0 0
        %7558 = vmatmul.mubr.bf16.gmra.mrb[0].mxu0 %v6208
        %v7559 = vpop.f32.mrb[0].mxu0
        %v7560 = vadd.f32 %v7399, %v7559
        %v7561 = vpop.f32.mrb[0].mxu0
        %v7562 = vpop.f32.mrb[0].mxu0
        %v7563 = vadd.f32 %v7402, %v7562
        %v7564 = vpop.f32.mrb[0].mxu0
        %7565 = vmatprep.mubr.bf16.mxu0 0
        %7566 = vmatmul.mubr.bf16.gmra.mrb[0].mxu0 %v6211
        %v7567 = vpop.f32.mrb[0].mxu0
        %v7568 = vadd.f32 %v7407, %v7567
        %v7569 = vpop.f32.mrb[0].mxu0
        %v7570 = vpop.f32.mrb[0].mxu0
        %v7571 = vadd.f32 %v7410, %v7570
        %v7572 = vpop.f32.mrb[0].mxu0
        %7573 = vmatprep.mubr.bf16.mxu0 0
        %7574 = vmatmul.mubr.bf16.gmra.mrb[0].mxu0 %v6214
        %v7575 = vpop.f32.mrb[0].mxu0
        %v7576 = vadd.f32 %v7415, %v7575
        %v7577 = vpop.f32.mrb[0].mxu0
        %v7578 = vpop.f32.mrb[0].mxu0
        %v7579 = vadd.f32 %v7418, %v7578
        %v7580 = vpop.f32.mrb[0].mxu0
        %7581 = vmatprep.mubr.bf16.mxu0 0
        %7582 = vmatmul.mubr.bf16.gmra.mrb[0].mxu0 %v6217
        %v7583 = vpop.f32.mrb[0].mxu0
        %v7584 = vadd.f32 %v7423, %v7583
        %v7585 = vpop.f32.mrb[0].mxu0
        %v7586 = vpop.f32.mrb[0].mxu0
        %v7587 = vadd.f32 %v7426, %v7586
        %v7588 = vpop.f32.mrb[0].mxu0
        %7589 = vmatprep.mubr.bf16.mxu0 0
        %7590 = vmatmul.mubr.bf16.gmra.mrb[0].mxu0 %v6220
        %v7591 = vpop.f32.mrb[0].mxu0
        %v7592 = vadd.f32 %v7431, %v7591
        %v7593 = vpop.f32.mrb[0].mxu0
        %v7594 = vpop.f32.mrb[0].mxu0
        %v7595 = vadd.f32 %v7434, %v7594
        %v7596 = vpop.f32.mrb[0].mxu0
        %7597 = vmatprep.mubr.bf16.mxu0 0
        %7598 = vmatmul.mubr.bf16.gmra.mrb[0].mxu0 %v6223
        %v7599 = vpop.f32.mrb[0].mxu0
        %v7600 = vadd.f32 %v7439, %v7599
        %v7601 = vpop.f32.mrb[0].mxu0
        %v7602 = vpop.f32.mrb[0].mxu0
        %v7603 = vadd.f32 %v7442, %v7602
        %v7604 = vpop.f32.mrb[0].mxu0
        %7605 = vmatprep.mubr.bf16.mxu0 0
        %7606 = vmatmul.mubr.bf16.gmra.mrb[0].mxu0 %v6226
        %v7607 = vpop.f32.mrb[0].mxu0
        %v7608 = vadd.f32 %v7447, %v7607
        %v7609 = vpop.f32.mrb[0].mxu0
        %v7610 = vpop.f32.mrb[0].mxu0
        %v7611 = vadd.f32 %v7450, %v7610
        %v7612 = vpop.f32.mrb[0].mxu0
        %7613 = vmatprep.mubr.bf16.mxu0 0
        %7614 = vmatmul.mubr.bf16.gmra.mrb[0].mxu0 %v6229
        %v7615 = vpop.f32.mrb[0].mxu0
        %v7616 = vadd.f32 %v7455, %v7615
        %v7617 = vpop.f32.mrb[0].mxu0
        %v7618 = vpop.f32.mrb[0].mxu0
        %v7619 = vadd.f32 %v7458, %v7618
        %v7620 = vpop.f32.mrb[0].mxu0
        %7621 = vmatprep.mubr.bf16.mxu0 0
        %7622 = vmatmul.mubr.bf16.gmra.mrb[0].mxu0 %v6232
        %v7623 = vpop.f32.mrb[0].mxu0
        %v7624 = vadd.f32 %v7463, %v7623
        %v7625 = vpop.f32.mrb[0].mxu0
        %v7626 = vpop.f32.mrb[0].mxu0
        %v7627 = vadd.f32 %v7466, %v7626
        %v7628 = vpop.f32.mrb[0].mxu0
        %7629 = vdwg.mxu0
        %v7630 = vld [vmem:[%s287] sm:$0xff]
        %v7631 = vld [vmem:[%s287 + $0x8] sm:$0xff]
        %v7632 = vld [vmem:[%s287 + $0x10] sm:$0xff]
        %v7633 = vld [vmem:[%s287 + $0x18] sm:$0xff]
        %v7634 = vld [vmem:[%s287 + $0x20] sm:$0xff]
        %v7635 = vld [vmem:[%s287 + $0x28] sm:$0xff]
        %v7636 = vld [vmem:[%s287 + $0x30] sm:$0xff]
        %v7637 = vld [vmem:[%s287 + $0x38] sm:$0xff]
        %v7638 = vld [vmem:[%s287 + $0x40] sm:$0xff]
        %v7639 = vld [vmem:[%s287 + $0x48] sm:$0xff]
        %v7640 = vld [vmem:[%s287 + $0x50] sm:$0xff]
        %v7641 = vld [vmem:[%s287 + $0x58] sm:$0xff]
        %v7642 = vld [vmem:[%s287 + $0x60] sm:$0xff]
        %v7643 = vld [vmem:[%s287 + $0x68] sm:$0xff]
        %v7644 = vld [vmem:[%s287 + $0x70] sm:$0xff]
        %v7645 = vld [vmem:[%s287 + $0x78] sm:$0xff]
        %v7646 = vld [vmem:[%s287 + $0x80] sm:$0xff]
        %v7647 = vld [vmem:[%s287 + $0x88] sm:$0xff]
        %v7648 = vld [vmem:[%s287 + $0x90] sm:$0xff]
        %v7649 = vld [vmem:[%s287 + $0x98] sm:$0xff]
        %v7650 = vld [vmem:[%s287 + $0xa0] sm:$0xff]
        %v7651 = vld [vmem:[%s287 + $0xa8] sm:$0xff]
        %v7652 = vld [vmem:[%s287 + $0xb0] sm:$0xff]
        %v7653 = vld [vmem:[%s287 + $0xb8] sm:$0xff]
        %v7654 = vld [vmem:[%s287 + $0xc0] sm:$0xff]
        %v7655 = vld [vmem:[%s287 + $0xc8] sm:$0xff]
        %v7656 = vld [vmem:[%s287 + $0xd0] sm:$0xff]
        %v7657 = vld [vmem:[%s287 + $0xd8] sm:$0xff]
        %v7658 = vld [vmem:[%s287 + $0xe0] sm:$0xff]
        %v7659 = vld [vmem:[%s287 + $0xe8] sm:$0xff]
        %v7660 = vld [vmem:[%s287 + $0xf0] sm:$0xff]
        %v7661 = vld [vmem:[%s287 + $0xf8] sm:$0xff]
        %v7662 = vadd.f32 %v7504, %v7630
        %v7663 = vadd.f32 %v7507, %v7631
        %v7664 = vadd.f32 %v7512, %v7632
        %v7665 = vadd.f32 %v7515, %v7633
        %v7666 = vadd.f32 %v7520, %v7634
        %v7667 = vadd.f32 %v7523, %v7635
        %v7668 = vadd.f32 %v7528, %v7636
        %v7669 = vadd.f32 %v7531, %v7637
        %v7670 = vadd.f32 %v7536, %v7638
        %v7671 = vadd.f32 %v7539, %v7639
        %v7672 = vadd.f32 %v7544, %v7640
        %v7673 = vadd.f32 %v7547, %v7641
        %v7674 = vadd.f32 %v7552, %v7642
        %v7675 = vadd.f32 %v7555, %v7643
        %v7676 = vadd.f32 %v7560, %v7644
        %v7677 = vadd.f32 %v7563, %v7645
        %v7678 = vadd.f32 %v7568, %v7646
        %v7679 = vadd.f32 %v7571, %v7647
        %v7680 = vadd.f32 %v7576, %v7648
        %v7681 = vadd.f32 %v7579, %v7649
        %v7682 = vadd.f32 %v7584, %v7650
        %v7683 = vadd.f32 %v7587, %v7651
        %v7684 = vadd.f32 %v7592, %v7652
        %v7685 = vadd.f32 %v7595, %v7653
        %v7686 = vadd.f32 %v7600, %v7654
        %v7687 = vadd.f32 %v7603, %v7655
        %v7688 = vadd.f32 %v7608, %v7656
        %v7689 = vadd.f32 %v7611, %v7657
        %v7690 = vadd.f32 %v7616, %v7658
        %v7691 = vadd.f32 %v7619, %v7659
        %v7692 = vadd.f32 %v7624, %v7660
        %v7693 = vadd.f32 %v7627, %v7661
        %7694 = vst [vmem:[%s325] sm:$0xff] %v7662
        %7695 = vst [vmem:[%s325 + $0x8] sm:$0xff] %v7663
        %7696 = vst [vmem:[%s325 + $0x10] sm:$0xff] %v7664
        %7697 = vst [vmem:[%s325 + $0x18] sm:$0xff] %v7665
        %7698 = vst [vmem:[%s325 + $0x20] sm:$0xff] %v7666
        %7699 = vst [vmem:[%s325 + $0x28] sm:$0xff] %v7667
        %7700 = vst [vmem:[%s325 + $0x30] sm:$0xff] %v7668
        %7701 = vst [vmem:[%s325 + $0x38] sm:$0xff] %v7669
        %7702 = vst [vmem:[%s325 + $0x40] sm:$0xff] %v7670
        %7703 = vst [vmem:[%s325 + $0x48] sm:$0xff] %v7671
        %7704 = vst [vmem:[%s325 + $0x50] sm:$0xff] %v7672
        %7705 = vst [vmem:[%s325 + $0x58] sm:$0xff] %v7673
        %7706 = vst [vmem:[%s325 + $0x60] sm:$0xff] %v7674
        %7707 = vst [vmem:[%s325 + $0x68] sm:$0xff] %v7675
        %7708 = vst [vmem:[%s325 + $0x70] sm:$0xff] %v7676
        %7709 = vst [vmem:[%s325 + $0x78] sm:$0xff] %v7677
        %7710 = vst [vmem:[%s325 + $0x80] sm:$0xff] %v7678
        %7711 = vst [vmem:[%s325 + $0x88] sm:$0xff] %v7679
        %7712 = vst [vmem:[%s325 + $0x90] sm:$0xff] %v7680
        %7713 = vst [vmem:[%s325 + $0x98] sm:$0xff] %v7681
        %7714 = vst [vmem:[%s325 + $0xa0] sm:$0xff] %v7682
        %7715 = vst [vmem:[%s325 + $0xa8] sm:$0xff] %v7683
        %7716 = vst [vmem:[%s325 + $0xb0] sm:$0xff] %v7684
        %7717 = vst [vmem:[%s325 + $0xb8] sm:$0xff] %v7685
        %7718 = vst [vmem:[%s325 + $0xc0] sm:$0xff] %v7686
        %7719 = vst [vmem:[%s325 + $0xc8] sm:$0xff] %v7687
        %7720 = vst [vmem:[%s325 + $0xd0] sm:$0xff] %v7688
        %7721 = vst [vmem:[%s325 + $0xd8] sm:$0xff] %v7689
        %7722 = vst [vmem:[%s325 + $0xe0] sm:$0xff] %v7690
        %7723 = vst [vmem:[%s325 + $0xe8] sm:$0xff] %v7691
        %7724 = vst [vmem:[%s325 + $0xf0] sm:$0xff] %v7692
        %7725 = vst [vmem:[%s325 + $0xf8] sm:$0xff] %v7693
        %s7726 = sand.u32 %s185, 1
        %s7727 = scalar_lea.sflag [#allocation5], %s7726
        %s7728 = sand.u32 %s185, 1
        %s7729 = smul.addr %s7728, 256
        %s7730 = scalar_lea.vmem [#allocation9], %s7729
        // Predicated region
        $region61: #{tpu_custom_call.1} parent=47 // pred_check
          %p7731 = pneg %p195
        $region62: #{tpu_custom_call.1} parent=47 // pred_check_branch
          %7733 = sbr.rel (%p7731) target = $region64
        $region63: #{tpu_custom_call.1} parent=47 // pred_region
          %s7735 = ssub.s32 4096, 4096
          %7736 = vsyncadd %s7727, %s7735
          %s7737 = smul.addr %s25, 32
          %s7738 = smul.addr %s7737, 128
          %s7739 = scalar_lea.hbm %s7, %s7738
          %s7740 = sshll.u32 %s7730, 4
          %s7741 = int_to_ptr.vmem [resolvable:$true] %s7740
          %7746 = dma.vmem_to_hbm [thread:$0]  %s7741, 4096, %s7739, %s7727, 128, 128, 8
        $region64: #{tpu_custom_call.1} parent=47 // pred_fallthru
          _
      $region48: #{tpu_custom_call.1} parent=5 // pred_fallthru
        _
      %p7747 = scmp.le.s32.totalorder 2, %s20
      // Predicated region
      $region65: #{tpu_custom_call.1} parent=5 // pred_check
        %p7748 = pneg %p7747
      $region66: #{tpu_custom_call.1} parent=5 // pred_check_branch
        %7750 = sbr.rel (%p7748) target = $region68
      $region67: #{tpu_custom_call.1} parent=5 // pred_region
        %s7751 = ssub.s32 %s20, 2
        // Predicated region
        $region69: #{tpu_custom_call.1} parent=67 // pred_check
          %p7752 = pneg %p201
        $region70: #{tpu_custom_call.1} parent=67 // pred_check_branch
          %7754 = sbr.rel (%p7752) target = $region72
        $region71: #{tpu_custom_call.1} parent=67 // pred_region
          %s7755 = sand.u32 %s186, 1
          %s7756 = scalar_lea.sflag [#allocation5], %s7755
          %s7757 = sand.u32 %s186, 1
          %s7758 = smul.addr %s7757, 256
          %s7759 = scalar_lea.vmem [#allocation9], %s7758
          %7760 = dma.done %s7756, 4096
        $region72: #{tpu_custom_call.1} parent=67 // pred_fallthru
          _
      $region68: #{tpu_custom_call.1} parent=5 // pred_fallthru
        _
    $region6: #{tpu_custom_call.1} parent=1 // loop_footer
      %s24 = sadd.s32 1, %s20
    $region7: #{tpu_custom_call.1} parent=1 // loop_footer_branch
      %19 = sbr.rel target = $region3
    $region8: #{tpu_custom_call.1} parent=1 // loop_exit
      _
    %7761 = vsyncpa [#allocation4], 1
    %s7762 = scalar_lea.sflag [#allocation4], 1
    %7763 = vsyncpa %s7762, 1
    %7764 = vsyncpa [#allocation7], 1
    %7765 = vsyncpa [#allocation5], 1
    %s7766 = scalar_lea.sflag [#allocation5], 1
    %7767 = vsyncpa %s7766, 1

</llo_original>
